<compile_context>
chip_gen: v7x
topology: tpu7x:2x2x1
jax: 0.10.0
libtpu: 0.0.40
codegen_flags: <defaults>
</compile_context>

<pallas_src>
import functools

import jax
import jax.numpy as jnp
from jax import lax
from jax.experimental import pallas as pl
from jax.experimental.pallas import tpu as pltpu

EPS = 1e-5
VMEM_LIMIT_BYTES = 48 * 1024 * 1024      # safe on v5e/v6e (128 MiB) and v7x (64 MiB)
VMEM_TILE_BUDGET = 24 * 1024 * 1024      # per-step footprint cap used by the tiler


def _round_up(x, m):
    return (x + m - 1) // m * m


def _pick_h_tile(H, W, cin_p, cout_p, in_bytes, out_bytes,
                 budget_bytes=VMEM_TILE_BUDGET):
    """Pick an H tile that divides H, fills the MXU M dim (TH*W >= 256 when
    possible) and keeps the per-step VMEM footprint under budget."""
    def est(th):
        xpad = (th + 2) * (W + 2) * cin_p * 2                  # bf16 halo scratch
        xin = 2 * th * W * cin_p * in_bytes + 4 * W * cin_p * in_bytes
        yout = 2 * th * W * cout_p * out_bytes                 # double-buffered out
        acc = th * W * cout_p * 4                              # f32 accumulator
        wts = 2 * 9 * cin_p * cout_p * 2                       # bf16 weights (dbuf)
        return xpad + xin + yout + acc + wts

    divisors = [d for d in range(1, H + 1) if H % d == 0]
    fitting = [d for d in divisors if est(d) <= budget_bytes] or [1]
    preferred = [d for d in fitting if d * W >= 256]
    return min(preferred) if preferred else max(fitting)


# ----------------------------------------------------------------------------
# Conv3x3 kernel: (optional fused input BN+ReLU) -> 9 accumulating MXU matmuls
# over a bf16 halo tile -> activation + per-channel sum / sum-of-squares.
# ----------------------------------------------------------------------------
def _conv_kernel(*refs, in_bn, TH, W, Cin_p, Cout_p):
    if in_bn:
        (xmain, xprev, xnext, scale_ref, shift_ref, w_ref,
         y_ref, st_ref, xpad) = refs
    else:
        (xmain, xprev, xnext, w_ref, y_ref, st_ref, xpad) = refs

    h = pl.program_id(1)
    nh = pl.num_programs(1)

    if in_bn:
        scale = scale_ref[0]                                  # (Cin_p,) f32
        shift = shift_ref[0]

        def prep(v):                                          # BN + ReLU + bf16
            return jnp.maximum(
                v.astype(jnp.float32) * scale + shift, 0.0).astype(jnp.bfloat16)
    else:
        def prep(v):                                          # input already bf16
            return v

    # --- Halo assembly into the persistent bf16 scratch (no full-tile zeroing).
    @pl.when(h == 0)
    def _():
        # Left/right pad columns; never touched by any later write.
        xpad[:, 0:1, :] = jnp.zeros((TH + 2, 1, Cin_p), jnp.bfloat16)
        xpad[:, W + 1:W + 2, :] = jnp.zeros((TH + 2, 1, Cin_p), jnp.bfloat16)
        # Top pad row (image boundary).
        xpad[0:1, 1:W + 1, :] = jnp.zeros((1, W, Cin_p), jnp.bfloat16)

    @pl.when(h > 0)
    def _():
        xpad[0:1, 1:W + 1, :] = prep(xprev[0])                # top halo row

    @pl.when(h == nh - 1)
    def _():
        xpad[TH + 1:TH + 2, 1:W + 1, :] = jnp.zeros((1, W, Cin_p), jnp.bfloat16)

    @pl.when(h < nh - 1)
    def _():
        xpad[TH + 1:TH + 2, 1:W + 1, :] = prep(xnext[0])      # bottom halo row

    xpad[1:TH + 1, 1:W + 1, :] = prep(xmain[0])               # interior

    # --- Conv as 9 accumulating MXU matmuls over shifted halo views
    #     (bf16 inputs, f32 accumulation; no im2col scratch).
    acc = jnp.zeros((TH * W, Cout_p), jnp.float32)
    for t in range(9):
        dy, dx = t // 3, t % 3
        lhs = xpad[dy:dy + TH, dx:dx + W, :].reshape(TH * W, Cin_p)
        acc = acc + jnp.dot(lhs, w_ref[t], preferred_element_type=jnp.float32)

    y_store = acc.astype(y_ref.dtype)
    y_ref[...] = y_store.reshape(1, TH, W, Cout_p)

    # --- BatchNorm statistics of the stored activation, one full-block RMW.
    yf = y_store.astype(jnp.float32)
    s1 = jnp.sum(yf, axis=0, keepdims=True)
    s2 = jnp.sum(yf * yf, axis=0, keepdims=True)
    part = jnp.concatenate([s1, s2], axis=0)[None]            # (1, 2, Cout_p)

    @pl.when(h == 0)
    def _():
        st_ref[...] = part

    @pl.when(h > 0)
    def _():
        st_ref[...] += part


def _conv_stage(x, w, scale, shift, *, TH, Cout_p, out_dtype, in_bn):
    """One Conv3x3 (pad=1, no bias). Returns activation + (sum, sumsq) stats."""
    N, H, W, Cin_p = x.shape
    nh = H // TH

    kernel = functools.partial(_conv_kernel, in_bn=in_bn, TH=TH, W=W,
                               Cin_p=Cin_p, Cout_p=Cout_p)

    # The input is passed three times: the TH-row tile plus the one-row
    # neighbours used for the pad-1 halo (index_map clamps at the boundary; the
    # kernel zeroes the halo row there instead).
    in_specs = [
        pl.BlockSpec((1, TH, W, Cin_p), lambda n, h: (n, h, 0, 0)),
        pl.BlockSpec((1, 1, W, Cin_p),
                     lambda n, h: (n, jnp.maximum(h * TH - 1, 0), 0, 0)),
        pl.BlockSpec((1, 1, W, Cin_p),
                     lambda n, h: (n, jnp.minimum(h * TH + TH, H - 1), 0, 0)),
    ]
    inputs = [x, x, x]
    if in_bn:
        in_specs += [pl.BlockSpec((1, Cin_p), lambda n, h: (0, 0)),
                     pl.BlockSpec((1, Cin_p), lambda n, h: (0, 0))]
        inputs += [scale, shift]
    in_specs.append(pl.BlockSpec(w.shape, lambda n, h: (0, 0, 0)))
    inputs.append(w)

    grid_spec = pltpu.PrefetchScalarGridSpec(
        num_scalar_prefetch=0,
        grid=(N, nh),
        in_specs=in_specs,
        out_specs=[
            pl.BlockSpec((1, TH, W, Cout_p), lambda n, h: (n, h, 0, 0)),
            pl.BlockSpec((1, 2, Cout_p), lambda n, h: (n, 0, 0)),
        ],
        scratch_shapes=[pltpu.VMEM((TH + 2, W + 2, Cin_p), jnp.bfloat16)],
    )

    return pl.pallas_call(
        kernel,
        out_shape=(
            jax.ShapeDtypeStruct((N, H, W, Cout_p), out_dtype),
            jax.ShapeDtypeStruct((N, 2, Cout_p), jnp.float32),
        ),
        grid_spec=grid_spec,
        compiler_params=pltpu.CompilerParams(
            dimension_semantics=("parallel", "arbitrary"),
            vmem_limit_bytes=VMEM_LIMIT_BYTES),
    )(*inputs)


# ----------------------------------------------------------------------------
# Final BatchNorm + ReLU epilogue (scale/shift precomputed; pure VPU, mem-bound).
# ----------------------------------------------------------------------------
def _bn_relu_kernel(y_ref, scale_ref, shift_ref, o_ref):
    o_ref[...] = jnp.maximum(
        y_ref[...].astype(jnp.float32) * scale_ref[0] + shift_ref[0], 0.0)


def _bn_relu_stage(y, scale, shift, *, TH):
    N, H, W, Cp = y.shape
    nh = H // TH
    grid_spec = pltpu.PrefetchScalarGridSpec(
        num_scalar_prefetch=0,
        grid=(N, nh),
        in_specs=[
            pl.BlockSpec((1, TH, W, Cp), lambda n, h: (n, h, 0, 0)),
            pl.BlockSpec((1, Cp), lambda n, h: (0, 0)),
            pl.BlockSpec((1, Cp), lambda n, h: (0, 0)),
        ],
        out_specs=pl.BlockSpec((1, TH, W, Cp), lambda n, h: (n, h, 0, 0)),
    )
    return pl.pallas_call(
        _bn_relu_kernel,
        out_shape=jax.ShapeDtypeStruct((N, H, W, Cp), jnp.float32),
        grid_spec=grid_spec,
        compiler_params=pltpu.CompilerParams(
            dimension_semantics=("parallel", "parallel"),
            vmem_limit_bytes=VMEM_LIMIT_BYTES),
    )(y, scale, shift)


# ----------------------------------------------------------------------------
# Hoisted BatchNorm affine: scale/shift from accumulated (sum, sumsq) stats.
# ----------------------------------------------------------------------------
def _bn_affine(stats, gamma, beta, count, cp):
    s = jnp.sum(stats, axis=0)                                # (2, cp)
    mean = s[0] / count
    # Single-pass variance; mirrored by the reference.  Can lose precision vs
    # two-pass at very large N*H*W / activation magnitude.
    var = s[1] / count - mean * mean
    g = jnp.pad(gamma.astype(jnp.float32), (0, cp - gamma.shape[0]))
    b = jnp.pad(beta.astype(jnp.float32), (0, cp - beta.shape[0]))
    scale = g * lax.rsqrt(var + EPS)
    shift = b - mean * scale
    return scale.reshape(1, cp), shift.reshape(1, cp)


# ----------------------------------------------------------------------------
# DoubleConv forward.
# ----------------------------------------------------------------------------
def double_conv(x_nchw, params):
    """x_nchw: (N, Cin, H, W) f32 -> (N, Cout, H, W) f32."""
    w1, g1, b1, w2, g2, b2 = params
    Cin, Cmid = w1.shape[2], w1.shape[3]
    Cout = w2.shape[3]
    N, _, H, W = x_nchw.shape

    Cin_p = _round_up(Cin, 8)
    Cmid_p = _round_up(Cmid, 128)     # lane-dense intermediate / outputs
    Cout_p = _round_up(Cout, 128)

    TH = _pick_h_tile(H, W, Cmid_p, max(Cmid_p, Cout_p), in_bytes=2, out_bytes=4)

    # Layout plumbing (one fused XLA pass): NCHW -> NHWC, bf16, channel pad.
    x = jnp.transpose(x_nchw, (0, 2, 3, 1)).astype(jnp.bfloat16)
    x = jnp.pad(x, ((0, 0), (0, 0), (0, 0), (0, Cin_p - Cin)))

    def prep_w(w, cip, cop):
        kh, kw, ci, co = w.shape
        wp = jnp.pad(w, ((0, 0), (0, 0), (0, cip - ci), (0, cop - co)))
        return wp.reshape(kh * kw, cip, cop).astype(jnp.bfloat16)

    w1m = prep_w(w1, Cin_p, Cmid_p)
    w2m = prep_w(w2, Cmid_p, Cout_p)

    count = N * H * W

    # Stage 1: conv only; bf16 activation (halved HBM round trip) + f32 stats.
    y1, st1 = _conv_stage(x, w1m, None, None, TH=TH, Cout_p=Cmid_p,
                          out_dtype=jnp.bfloat16, in_bn=False)
    scale1, shift1 = _bn_affine(st1, g1, b1, count, Cmid_p)

    # Stage 2: BN1+ReLU fused into conv2's input path; f32 activation + stats.
    y2, st2 = _conv_stage(y1, w2m, scale1, shift1, TH=TH, Cout_p=Cout_p,
                          out_dtype=jnp.float32, in_bn=True)
    scale2, shift2 = _bn_affine(st2, g2, b2, count, Cout_p)

    # Epilogue: BN2 + ReLU (lane-dense f32 output).
    out = _bn_relu_stage(y2, scale2, shift2, TH=TH)

    # Honour the PyTorch NCHW contract: one fused slice+transpose pass.
    # TODO(synk): drop this pass entirely if downstream consumers accept NHWC.
    return jnp.transpose(out[..., :Cout], (0, 3, 1, 2))


def init_params(key, in_channels, out_channels):
    k1, k2, k3, k4 = jax.random.split(key, 4)
    # Conv weights stored as (kh, kw, Cin, Cout) (HWIO).
    w1 = jax.random.normal(k1, (3, 3, in_channels, out_channels), jnp.float32) * 0.1
    w2 = jax.random.normal(k2, (3, 3, out_channels, out_channels), jnp.float32) * 0.1
    g1 = 1.0 + 0.1 * jax.random.normal(k3, (out_channels,), jnp.float32)
    b1 = 0.1 * jax.random.normal(k4, (out_channels,), jnp.float32)
    g2 = jnp.ones((out_channels,), jnp.float32)
    b2 = jnp.zeros((out_channels,), jnp.float32)
    return (w1, g1, b1, w2, g2, b2)


def _reference(x_nchw, params):
    """Pure-JAX reference mirroring the kernel's precision strategy:
    bf16-rounded conv inputs with f32 accumulation, bf16-stored stage-1
    activation, single-pass training-mode BatchNorm, scale/shift formulation."""
    w1, g1, b1, w2, g2, b2 = params

    def conv(x_nhwc, w):
        wb = w.astype(jnp.bfloat16).astype(jnp.float32)
        return lax.conv_general_dilated(
            x_nhwc, wb, window_strides=(1, 1), padding="SAME",
            dimension_numbers=("NHWC", "HWIO", "NHWC"),
            precision=lax.Precision.HIGHEST,
            preferred_element_type=jnp.float32)

    def bn_affine(y, g, b):
        mean = jnp.mean(y, axis=(0, 1, 2))
        var = jnp.mean(y * y, axis=(0, 1, 2)) - mean * mean
        scale = g * lax.rsqrt(var + EPS)
        shift = b - mean * scale
        return scale, shift

    x = jnp.transpose(x_nchw, (0, 2, 3, 1))
    xb = x.astype(jnp.bfloat16).astype(jnp.float32)

    y1 = conv(xb, w1).astype(jnp.bfloat16).astype(jnp.float32)   # bf16-stored
    s1, t1 = bn_affine(y1, g1, b1)
    a1 = jnp.maximum(y1 * s1 + t1, 0.0).astype(jnp.bfloat16).astype(jnp.float32)

    y2 = conv(a1, w2)                                            # f32-stored
    s2, t2 = bn_affine(y2, g2, b2)
    out = jnp.maximum(y2 * s2 + t2, 0.0)
    return jnp.transpose(out, (0, 3, 1, 2))


if __name__ == "__main__":
    key = jax.random.PRNGKey(0)
    kx, kp = jax.random.split(key)

    N, Cin, Cout, H, W = 2, 4, 8, 16, 16
    x = jax.random.normal(kx, (N, Cin, H, W), jnp.float32)
    params = init_params(kp, Cin, Cout)

    out = jax.block_until_ready(double_conv(x, params))
    ref = jax.block_until_ready(_reference(x, params))

    assert out.shape == (N, Cout, H, W)
    max_err = float(jnp.max(jnp.abs(out - ref)))
    # bf16 MXU data path (bf16 inputs/intermediates, f32 accumulation) ->
    # bf16-appropriate tolerance.
    assert jnp.allclose(out, ref, atol=1e-2, rtol=1e-2), (
        f"mismatch vs reference (max abs err {max_err})")

    print("KERNEL_OK")
</pallas_src>

<mosaic_0001>
module attributes {stable_mosaic.version = 11 : i64} {
  func.func @_conv_kernel(%arg0: i32, %arg1: i32, %arg2: memref<1x16x16x8xbf16, #tpu.memory_space<vmem>>, %arg3: memref<1x1x16x8xbf16, #tpu.memory_space<vmem>>, %arg4: memref<1x1x16x8xbf16, #tpu.memory_space<vmem>>, %arg5: memref<9x8x128xbf16, #tpu.memory_space<vmem>>, %arg6: memref<1x16x16x128xbf16, #tpu.memory_space<vmem>>, %arg7: memref<1x2x128xf32, #tpu.memory_space<vmem>>, %arg8: memref<18x18x8xbf16, #tpu.memory_space<vmem>>) attributes {dimension_semantics = [#tpu.dimension_semantics<parallel>, #tpu.dimension_semantics<arbitrary>], iteration_bounds = array<i64: 2, 1>, scalar_prefetch = 0 : i64, scratch_operands = 1 : i64, tpu.core_type = #tpu.core_type<tc>, window_params = [{transform_indices = @transform_0, window_bounds = array<i64: 1, 16, 16, 8>}, {transform_indices = @transform_1, window_bounds = array<i64: 1, 1, 16, 8>}, {transform_indices = @transform_2, window_bounds = array<i64: 1, 1, 16, 8>}, {pipeline_mode = #tpu.pipeline_mode<synchronous>, transform_indices = @transform_3, window_bounds = array<i64: 9, 8, 128>}, {transform_indices = @transform_4, window_bounds = array<i64: 1, 16, 16, 128>}, {transform_indices = @transform_5, window_bounds = array<i64: 1, 2, 128>}]} {
    %c0_i32 = arith.constant 0 : i32
    %0 = arith.cmpi eq, %arg1, %c0_i32 : i32
    %1 = arith.extui %0 : i1 to i32
    %c0_i32_0 = arith.constant 0 : i32
    %2 = arith.cmpi ne, %1, %c0_i32_0 : i32
    scf.if %2 {
      %cst_78 = arith.constant 0.000000e+00 : bf16
      %87 = vector.broadcast %cst_78 : bf16 to vector<18x1x8xbf16>
      %c0_79 = arith.constant 0 : index
      %c0_80 = arith.constant 0 : index
      %c0_81 = arith.constant 0 : index
      %88 = vector.load %arg8[%c0_79, %c0_80, %c0_81] : memref<18x18x8xbf16, #tpu.memory_space<vmem>>, vector<18x1x8xbf16>
      tpu.vector_store %arg8[%c0_79, %c0_80, %c0_81], %87 {strides = array<i32>} : memref<18x18x8xbf16, #tpu.memory_space<vmem>>, vector<18x1x8xbf16>,
      %cst_82 = arith.constant 0.000000e+00 : bf16
      %89 = vector.broadcast %cst_82 : bf16 to vector<18x1x8xbf16>
      %c0_83 = arith.constant 0 : index
      %c17 = arith.constant 17 : index
      %c0_84 = arith.constant 0 : index
      %90 = vector.load %arg8[%c0_83, %c17, %c0_84] : memref<18x18x8xbf16, #tpu.memory_space<vmem>>, vector<18x1x8xbf16>
      tpu.vector_store %arg8[%c0_83, %c17, %c0_84], %89 {strides = array<i32>} : memref<18x18x8xbf16, #tpu.memory_space<vmem>>, vector<18x1x8xbf16>,
      %cst_85 = arith.constant 0.000000e+00 : bf16
      %91 = vector.broadcast %cst_85 : bf16 to vector<1x16x8xbf16>
      %c0_86 = arith.constant 0 : index
      %c1_87 = arith.constant 1 : index
      %c0_88 = arith.constant 0 : index
      %92 = vector.load %arg8[%c0_86, %c1_87, %c0_88] : memref<18x18x8xbf16, #tpu.memory_space<vmem>>, vector<1x16x8xbf16>
      tpu.vector_store %arg8[%c0_86, %c1_87, %c0_88], %91 {strides = array<i32>} : memref<18x18x8xbf16, #tpu.memory_space<vmem>>, vector<1x16x8xbf16>,
    } else {
    }
    %c0_i32_1 = arith.constant 0 : i32
    %3 = arith.cmpi sgt, %arg1, %c0_i32_1 : i32
    %4 = arith.extui %3 : i1 to i32
    %c0_i32_2 = arith.constant 0 : i32
    %5 = arith.cmpi ne, %4, %c0_i32_2 : i32
    scf.if %5 {
      %c0_78 = arith.constant 0 : index
      %c0_79 = arith.constant 0 : index
      %c0_80 = arith.constant 0 : index
      %c0_81 = arith.constant 0 : index
      %87 = vector.load %arg3[%c0_78, %c0_79, %c0_80, %c0_81] : memref<1x1x16x8xbf16, #tpu.memory_space<vmem>>, vector<1x1x16x8xbf16>
      %88 = vector.shape_cast %87 : vector<1x1x16x8xbf16> to vector<1x16x8xbf16>
      %c0_82 = arith.constant 0 : index
      %c1_83 = arith.constant 1 : index
      %c0_84 = arith.constant 0 : index
      %89 = vector.load %arg8[%c0_82, %c1_83, %c0_84] : memref<18x18x8xbf16, #tpu.memory_space<vmem>>, vector<1x16x8xbf16>
      tpu.vector_store %arg8[%c0_82, %c1_83, %c0_84], %88 {strides = array<i32>} : memref<18x18x8xbf16, #tpu.memory_space<vmem>>, vector<1x16x8xbf16>,
    } else {
    }
    %c0_i32_3 = arith.constant 0 : i32
    %6 = arith.cmpi eq, %arg1, %c0_i32_3 : i32
    %7 = arith.extui %6 : i1 to i32
    %c0_i32_4 = arith.constant 0 : i32
    %8 = arith.cmpi ne, %7, %c0_i32_4 : i32
    scf.if %8 {
      %cst_78 = arith.constant 0.000000e+00 : bf16
      %87 = vector.broadcast %cst_78 : bf16 to vector<1x16x8xbf16>
      %c17 = arith.constant 17 : index
      %c1_79 = arith.constant 1 : index
      %c0_80 = arith.constant 0 : index
      %88 = vector.load %arg8[%c17, %c1_79, %c0_80] : memref<18x18x8xbf16, #tpu.memory_space<vmem>>, vector<1x16x8xbf16>
      tpu.vector_store %arg8[%c17, %c1_79, %c0_80], %87 {strides = array<i32>} : memref<18x18x8xbf16, #tpu.memory_space<vmem>>, vector<1x16x8xbf16>,
    } else {
    }
    %c0_i32_5 = arith.constant 0 : i32
    %9 = arith.cmpi slt, %arg1, %c0_i32_5 : i32
    %10 = arith.extui %9 : i1 to i32
    %c0_i32_6 = arith.constant 0 : i32
    %11 = arith.cmpi ne, %10, %c0_i32_6 : i32
    scf.if %11 {
      %c0_78 = arith.constant 0 : index
      %c0_79 = arith.constant 0 : index
      %c0_80 = arith.constant 0 : index
      %c0_81 = arith.constant 0 : index
      %87 = vector.load %arg4[%c0_78, %c0_79, %c0_80, %c0_81] : memref<1x1x16x8xbf16, #tpu.memory_space<vmem>>, vector<1x1x16x8xbf16>
      %88 = vector.shape_cast %87 : vector<1x1x16x8xbf16> to vector<1x16x8xbf16>
      %c17 = arith.constant 17 : index
      %c1_82 = arith.constant 1 : index
      %c0_83 = arith.constant 0 : index
      %89 = vector.load %arg8[%c17, %c1_82, %c0_83] : memref<18x18x8xbf16, #tpu.memory_space<vmem>>, vector<1x16x8xbf16>
      tpu.vector_store %arg8[%c17, %c1_82, %c0_83], %88 {strides = array<i32>} : memref<18x18x8xbf16, #tpu.memory_space<vmem>>, vector<1x16x8xbf16>,
    } else {
    }
    %c0 = arith.constant 0 : index
    %c0_7 = arith.constant 0 : index
    %c0_8 = arith.constant 0 : index
    %c0_9 = arith.constant 0 : index
    %12 = vector.load %arg2[%c0, %c0_7, %c0_8, %c0_9] : memref<1x16x16x8xbf16, #tpu.memory_space<vmem>>, vector<1x16x16x8xbf16>
    %13 = vector.shape_cast %12 : vector<1x16x16x8xbf16> to vector<16x16x8xbf16>
    %c1 = arith.constant 1 : index
    %c1_10 = arith.constant 1 : index
    %c0_11 = arith.constant 0 : index
    %14 = vector.load %arg8[%c1, %c1_10, %c0_11] : memref<18x18x8xbf16, #tpu.memory_space<vmem>>, vector<16x16x8xbf16>
    tpu.vector_store %arg8[%c1, %c1_10, %c0_11], %13 {strides = array<i32>} : memref<18x18x8xbf16, #tpu.memory_space<vmem>>, vector<16x16x8xbf16>,
    %cst = arith.constant 0.000000e+00 : f32
    %15 = vector.broadcast %cst : f32 to vector<256x128xf32>
    %c0_12 = arith.constant 0 : index
    %c0_13 = arith.constant 0 : index
    %c0_14 = arith.constant 0 : index
    %16 = vector.load %arg8[%c0_12, %c0_13, %c0_14] : memref<18x18x8xbf16, #tpu.memory_space<vmem>>, vector<16x16x8xbf16>
    %17 = vector.shape_cast %16 : vector<16x16x8xbf16> to vector<256x8xbf16>
    %c0_15 = arith.constant 0 : index
    %c0_16 = arith.constant 0 : index
    %c0_17 = arith.constant 0 : index
    %18 = vector.load %arg5[%c0_15, %c0_16, %c0_17] : memref<9x8x128xbf16, #tpu.memory_space<vmem>>, vector<1x8x128xbf16>
    %19 = vector.shape_cast %18 : vector<1x8x128xbf16> to vector<8x128xbf16>
    %cst_18 = arith.constant dense<0.000000e+00> : vector<256x128xf32>
    %20 = tpu.matmul %17, %19, %cst_18 {dimension_numbers = #tpu.dot_dimension_numbers<[1], [0], [0], [1], [0, 0, 1, 1], [], []>} : vector<256x8xbf16>, vector<8x128xbf16>, vector<256x128xf32> -> vector<256x128xf32>
    %21 = arith.addf %15, %20 : vector<256x128xf32>
    %c0_19 = arith.constant 0 : index
    %c1_20 = arith.constant 1 : index
    %c0_21 = arith.constant 0 : index
    %22 = vector.load %arg8[%c0_19, %c1_20, %c0_21] : memref<18x18x8xbf16, #tpu.memory_space<vmem>>, vector<16x16x8xbf16>
    %23 = vector.shape_cast %22 : vector<16x16x8xbf16> to vector<256x8xbf16>
    %c1_22 = arith.constant 1 : index
    %c0_23 = arith.constant 0 : index
    %c0_24 = arith.constant 0 : index
    %24 = vector.load %arg5[%c1_22, %c0_23, %c0_24] : memref<9x8x128xbf16, #tpu.memory_space<vmem>>, vector<1x8x128xbf16>
    %25 = vector.shape_cast %24 : vector<1x8x128xbf16> to vector<8x128xbf16>
    %cst_25 = arith.constant dense<0.000000e+00> : vector<256x128xf32>
    %26 = tpu.matmul %23, %25, %cst_25 {dimension_numbers = #tpu.dot_dimension_numbers<[1], [0], [0], [1], [0, 0, 1, 1], [], []>} : vector<256x8xbf16>, vector<8x128xbf16>, vector<256x128xf32> -> vector<256x128xf32>
    %27 = arith.addf %21, %26 : vector<256x128xf32>
    %c0_26 = arith.constant 0 : index
    %c2 = arith.constant 2 : index
    %c0_27 = arith.constant 0 : index
    %28 = vector.load %arg8[%c0_26, %c2, %c0_27] : memref<18x18x8xbf16, #tpu.memory_space<vmem>>, vector<16x16x8xbf16>
    %29 = vector.shape_cast %28 : vector<16x16x8xbf16> to vector<256x8xbf16>
    %c2_28 = arith.constant 2 : index
    %c0_29 = arith.constant 0 : index
    %c0_30 = arith.constant 0 : index
    %30 = vector.load %arg5[%c2_28, %c0_29, %c0_30] : memref<9x8x128xbf16, #tpu.memory_space<vmem>>, vector<1x8x128xbf16>
    %31 = vector.shape_cast %30 : vector<1x8x128xbf16> to vector<8x128xbf16>
    %cst_31 = arith.constant dense<0.000000e+00> : vector<256x128xf32>
    %32 = tpu.matmul %29, %31, %cst_31 {dimension_numbers = #tpu.dot_dimension_numbers<[1], [0], [0], [1], [0, 0, 1, 1], [], []>} : vector<256x8xbf16>, vector<8x128xbf16>, vector<256x128xf32> -> vector<256x128xf32>
    %33 = arith.addf %27, %32 : vector<256x128xf32>
    %c1_32 = arith.constant 1 : index
    %c0_33 = arith.constant 0 : index
    %c0_34 = arith.constant 0 : index
    %34 = vector.load %arg8[%c1_32, %c0_33, %c0_34] : memref<18x18x8xbf16, #tpu.memory_space<vmem>>, vector<16x16x8xbf16>
    %35 = vector.shape_cast %34 : vector<16x16x8xbf16> to vector<256x8xbf16>
    %c3 = arith.constant 3 : index
    %c0_35 = arith.constant 0 : index
    %c0_36 = arith.constant 0 : index
    %36 = vector.load %arg5[%c3, %c0_35, %c0_36] : memref<9x8x128xbf16, #tpu.memory_space<vmem>>, vector<1x8x128xbf16>
    %37 = vector.shape_cast %36 : vector<1x8x128xbf16> to vector<8x128xbf16>
    %cst_37 = arith.constant dense<0.000000e+00> : vector<256x128xf32>
    %38 = tpu.matmul %35, %37, %cst_37 {dimension_numbers = #tpu.dot_dimension_numbers<[1], [0], [0], [1], [0, 0, 1, 1], [], []>} : vector<256x8xbf16>, vector<8x128xbf16>, vector<256x128xf32> -> vector<256x128xf32>
    %39 = arith.addf %33, %38 : vector<256x128xf32>
    %c1_38 = arith.constant 1 : index
    %c1_39 = arith.constant 1 : index
    %c0_40 = arith.constant 0 : index
    %40 = vector.load %arg8[%c1_38, %c1_39, %c0_40] : memref<18x18x8xbf16, #tpu.memory_space<vmem>>, vector<16x16x8xbf16>
    %41 = vector.shape_cast %40 : vector<16x16x8xbf16> to vector<256x8xbf16>
    %c4 = arith.constant 4 : index
    %c0_41 = arith.constant 0 : index
    %c0_42 = arith.constant 0 : index
    %42 = vector.load %arg5[%c4, %c0_41, %c0_42] : memref<9x8x128xbf16, #tpu.memory_space<vmem>>, vector<1x8x128xbf16>
    %43 = vector.shape_cast %42 : vector<1x8x128xbf16> to vector<8x128xbf16>
    %cst_43 = arith.constant dense<0.000000e+00> : vector<256x128xf32>
    %44 = tpu.matmul %41, %43, %cst_43 {dimension_numbers = #tpu.dot_dimension_numbers<[1], [0], [0], [1], [0, 0, 1, 1], [], []>} : vector<256x8xbf16>, vector<8x128xbf16>, vector<256x128xf32> -> vector<256x128xf32>
    %45 = arith.addf %39, %44 : vector<256x128xf32>
    %c1_44 = arith.constant 1 : index
    %c2_45 = arith.constant 2 : index
    %c0_46 = arith.constant 0 : index
    %46 = vector.load %arg8[%c1_44, %c2_45, %c0_46] : memref<18x18x8xbf16, #tpu.memory_space<vmem>>, vector<16x16x8xbf16>
    %47 = vector.shape_cast %46 : vector<16x16x8xbf16> to vector<256x8xbf16>
    %c5 = arith.constant 5 : index
    %c0_47 = arith.constant 0 : index
    %c0_48 = arith.constant 0 : index
    %48 = vector.load %arg5[%c5, %c0_47, %c0_48] : memref<9x8x128xbf16, #tpu.memory_space<vmem>>, vector<1x8x128xbf16>
    %49 = vector.shape_cast %48 : vector<1x8x128xbf16> to vector<8x128xbf16>
    %cst_49 = arith.constant dense<0.000000e+00> : vector<256x128xf32>
    %50 = tpu.matmul %47, %49, %cst_49 {dimension_numbers = #tpu.dot_dimension_numbers<[1], [0], [0], [1], [0, 0, 1, 1], [], []>} : vector<256x8xbf16>, vector<8x128xbf16>, vector<256x128xf32> -> vector<256x128xf32>
    %51 = arith.addf %45, %50 : vector<256x128xf32>
    %c2_50 = arith.constant 2 : index
    %c0_51 = arith.constant 0 : index
    %c0_52 = arith.constant 0 : index
    %52 = vector.load %arg8[%c2_50, %c0_51, %c0_52] : memref<18x18x8xbf16, #tpu.memory_space<vmem>>, vector<16x16x8xbf16>
    %53 = vector.shape_cast %52 : vector<16x16x8xbf16> to vector<256x8xbf16>
    %c6 = arith.constant 6 : index
    %c0_53 = arith.constant 0 : index
    %c0_54 = arith.constant 0 : index
    %54 = vector.load %arg5[%c6, %c0_53, %c0_54] : memref<9x8x128xbf16, #tpu.memory_space<vmem>>, vector<1x8x128xbf16>
    %55 = vector.shape_cast %54 : vector<1x8x128xbf16> to vector<8x128xbf16>
    %cst_55 = arith.constant dense<0.000000e+00> : vector<256x128xf32>
    %56 = tpu.matmul %53, %55, %cst_55 {dimension_numbers = #tpu.dot_dimension_numbers<[1], [0], [0], [1], [0, 0, 1, 1], [], []>} : vector<256x8xbf16>, vector<8x128xbf16>, vector<256x128xf32> -> vector<256x128xf32>
    %57 = arith.addf %51, %56 : vector<256x128xf32>
    %c2_56 = arith.constant 2 : index
    %c1_57 = arith.constant 1 : index
    %c0_58 = arith.constant 0 : index
    %58 = vector.load %arg8[%c2_56, %c1_57, %c0_58] : memref<18x18x8xbf16, #tpu.memory_space<vmem>>, vector<16x16x8xbf16>
    %59 = vector.shape_cast %58 : vector<16x16x8xbf16> to vector<256x8xbf16>
    %c7 = arith.constant 7 : index
    %c0_59 = arith.constant 0 : index
    %c0_60 = arith.constant 0 : index
    %60 = vector.load %arg5[%c7, %c0_59, %c0_60] : memref<9x8x128xbf16, #tpu.memory_space<vmem>>, vector<1x8x128xbf16>
    %61 = vector.shape_cast %60 : vector<1x8x128xbf16> to vector<8x128xbf16>
    %cst_61 = arith.constant dense<0.000000e+00> : vector<256x128xf32>
    %62 = tpu.matmul %59, %61, %cst_61 {dimension_numbers = #tpu.dot_dimension_numbers<[1], [0], [0], [1], [0, 0, 1, 1], [], []>} : vector<256x8xbf16>, vector<8x128xbf16>, vector<256x128xf32> -> vector<256x128xf32>
    %63 = arith.addf %57, %62 : vector<256x128xf32>
    %c2_62 = arith.constant 2 : index
    %c2_63 = arith.constant 2 : index
    %c0_64 = arith.constant 0 : index
    %64 = vector.load %arg8[%c2_62, %c2_63, %c0_64] : memref<18x18x8xbf16, #tpu.memory_space<vmem>>, vector<16x16x8xbf16>
    %65 = vector.shape_cast %64 : vector<16x16x8xbf16> to vector<256x8xbf16>
    %c8 = arith.constant 8 : index
    %c0_65 = arith.constant 0 : index
    %c0_66 = arith.constant 0 : index
    %66 = vector.load %arg5[%c8, %c0_65, %c0_66] : memref<9x8x128xbf16, #tpu.memory_space<vmem>>, vector<1x8x128xbf16>
    %67 = vector.shape_cast %66 : vector<1x8x128xbf16> to vector<8x128xbf16>
    %cst_67 = arith.constant dense<0.000000e+00> : vector<256x128xf32>
    %68 = tpu.matmul %65, %67, %cst_67 {dimension_numbers = #tpu.dot_dimension_numbers<[1], [0], [0], [1], [0, 0, 1, 1], [], []>} : vector<256x8xbf16>, vector<8x128xbf16>, vector<256x128xf32> -> vector<256x128xf32>
    %69 = arith.addf %63, %68 : vector<256x128xf32>
    %70 = arith.truncf %69 : vector<256x128xf32> to vector<256x128xbf16>
    %71 = vector.shape_cast %70 : vector<256x128xbf16> to vector<1x16x16x128xbf16>
    %c0_68 = arith.constant 0 : index
    %c0_69 = arith.constant 0 : index
    %c0_70 = arith.constant 0 : index
    %c0_71 = arith.constant 0 : index
    %72 = vector.load %arg6[%c0_68, %c0_69, %c0_70, %c0_71] : memref<1x16x16x128xbf16, #tpu.memory_space<vmem>>, vector<1x16x16x128xbf16>
    tpu.vector_store %arg6[%c0_68, %c0_69, %c0_70, %c0_71], %71 {strides = array<i32>} : memref<1x16x16x128xbf16, #tpu.memory_space<vmem>>, vector<1x16x16x128xbf16>,
    %73 = arith.extf %70 : vector<256x128xbf16> to vector<256x128xf32>
    %cst_72 = arith.constant dense<0.000000e+00> : vector<128xf32>
    %74 = vector.multi_reduction <add>, %73, %cst_72 [0] : vector<256x128xf32> to vector<128xf32>
    %75 = vector.shape_cast %74 : vector<128xf32> to vector<1x128xf32>
    %76 = arith.mulf %73, %73 : vector<256x128xf32>
    %cst_73 = arith.constant dense<0.000000e+00> : vector<128xf32>
    %77 = vector.multi_reduction <add>, %76, %cst_73 [0] : vector<256x128xf32> to vector<128xf32>
    %78 = vector.shape_cast %77 : vector<128xf32> to vector<1x128xf32>
    %79 = tpu.concatenate %75, %78 in 0 : vector<1x128xf32>, vector<1x128xf32> -> vector<2x128xf32>
    %80 = vector.shape_cast %79 : vector<2x128xf32> to vector<1x2x128xf32>
    %c0_i32_74 = arith.constant 0 : i32
    %81 = arith.cmpi eq, %arg1, %c0_i32_74 : i32
    %82 = arith.extui %81 : i1 to i32
    %c0_i32_75 = arith.constant 0 : i32
    %83 = arith.cmpi ne, %82, %c0_i32_75 : i32
    scf.if %83 {
      %c0_78 = arith.constant 0 : index
      %c0_79 = arith.constant 0 : index
      %c0_80 = arith.constant 0 : index
      %87 = vector.load %arg7[%c0_78, %c0_79, %c0_80] : memref<1x2x128xf32, #tpu.memory_space<vmem>>, vector<1x2x128xf32>
      tpu.vector_store %arg7[%c0_78, %c0_79, %c0_80], %80 {strides = array<i32>} : memref<1x2x128xf32, #tpu.memory_space<vmem>>, vector<1x2x128xf32>,
    } else {
    }
    %c0_i32_76 = arith.constant 0 : i32
    %84 = arith.cmpi sgt, %arg1, %c0_i32_76 : i32
    %85 = arith.extui %84 : i1 to i32
    %c0_i32_77 = arith.constant 0 : i32
    %86 = arith.cmpi ne, %85, %c0_i32_77 : i32
    scf.if %86 {
      %c0_78 = arith.constant 0 : index
      %c0_79 = arith.constant 0 : index
      %c0_80 = arith.constant 0 : index
      %87 = vector.load %arg7[%c0_78, %c0_79, %c0_80] : memref<1x2x128xf32, #tpu.memory_space<vmem>>, vector<1x2x128xf32>
      %88 = arith.addf %87, %80 : vector<1x2x128xf32>
      %c0_81 = arith.constant 0 : index
      %c0_82 = arith.constant 0 : index
      %c0_83 = arith.constant 0 : index
      %89 = vector.load %arg7[%c0_81, %c0_82, %c0_83] : memref<1x2x128xf32, #tpu.memory_space<vmem>>, vector<1x2x128xf32>
      tpu.vector_store %arg7[%c0_81, %c0_82, %c0_83], %88 {strides = array<i32>} : memref<1x2x128xf32, #tpu.memory_space<vmem>>, vector<1x2x128xf32>,
    } else {
    }
    return
  }
  func.func @transform_0(%arg0: i32, %arg1: i32) -> (i32, i32, i32, i32) {
    %c0_i32 = arith.constant 0 : i32
    %c0_i32_0 = arith.constant 0 : i32
    %c0_i32_1 = arith.constant 0 : i32
    return %arg0, %arg1, %c0_i32, %c0_i32_0 : i32, i32, i32, i32
  }
  func.func @transform_1(%arg0: i32, %arg1: i32) -> (i32, i32, i32, i32) {
    %c16_i32 = arith.constant 16 : i32
    %0 = arith.muli %arg1, %c16_i32 : i32
    %c1_i32 = arith.constant 1 : i32
    %1 = arith.subi %0, %c1_i32 : i32
    %c0_i32 = arith.constant 0 : i32
    %2 = arith.maxsi %1, %c0_i32 : i32
    %c0_i32_0 = arith.constant 0 : i32
    %c0_i32_1 = arith.constant 0 : i32
    %c0_i32_2 = arith.constant 0 : i32
    return %arg0, %2, %c0_i32_0, %c0_i32_1 : i32, i32, i32, i32
  }
  func.func @transform_2(%arg0: i32, %arg1: i32) -> (i32, i32, i32, i32) {
    %c16_i32 = arith.constant 16 : i32
    %0 = arith.muli %arg1, %c16_i32 : i32
    %c16_i32_0 = arith.constant 16 : i32
    %1 = arith.addi %0, %c16_i32_0 : i32
    %c15_i32 = arith.constant 15 : i32
    %2 = arith.minsi %1, %c15_i32 : i32
    %c0_i32 = arith.constant 0 : i32
    %c0_i32_1 = arith.constant 0 : i32
    %c0_i32_2 = arith.constant 0 : i32
    return %arg0, %2, %c0_i32, %c0_i32_1 : i32, i32, i32, i32
  }
  func.func @transform_3(%arg0: i32, %arg1: i32) -> (i32, i32, i32) {
    %c0_i32 = arith.constant 0 : i32
    %c0_i32_0 = arith.constant 0 : i32
    %c0_i32_1 = arith.constant 0 : i32
    %c0_i32_2 = arith.constant 0 : i32
    return %c0_i32, %c0_i32_0, %c0_i32_1 : i32, i32, i32
  }
  func.func @transform_4(%arg0: i32, %arg1: i32) -> (i32, i32, i32, i32) {
    %c0_i32 = arith.constant 0 : i32
    %c0_i32_0 = arith.constant 0 : i32
    %c0_i32_1 = arith.constant 0 : i32
    return %arg0, %arg1, %c0_i32, %c0_i32_0 : i32, i32, i32, i32
  }
  func.func @transform_5(%arg0: i32, %arg1: i32) -> (i32, i32, i32) {
    %c0_i32 = arith.constant 0 : i32
    %c0_i32_0 = arith.constant 0 : i32
    %c0_i32_1 = arith.constant 0 : i32
    return %arg0, %c0_i32, %c0_i32_0 : i32, i32, i32
  }
}

</mosaic_0001>

<llo_original>
// kernel: tpu_custom_call.1
$region0: #{tpu_custom_call.1}
  #allocation0 [shape = 'u32[]', space=smem, size = 0x4, offset = 0x4, fixed_abs, tag = 'smem constant byte address 0x4 - core index']
  #allocation1 [shape = 'u32[144,128]{1,0:T(1,128)}', space=vmem, size = 0x12000, scoped, tag = 'internal scratch']
  #allocation2 [shape = 'bf16[18,18,8]{2,1,0:T(8,128)(2,1)}', space=vmem, size = 0x1b000, scoped, tag = 'scratch operand']
  %s0 = inlined_call_operand.vmem [shape: bf16[2,16,16,8], index: 0, kind: input, shape index: {}]
  %s1 = inlined_call_operand.vmem [shape: bf16[2,16,16,8], index: 1, kind: input, shape index: {}]
  %s2 = inlined_call_operand.vmem [shape: bf16[2,16,16,8], index: 2, kind: input, shape index: {}]
  %s3 = inlined_call_operand.vmem [shape: bf16[9,8,128], index: 3, kind: input, shape index: {}]
  %s4 = inlined_call_operand.hbm [shape: bf16[2,16,16,128], index: 4, kind: output, shape index: {0}]
  %s5 = inlined_call_operand.hbm [shape: f32[2,2,128], index: 5, kind: output, shape index: {1}]
  %6 = xla_tuple %s4, %s5
  %s7 = sld [smem:[#allocation0]]
  $region81: #{tpu_custom_call.1} parent=0
    _
  %s9 = ssub.s32 1, %s7
  %s10 = scalar_select 0, %s9, %s7
  $region1: #{tpu_custom_call.1} parent=0
    #allocation3 [shape = 'u8[131072]{0}', space=vmem, size = 0x20000, scoped, tag = 'output window, operand 0']
    #allocation4 [shape = 's32[2]{0}', space=sflag, size = 0x8, scoped, tag = 'scoped memory for tpu_custom_call.1']
    #allocation5 [shape = 'u8[2048]{0}', space=vmem, size = 0x800, scoped, tag = 'output window, operand 1']
    #allocation6 [shape = 's32[2]{0}', space=sflag, size = 0x8, scoped, tag = 'scoped memory for tpu_custom_call.1']
    %11 = vsyncpa [#allocation4], 0
    %s12 = scalar_lea.sflag [#allocation4], 1
    %13 = vsyncpa %s12, 0
    %14 = vsyncpa [#allocation6], 0
    %s15 = scalar_lea.sflag [#allocation6], 1
    %16 = vsyncpa %s15, 0
    loop: start=0, step=1, limit=4
    $region2: #{tpu_custom_call.1} parent=1 // loop_pre_header
      _
    $region3: #{tpu_custom_call.1} parent=1 // loop_header
      %s18 = sphi 0, %s22
      %p19 = scmp.ge.s32.totalorder %s18, 4
      %s25 = sphi 0, %s37
      %s26 = sphi 0, %s33
      %s27 = sphi 0, %s25
      %s28 = sphi 0, %s26
      %s29 = sphi 0, %s27
      %s30 = sphi 0, %s28
      %s42 = sphi 0, %s44
      %s45 = sphi 0, %s42
      %s46 = sphi 0, %s45
      %s62 = sphi 0, %s46
      %s78 = sphi 0, %s80
      %s81 = sphi 0, %s78
      %s82 = sphi 0, %s81
      %s98 = sphi 0, %s82
      %s114 = sphi 0, %s116
      %s117 = sphi 0, %s114
      %s118 = sphi 0, %s117
      %s134 = sphi 0, %s118
      %s138 = sphi 0, %s138
      %s140 = sphi 0, %s138
      %s141 = sphi 0, %s140
      %s155 = sphi 0, %s141
      %s163 = sphi 0, %s165
      %s166 = sphi 0, %s163
      %s167 = sphi 0, %s166
      %s183 = sphi 0, %s167
      %s189 = sphi 0, %s191
      %s192 = sphi 0, %s189
      %s193 = sphi 0, %s192
      %s209 = sphi 0, %s193
    $region4: #{tpu_custom_call.1} parent=1 // loop_header_branch
      %21 = sbr.rel (%p19) target = $region8
    $region5: #{tpu_custom_call.1} parent=1 // loop_body
      %s23 = ssub.s32 %s18, 1
      %s24 = ssub.s32 %s18, 2
      %s31 = sadd.s32 1, %s26
      %p32 = scmp.ge.s32.totalorder %s31, 1
      %s33 = scalar_select %p32, 0, %s31
      %s34 = sadd.s32 1, %s25
      %s35 = scalar_select %p32, %s34, %s25
      %p36 = scmp.ge.s32.totalorder %s35, 2
      %s37 = scalar_select %p36, 0, %s35
      %s38 = ssub.s32 %s25, %s37
      %s39 = ssub.s32 %s26, %s33
      %s40 = sor.u32 %s38, %s39
      %p41 = scmp.eq.s32.totalorder %s40, 0
      %s43 = sadd.s32 %s42, 1
      %s44 = scalar_select %p41, %s42, %s43
      %p47 = pneg %p41
      %p48 = scmp.eq.s32.totalorder %s18, 1
      %p49 = por %p47, %p48
      %p50 = scmp.ne.s32.totalorder %s42, %s45
      %p51 = scmp.eq.s32.totalorder %s18, 0
      %p52 = por %p50, %p51
      %p53 = scmp.ne.s32.totalorder %s42, %s45
      %p54 = scmp.eq.s32.totalorder %s23, 1
      %p55 = por %p53, %p54
      %p56 = scmp.ne.s32.totalorder %s45, %s46
      %p57 = scmp.eq.s32.totalorder %s23, 0
      %p58 = por %p56, %p57
      %p59 = scmp.ne.s32.totalorder %s45, %s46
      %p60 = scmp.eq.s32.totalorder %s24, 1
      %p61 = por %p59, %p60
      %p63 = scmp.ne.s32.totalorder %s46, %s62
      %p64 = scmp.eq.s32.totalorder %s24, 0
      %p65 = por %p63, %p64
      %s66 = smul.u32 %s26, 16
      %s67 = ssub.s32 %s66, 1
      %p68 = scmp.gt.s32.totalorder %s67, 0
      %s69 = scalar_select %p68, %s67, 0
      %s70 = smul.u32 %s33, 16
      %s71 = ssub.s32 %s70, 1
      %p72 = scmp.gt.s32.totalorder %s71, 0
      %s73 = scalar_select %p72, %s71, 0
      %s74 = ssub.s32 %s25, %s37
      %s75 = ssub.s32 %s69, %s73
      %s76 = sor.u32 %s74, %s75
      %p77 = scmp.eq.s32.totalorder %s76, 0
      %s79 = sadd.s32 %s78, 1
      %s80 = scalar_select %p77, %s78, %s79
      %p83 = pneg %p77
      %p84 = scmp.eq.s32.totalorder %s18, 1
      %p85 = por %p83, %p84
      %p86 = scmp.ne.s32.totalorder %s78, %s81
      %p87 = scmp.eq.s32.totalorder %s18, 0
      %p88 = por %p86, %p87
      %p89 = scmp.ne.s32.totalorder %s78, %s81
      %p90 = scmp.eq.s32.totalorder %s23, 1
      %p91 = por %p89, %p90
      %p92 = scmp.ne.s32.totalorder %s81, %s82
      %p93 = scmp.eq.s32.totalorder %s23, 0
      %p94 = por %p92, %p93
      %p95 = scmp.ne.s32.totalorder %s81, %s82
      %p96 = scmp.eq.s32.totalorder %s24, 1
      %p97 = por %p95, %p96
      %p99 = scmp.ne.s32.totalorder %s82, %s98
      %p100 = scmp.eq.s32.totalorder %s24, 0
      %p101 = por %p99, %p100
      %s102 = smul.u32 %s26, 16
      %s103 = sadd.s32 %s102, 16
      %p104 = scmp.lt.s32.totalorder %s103, 15
      %s105 = scalar_select %p104, %s103, 15
      %s106 = smul.u32 %s33, 16
      %s107 = sadd.s32 %s106, 16
      %p108 = scmp.lt.s32.totalorder %s107, 15
      %s109 = scalar_select %p108, %s107, 15
      %s110 = ssub.s32 %s25, %s37
      %s111 = ssub.s32 %s105, %s109
      %s112 = sor.u32 %s110, %s111
      %p113 = scmp.eq.s32.totalorder %s112, 0
      %s115 = sadd.s32 %s114, 1
      %s116 = scalar_select %p113, %s114, %s115
      %p119 = pneg %p113
      %p120 = scmp.eq.s32.totalorder %s18, 1
      %p121 = por %p119, %p120
      %p122 = scmp.ne.s32.totalorder %s114, %s117
      %p123 = scmp.eq.s32.totalorder %s18, 0
      %p124 = por %p122, %p123
      %p125 = scmp.ne.s32.totalorder %s114, %s117
      %p126 = scmp.eq.s32.totalorder %s23, 1
      %p127 = por %p125, %p126
      %p128 = scmp.ne.s32.totalorder %s117, %s118
      %p129 = scmp.eq.s32.totalorder %s23, 0
      %p130 = por %p128, %p129
      %p131 = scmp.ne.s32.totalorder %s117, %s118
      %p132 = scmp.eq.s32.totalorder %s24, 1
      %p133 = por %p131, %p132
      %p135 = scmp.ne.s32.totalorder %s118, %s134
      %p136 = scmp.eq.s32.totalorder %s24, 0
      %p137 = por %p135, %p136
      %s139 = sadd.s32 %s138, 1
      %p142 = scmp.eq.s32.totalorder %s18, 1
      %p143 = scmp.ne.s32.totalorder %s138, %s140
      %p144 = scmp.eq.s32.totalorder %s18, 0
      %p145 = por %p143, %p144
      %p146 = scmp.ne.s32.totalorder %s138, %s140
      %p147 = scmp.eq.s32.totalorder %s23, 1
      %p148 = por %p146, %p147
      %p149 = scmp.ne.s32.totalorder %s140, %s141
      %p150 = scmp.eq.s32.totalorder %s23, 0
      %p151 = por %p149, %p150
      %p152 = scmp.ne.s32.totalorder %s140, %s141
      %p153 = scmp.eq.s32.totalorder %s24, 1
      %p154 = por %p152, %p153
      %p156 = scmp.ne.s32.totalorder %s141, %s155
      %p157 = scmp.eq.s32.totalorder %s24, 0
      %p158 = por %p156, %p157
      %s159 = ssub.s32 %s25, %s37
      %s160 = ssub.s32 %s26, %s33
      %s161 = sor.u32 %s159, %s160
      %p162 = scmp.eq.s32.totalorder %s161, 0
      %s164 = sadd.s32 %s163, 1
      %s165 = scalar_select %p162, %s163, %s164
      %p168 = pneg %p162
      %p169 = scmp.eq.s32.totalorder %s18, 1
      %p170 = por %p168, %p169
      %p171 = scmp.ne.s32.totalorder %s163, %s166
      %p172 = scmp.eq.s32.totalorder %s18, 0
      %p173 = por %p171, %p172
      %p174 = scmp.ne.s32.totalorder %s163, %s166
      %p175 = scmp.eq.s32.totalorder %s23, 1
      %p176 = por %p174, %p175
      %p177 = scmp.ne.s32.totalorder %s166, %s167
      %p178 = scmp.eq.s32.totalorder %s23, 0
      %p179 = por %p177, %p178
      %p180 = scmp.ne.s32.totalorder %s166, %s167
      %p181 = scmp.eq.s32.totalorder %s24, 1
      %p182 = por %p180, %p181
      %p184 = scmp.ne.s32.totalorder %s167, %s183
      %p185 = scmp.eq.s32.totalorder %s24, 0
      %p186 = por %p184, %p185
      %s187 = ssub.s32 %s25, %s37
      %p188 = scmp.eq.s32.totalorder %s187, 0
      %s190 = sadd.s32 %s189, 1
      %s191 = scalar_select %p188, %s189, %s190
      %p194 = pneg %p188
      %p195 = scmp.eq.s32.totalorder %s18, 1
      %p196 = por %p194, %p195
      %p197 = scmp.ne.s32.totalorder %s189, %s192
      %p198 = scmp.eq.s32.totalorder %s18, 0
      %p199 = por %p197, %p198
      %p200 = scmp.ne.s32.totalorder %s189, %s192
      %p201 = scmp.eq.s32.totalorder %s23, 1
      %p202 = por %p200, %p201
      %p203 = scmp.ne.s32.totalorder %s192, %s193
      %p204 = scmp.eq.s32.totalorder %s23, 0
      %p205 = por %p203, %p204
      %p206 = scmp.ne.s32.totalorder %s192, %s193
      %p207 = scmp.eq.s32.totalorder %s24, 1
      %p208 = por %p206, %p207
      %p210 = scmp.ne.s32.totalorder %s193, %s209
      %p211 = scmp.eq.s32.totalorder %s24, 0
      %p212 = por %p210, %p211
      %p213 = scmp.le.s32.totalorder 1, %s18
      %p214 = scmp.lt.s32.totalorder %s18, 3
      %p215 = pnand %p213, %p214
      %p216 = pneg %p215
      // Predicated region
      $region9: #{tpu_custom_call.1} parent=5 // pred_check
        _
      $region10: #{tpu_custom_call.1} parent=5 // pred_check_branch
        %218 = sbr.rel (%p215) target = $region12
      $region11: #{tpu_custom_call.1} parent=5 // pred_region
        %s219 = ssub.s32 %s18, 1
        // Predicated region
        $region13: #{tpu_custom_call.1} parent=11 // pred_check
          %p220 = pneg %p151
        $region14: #{tpu_custom_call.1} parent=11 // pred_check_branch
          %222 = sbr.rel (%p220) target = $region16
        $region15: #{tpu_custom_call.1} parent=11 // pred_region
          _
        $region16: #{tpu_custom_call.1} parent=11 // pred_fallthru
          _
      $region12: #{tpu_custom_call.1} parent=5 // pred_fallthru
        _
      %p223 = scmp.lt.s32.totalorder %s18, 2
      // Predicated region
      $region17: #{tpu_custom_call.1} parent=5 // pred_check
        %p224 = pneg %p223
      $region18: #{tpu_custom_call.1} parent=5 // pred_check_branch
        %226 = sbr.rel (%p224) target = $region20
      $region19: #{tpu_custom_call.1} parent=5 // pred_region
        // Predicated region
        $region21: #{tpu_custom_call.1} parent=19 // pred_check
          %p227 = pneg %p52
        $region22: #{tpu_custom_call.1} parent=19 // pred_check_branch
          %229 = sbr.rel (%p227) target = $region24
        $region23: #{tpu_custom_call.1} parent=19 // pred_region
          %s230 = smul.u32 16, %s26
          %p231 = scmp.lt.s32.totalorder %s25, 1
          %s232 = scalar_select %p231, %s25, 1
          %p233 = scmp.lt.s32.totalorder %s230, 15
          %s234 = scalar_select %p233, %s230, 15
          %s235 = smul.addr %s234, 2
          %s236 = smul.addr %s232, 32
          %s237 = sadd.s32 %s235, %s236
          %s238 = smul.addr %s237, 4
          %s239 = scalar_lea.vmem %s0, %s238
          %s240 = smul.u32 16, %s26
        $region24: #{tpu_custom_call.1} parent=19 // pred_fallthru
          _
        // Predicated region
        $region25: #{tpu_custom_call.1} parent=19 // pred_check
          %p241 = pneg %p88
        $region26: #{tpu_custom_call.1} parent=19 // pred_check_branch
          %243 = sbr.rel (%p241) target = $region28
        $region27: #{tpu_custom_call.1} parent=19 // pred_region
          %s244 = smul.u32 %s26, 16
          %s245 = ssub.s32 %s244, 1
          %p246 = scmp.gt.s32.totalorder %s245, 0
          %s247 = scalar_select %p246, %s245, 0
          %p248 = scmp.lt.s32.totalorder %s25, 1
          %s249 = scalar_select %p248, %s25, 1
          %p250 = scmp.lt.s32.totalorder %s247, 15
          %s251 = scalar_select %p250, %s247, 15
          %s252 = smul.addr %s251, 2
          %s253 = smul.addr %s249, 32
          %s254 = sadd.s32 %s252, %s253
          %s255 = smul.addr %s254, 4
          %s256 = scalar_lea.vmem %s1, %s255
          %s257 = smul.u32 %s26, 16
          %s258 = ssub.s32 %s257, 1
          %p259 = scmp.gt.s32.totalorder %s258, 0
          %s260 = scalar_select %p259, %s258, 0
        $region28: #{tpu_custom_call.1} parent=19 // pred_fallthru
          _
        // Predicated region
        $region29: #{tpu_custom_call.1} parent=19 // pred_check
          %p261 = pneg %p124
        $region30: #{tpu_custom_call.1} parent=19 // pred_check_branch
          %263 = sbr.rel (%p261) target = $region32
        $region31: #{tpu_custom_call.1} parent=19 // pred_region
          %s264 = smul.u32 %s26, 16
          %s265 = sadd.s32 %s264, 16
          %p266 = scmp.lt.s32.totalorder %s265, 15
          %s267 = scalar_select %p266, %s265, 15
          %p268 = scmp.lt.s32.totalorder %s25, 1
          %s269 = scalar_select %p268, %s25, 1
          %p270 = scmp.lt.s32.totalorder %s267, 15
          %s271 = scalar_select %p270, %s267, 15
          %s272 = smul.addr %s271, 2
          %s273 = smul.addr %s269, 32
          %s274 = sadd.s32 %s272, %s273
          %s275 = smul.addr %s274, 4
          %s276 = scalar_lea.vmem %s2, %s275
          %s277 = smul.u32 %s26, 16
          %s278 = sadd.s32 %s277, 16
          %p279 = scmp.lt.s32.totalorder %s278, 15
          %s280 = scalar_select %p279, %s278, 15
        $region32: #{tpu_custom_call.1} parent=19 // pred_fallthru
          _
      $region20: #{tpu_custom_call.1} parent=5 // pred_fallthru
        _
      %p281 = scmp.le.s32.totalorder 1, %s18
      %p282 = scmp.lt.s32.totalorder %s18, 3
      %p283 = pnand %p281, %p282
      %p284 = pneg %p283
      // Predicated region
      $region33: #{tpu_custom_call.1} parent=5 // pred_check
        _
      $region34: #{tpu_custom_call.1} parent=5 // pred_check_branch
        %286 = sbr.rel (%p283) target = $region36
      $region35: #{tpu_custom_call.1} parent=5 // pred_region
        %s287 = ssub.s32 %s18, 1
        %s288 = smul.u32 16, %s28
        %p289 = scmp.lt.s32.totalorder %s27, 1
        %s290 = scalar_select %p289, %s27, 1
        %p291 = scmp.lt.s32.totalorder %s288, 15
        %s292 = scalar_select %p291, %s288, 15
        %s293 = smul.addr %s292, 2
        %s294 = smul.addr %s290, 32
        %s295 = sadd.s32 %s293, %s294
        %s296 = smul.addr %s295, 4
        %s297 = scalar_lea.vmem %s0, %s296
        %p298 = pneg %p58
        %p299 = pneg %p55
        %s300 = smul.u32 %s28, 16
        %s301 = ssub.s32 %s300, 1
        %p302 = scmp.gt.s32.totalorder %s301, 0
        %s303 = scalar_select %p302, %s301, 0
        %p304 = scmp.lt.s32.totalorder %s27, 1
        %s305 = scalar_select %p304, %s27, 1
        %p306 = scmp.lt.s32.totalorder %s303, 15
        %s307 = scalar_select %p306, %s303, 15
        %s308 = smul.addr %s307, 2
        %s309 = smul.addr %s305, 32
        %s310 = sadd.s32 %s308, %s309
        %s311 = smul.addr %s310, 4
        %s312 = scalar_lea.vmem %s1, %s311
        %p313 = pneg %p94
        %p314 = pneg %p91
        %s315 = smul.u32 %s28, 16
        %s316 = sadd.s32 %s315, 16
        %p317 = scmp.lt.s32.totalorder %s316, 15
        %s318 = scalar_select %p317, %s316, 15
        %p319 = scmp.lt.s32.totalorder %s27, 1
        %s320 = scalar_select %p319, %s27, 1
        %p321 = scmp.lt.s32.totalorder %s318, 15
        %s322 = scalar_select %p321, %s318, 15
        %s323 = smul.addr %s322, 2
        %s324 = smul.addr %s320, 32
        %s325 = sadd.s32 %s323, %s324
        %s326 = smul.addr %s325, 4
        %s327 = scalar_lea.vmem %s2, %s326
        %p328 = pneg %p130
        %p329 = pneg %p127
        %p330 = pneg %p151
        %p331 = pneg %p148
        %p332 = pneg %p179
        %p333 = pneg %p176
        %s334 = sand.u32 %s166, 1
        %s335 = scalar_lea.sflag [#allocation4], %s334
        %s336 = sand.u32 %s166, 1
        %s337 = smul.addr %s336, 128
        %s338 = scalar_lea.vmem [#allocation3], %s337
        %p339 = pneg %p205
        %p340 = pneg %p202
        %s341 = sand.u32 %s192, 1
        %s342 = scalar_lea.sflag [#allocation6], %s341
        %s343 = sand.u32 %s192, 1
        %s344 = smul.addr %s343, 2
        %s345 = scalar_lea.vmem [#allocation5], %s344
        %s346 = smul.u32 16, %s28
        %p347 = scmp.lt.s32.totalorder %s27, 1
        %s348 = scalar_select %p347, %s27, 1
        %p349 = scmp.lt.s32.totalorder %s346, 15
        %s350 = scalar_select %p349, %s346, 15
        %s351 = smul.addr %s350, 2
        %s352 = smul.addr %s348, 32
        %s353 = sadd.s32 %s351, %s352
        %s354 = smul.addr %s353, 4
        %s355 = scalar_lea.vmem %s0, %s354
        %s356 = smul.u32 16, %s28
        %s357 = smul.u32 %s28, 16
        %s358 = ssub.s32 %s357, 1
        %p359 = scmp.gt.s32.totalorder %s358, 0
        %s360 = scalar_select %p359, %s358, 0
        %p361 = scmp.lt.s32.totalorder %s27, 1
        %s362 = scalar_select %p361, %s27, 1
        %p363 = scmp.lt.s32.totalorder %s360, 15
        %s364 = scalar_select %p363, %s360, 15
        %s365 = smul.addr %s364, 2
        %s366 = smul.addr %s362, 32
        %s367 = sadd.s32 %s365, %s366
        %s368 = smul.addr %s367, 4
        %s369 = scalar_lea.vmem %s1, %s368
        %s370 = smul.u32 %s28, 16
        %s371 = ssub.s32 %s370, 1
        %p372 = scmp.gt.s32.totalorder %s371, 0
        %s373 = scalar_select %p372, %s371, 0
        %s374 = smul.u32 %s28, 16
        %s375 = sadd.s32 %s374, 16
        %p376 = scmp.lt.s32.totalorder %s375, 15
        %s377 = scalar_select %p376, %s375, 15
        %p378 = scmp.lt.s32.totalorder %s27, 1
        %s379 = scalar_select %p378, %s27, 1
        %p380 = scmp.lt.s32.totalorder %s377, 15
        %s381 = scalar_select %p380, %s377, 15
        %s382 = smul.addr %s381, 2
        %s383 = smul.addr %s379, 32
        %s384 = sadd.s32 %s382, %s383
        %s385 = smul.addr %s384, 4
        %s386 = scalar_lea.vmem %s2, %s385
        %s387 = smul.u32 %s28, 16
        %s388 = sadd.s32 %s387, 16
        %p389 = scmp.lt.s32.totalorder %s388, 15
        %s390 = scalar_select %p389, %s388, 15
        %s391 = smul.u32 16, %s28
        %p393 = scmp.eq.s32.totalorder %s28, 0
        // Predicated region
        $region37: #{tpu_custom_call.1} parent=35 // pred_check
          %p394 = pneg %p393
        $region38: #{tpu_custom_call.1} parent=35 // pred_check_branch
          %396 = sbr.rel (%p394) target = $region40
        $region39: #{tpu_custom_call.1} parent=35 // pred_region
          %vm397 = vcmask 57344
          %vm398 = vsmask.f32 256
          %vm399 = vmand %vm397, %vm398
          %v400 = vld [vmem:[#allocation2] sm:$0x1]
          %v401 = vsel %vm399, 0, %v400
          %402 = vst [vmem:[#allocation2] sm:$0x1] %v401
          %v403 = vld [vmem:[#allocation2 + $0xc] sm:$0x1]
          %v404 = vsel %vm399, 0, %v403
          %405 = vst [vmem:[#allocation2 + $0xc] sm:$0x1] %v404
          %v406 = vld [vmem:[#allocation2 + $0x18] sm:$0x1]
          %v407 = vsel %vm399, 0, %v406
          %408 = vst [vmem:[#allocation2 + $0x18] sm:$0x1] %v407
          %v409 = vld [vmem:[#allocation2 + $0x24] sm:$0x1]
          %v410 = vsel %vm399, 0, %v409
          %411 = vst [vmem:[#allocation2 + $0x24] sm:$0x1] %v410
          %v412 = vld [vmem:[#allocation2 + $0x30] sm:$0x1]
          %v413 = vsel %vm399, 0, %v412
          %414 = vst [vmem:[#allocation2 + $0x30] sm:$0x1] %v413
          %v415 = vld [vmem:[#allocation2 + $0x3c] sm:$0x1]
          %v416 = vsel %vm399, 0, %v415
          %417 = vst [vmem:[#allocation2 + $0x3c] sm:$0x1] %v416
          %v418 = vld [vmem:[#allocation2 + $0x48] sm:$0x1]
          %v419 = vsel %vm399, 0, %v418
          %420 = vst [vmem:[#allocation2 + $0x48] sm:$0x1] %v419
          %v421 = vld [vmem:[#allocation2 + $0x54] sm:$0x1]
          %v422 = vsel %vm399, 0, %v421
          %423 = vst [vmem:[#allocation2 + $0x54] sm:$0x1] %v422
          %v424 = vld [vmem:[#allocation2 + $0x60] sm:$0x1]
          %v425 = vsel %vm399, 0, %v424
          %426 = vst [vmem:[#allocation2 + $0x60] sm:$0x1] %v425
          %v427 = vld [vmem:[#allocation2 + $0x6c] sm:$0x1]
          %v428 = vsel %vm399, 0, %v427
          %429 = vst [vmem:[#allocation2 + $0x6c] sm:$0x1] %v428
          %v430 = vld [vmem:[#allocation2 + $0x78] sm:$0x1]
          %v431 = vsel %vm399, 0, %v430
          %432 = vst [vmem:[#allocation2 + $0x78] sm:$0x1] %v431
          %v433 = vld [vmem:[#allocation2 + $0x84] sm:$0x1]
          %v434 = vsel %vm399, 0, %v433
          %435 = vst [vmem:[#allocation2 + $0x84] sm:$0x1] %v434
          %v436 = vld [vmem:[#allocation2 + $0x90] sm:$0x1]
          %v437 = vsel %vm399, 0, %v436
          %438 = vst [vmem:[#allocation2 + $0x90] sm:$0x1] %v437
          %v439 = vld [vmem:[#allocation2 + $0x9c] sm:$0x1]
          %v440 = vsel %vm399, 0, %v439
          %441 = vst [vmem:[#allocation2 + $0x9c] sm:$0x1] %v440
          %v442 = vld [vmem:[#allocation2 + $0xa8] sm:$0x1]
          %v443 = vsel %vm399, 0, %v442
          %444 = vst [vmem:[#allocation2 + $0xa8] sm:$0x1] %v443
          %v445 = vld [vmem:[#allocation2 + $0xb4] sm:$0x1]
          %v446 = vsel %vm399, 0, %v445
          %447 = vst [vmem:[#allocation2 + $0xb4] sm:$0x1] %v446
          %v448 = vld [vmem:[#allocation2 + $0xc0] sm:$0x1]
          %v449 = vsel %vm399, 0, %v448
          %450 = vst [vmem:[#allocation2 + $0xc0] sm:$0x1] %v449
          %v451 = vld [vmem:[#allocation2 + $0xcc] sm:$0x1]
          %v452 = vsel %vm399, 0, %v451
          %453 = vst [vmem:[#allocation2 + $0xcc] sm:$0x1] %v452
          %vm454 = vsmask.f32 7938
          %vm455 = vmand %vm397, %vm454
          %v456 = vld [vmem:[#allocation2 + $0x8] sm:$0x1]
          %v457 = vsel %vm455, 0, %v456
          %458 = vst [vmem:[#allocation2 + $0x8] sm:$0x1] %v457
          %v459 = vld [vmem:[#allocation2 + $0x14] sm:$0x1]
          %v460 = vsel %vm455, 0, %v459
          %461 = vst [vmem:[#allocation2 + $0x14] sm:$0x1] %v460
          %v462 = vld [vmem:[#allocation2 + $0x20] sm:$0x1]
          %v463 = vsel %vm455, 0, %v462
          %464 = vst [vmem:[#allocation2 + $0x20] sm:$0x1] %v463
          %v465 = vld [vmem:[#allocation2 + $0x2c] sm:$0x1]
          %v466 = vsel %vm455, 0, %v465
          %467 = vst [vmem:[#allocation2 + $0x2c] sm:$0x1] %v466
          %v468 = vld [vmem:[#allocation2 + $0x38] sm:$0x1]
          %v469 = vsel %vm455, 0, %v468
          %470 = vst [vmem:[#allocation2 + $0x38] sm:$0x1] %v469
          %v471 = vld [vmem:[#allocation2 + $0x44] sm:$0x1]
          %v472 = vsel %vm455, 0, %v471
          %473 = vst [vmem:[#allocation2 + $0x44] sm:$0x1] %v472
          %v474 = vld [vmem:[#allocation2 + $0x50] sm:$0x1]
          %v475 = vsel %vm455, 0, %v474
          %476 = vst [vmem:[#allocation2 + $0x50] sm:$0x1] %v475
          %v477 = vld [vmem:[#allocation2 + $0x5c] sm:$0x1]
          %v478 = vsel %vm455, 0, %v477
          %479 = vst [vmem:[#allocation2 + $0x5c] sm:$0x1] %v478
          %v480 = vld [vmem:[#allocation2 + $0x68] sm:$0x1]
          %v481 = vsel %vm455, 0, %v480
          %482 = vst [vmem:[#allocation2 + $0x68] sm:$0x1] %v481
          %v483 = vld [vmem:[#allocation2 + $0x74] sm:$0x1]
          %v484 = vsel %vm455, 0, %v483
          %485 = vst [vmem:[#allocation2 + $0x74] sm:$0x1] %v484
          %v486 = vld [vmem:[#allocation2 + $0x80] sm:$0x1]
          %v487 = vsel %vm455, 0, %v486
          %488 = vst [vmem:[#allocation2 + $0x80] sm:$0x1] %v487
          %v489 = vld [vmem:[#allocation2 + $0x8c] sm:$0x1]
          %v490 = vsel %vm455, 0, %v489
          %491 = vst [vmem:[#allocation2 + $0x8c] sm:$0x1] %v490
          %v492 = vld [vmem:[#allocation2 + $0x98] sm:$0x1]
          %v493 = vsel %vm455, 0, %v492
          %494 = vst [vmem:[#allocation2 + $0x98] sm:$0x1] %v493
          %v495 = vld [vmem:[#allocation2 + $0xa4] sm:$0x1]
          %v496 = vsel %vm455, 0, %v495
          %497 = vst [vmem:[#allocation2 + $0xa4] sm:$0x1] %v496
          %v498 = vld [vmem:[#allocation2 + $0xb0] sm:$0x1]
          %v499 = vsel %vm455, 0, %v498
          %500 = vst [vmem:[#allocation2 + $0xb0] sm:$0x1] %v499
          %v501 = vld [vmem:[#allocation2 + $0xbc] sm:$0x1]
          %v502 = vsel %vm455, 0, %v501
          %503 = vst [vmem:[#allocation2 + $0xbc] sm:$0x1] %v502
          %v504 = vld [vmem:[#allocation2 + $0xc8] sm:$0x1]
          %v505 = vsel %vm455, 0, %v504
          %506 = vst [vmem:[#allocation2 + $0xc8] sm:$0x1] %v505
          %v507 = vld [vmem:[#allocation2 + $0xd4] sm:$0x1]
          %v508 = vsel %vm455, 0, %v507
          %509 = vst [vmem:[#allocation2 + $0xd4] sm:$0x1] %v508
          %vm510 = vcmask 60416
          %vm511 = vmand %vm510, %vm454
          %v512 = vld [vmem:[#allocation2] sm:$0xf]
          %v513 = vsel %vm511, 0, %v512
          %514 = vst [vmem:[#allocation2] sm:$0xf] %v513
          %vm515 = vcmask 60416
          %516 = vst.msk [vmem:[#allocation2 + $0x4] sm:$0xf] %vm515, 0
          %v517 = vld [vmem:[#allocation2 + $0x8] sm:$0x1]
          %v518 = vsel %vm399, 0, %v517
          %519 = vst [vmem:[#allocation2 + $0x8] sm:$0x1] %v518
        $region40: #{tpu_custom_call.1} parent=35 // pred_fallthru
          _
        %p520 = scmp.gt.s32.totalorder %s28, 0
        // Predicated region
        $region41: #{tpu_custom_call.1} parent=35 // pred_check
          %p521 = pneg %p520
        $region42: #{tpu_custom_call.1} parent=35 // pred_check_branch
          %523 = sbr.rel (%p521) target = $region44
        $region43: #{tpu_custom_call.1} parent=35 // pred_region
          %v524 = vld [vmem:[%s369] sm:$0xf]
          %v525 = vld [vmem:[%s369 + $0x4] sm:$0xf]
          %vm526 = vsmask.f32 256
          %vm527 = vsmask.f32 4368
          %vm528 = vmor %vm526, %vm527
          %v530 = vshrl.u32 %v524, 16
          %v532 = vrot.slane %v530, 7
          %v533 = vshll.u32 %v524, 16
          %v535 = vor.u32 %v532, %v533
          %v536 = vrot.slane %v532, 4
          %v538 = vshrl.u32 %v525, 16
          %v540 = vrot.slane %v538, 7
          %v541 = vshll.u32 %v525, 16
          %v543 = vor.u32 %v540, %v541
          %v544 = vsel %vm528, %v536, %v543
          %v545 = vrot.slane %v540, 4
          %vm549 = vcmask 60416
          %vm550 = vsmask.f32 7938
          %vm551 = vmand %vm549, %vm550
          %v552 = vld [vmem:[#allocation2] sm:$0xf]
          %v553 = vsel %vm551, %v535, %v552
          %554 = vst [vmem:[#allocation2] sm:$0xf] %v553
          %vm555 = vcmask 60416
          %556 = vst.msk [vmem:[#allocation2 + $0x4] sm:$0xf] %vm555, %v544
          %vm557 = vcmask 57344
          %vm558 = vmand %vm557, %vm526
          %v559 = vld [vmem:[#allocation2 + $0x8] sm:$0x1]
          %v560 = vsel %vm558, %v545, %v559
          %561 = vst [vmem:[#allocation2 + $0x8] sm:$0x1] %v560
        $region44: #{tpu_custom_call.1} parent=35 // pred_fallthru
          _
        // Predicated region
        $region45: #{tpu_custom_call.1} parent=35 // pred_check
          %p562 = pneg %p393
        $region46: #{tpu_custom_call.1} parent=35 // pred_check_branch
          %564 = sbr.rel (%p562) target = $region48
        $region47: #{tpu_custom_call.1} parent=35 // pred_region
          %s565 = scalar_lea.vmem [#allocation2], 204
          %vm566 = vcmask 60416
          %vm567 = vsmask.f32 7938
          %vm568 = vmand %vm566, %vm567
          %v569 = vld [vmem:[%s565] sm:$0xf]
          %v570 = vsel %vm568, 0, %v569
          %571 = vst [vmem:[%s565] sm:$0xf] %v570
          %vm572 = vcmask 60416
          %573 = vst.msk [vmem:[%s565 + $0x4] sm:$0xf] %vm572, 0
          %vm574 = vcmask 57344
          %vm575 = vsmask.f32 256
          %vm576 = vmand %vm574, %vm575
          %v577 = vld [vmem:[%s565 + $0x8] sm:$0x1]
          %v578 = vsel %vm576, 0, %v577
          %579 = vst [vmem:[%s565 + $0x8] sm:$0x1] %v578
        $region48: #{tpu_custom_call.1} parent=35 // pred_fallthru
          _
        %p580 = scmp.lt.s32.totalorder %s28, 0
        // Predicated region
        $region49: #{tpu_custom_call.1} parent=35 // pred_check
          %p581 = pneg %p580
        $region50: #{tpu_custom_call.1} parent=35 // pred_check_branch
          %583 = sbr.rel (%p581) target = $region52
        $region51: #{tpu_custom_call.1} parent=35 // pred_region
          %v584 = vld [vmem:[%s386] sm:$0xf]
          %v585 = vld [vmem:[%s386 + $0x4] sm:$0xf]
          %vm586 = vsmask.f32 256
          %vm587 = vsmask.f32 4368
          %vm588 = vmor %vm586, %vm587
          %v590 = vshrl.u32 %v584, 16
          %v592 = vrot.slane %v590, 7
          %v593 = vshll.u32 %v584, 16
          %v595 = vor.u32 %v592, %v593
          %v596 = vrot.slane %v592, 4
          %v598 = vshrl.u32 %v585, 16
          %v600 = vrot.slane %v598, 7
          %v601 = vshll.u32 %v585, 16
          %v603 = vor.u32 %v600, %v601
          %v604 = vsel %vm588, %v596, %v603
          %v605 = vrot.slane %v600, 4
          %s609 = scalar_lea.vmem [#allocation2], 204
          %vm610 = vcmask 60416
          %vm611 = vsmask.f32 7938
          %vm612 = vmand %vm610, %vm611
          %v613 = vld [vmem:[%s609] sm:$0xf]
          %v614 = vsel %vm612, %v595, %v613
          %615 = vst [vmem:[%s609] sm:$0xf] %v614
          %vm616 = vcmask 60416
          %617 = vst.msk [vmem:[%s609 + $0x4] sm:$0xf] %vm616, %v604
          %vm618 = vcmask 57344
          %vm619 = vmand %vm618, %vm586
          %v620 = vld [vmem:[%s609 + $0x8] sm:$0x1]
          %v621 = vsel %vm619, %v605, %v620
          %622 = vst [vmem:[%s609 + $0x8] sm:$0x1] %v621
        $region52: #{tpu_custom_call.1} parent=35 // pred_fallthru
          _
        %v623 = vld [vmem:[%s355] sm:$0xf]
        %v624 = vld [vmem:[%s355 + $0x4] sm:$0xf]
        %v625 = vld [vmem:[%s355 + $0x8] sm:$0xf]
        %v626 = vld [vmem:[%s355 + $0xc] sm:$0xf]
        %v627 = vld [vmem:[%s355 + $0x10] sm:$0xf]
        %v628 = vld [vmem:[%s355 + $0x14] sm:$0xf]
        %v629 = vld [vmem:[%s355 + $0x18] sm:$0xf]
        %v630 = vld [vmem:[%s355 + $0x1c] sm:$0xf]
        %v631 = vld [vmem:[%s355 + $0x20] sm:$0xf]
        %v632 = vld [vmem:[%s355 + $0x24] sm:$0xf]
        %v633 = vld [vmem:[%s355 + $0x28] sm:$0xf]
        %v634 = vld [vmem:[%s355 + $0x2c] sm:$0xf]
        %v635 = vld [vmem:[%s355 + $0x30] sm:$0xf]
        %v636 = vld [vmem:[%s355 + $0x34] sm:$0xf]
        %v637 = vld [vmem:[%s355 + $0x38] sm:$0xf]
        %v638 = vld [vmem:[%s355 + $0x3c] sm:$0xf]
        %v639 = vld [vmem:[%s355 + $0x40] sm:$0xf]
        %v640 = vld [vmem:[%s355 + $0x44] sm:$0xf]
        %v641 = vld [vmem:[%s355 + $0x48] sm:$0xf]
        %v642 = vld [vmem:[%s355 + $0x4c] sm:$0xf]
        %v643 = vld [vmem:[%s355 + $0x50] sm:$0xf]
        %v644 = vld [vmem:[%s355 + $0x54] sm:$0xf]
        %v645 = vld [vmem:[%s355 + $0x58] sm:$0xf]
        %v646 = vld [vmem:[%s355 + $0x5c] sm:$0xf]
        %v647 = vld [vmem:[%s355 + $0x60] sm:$0xf]
        %v648 = vld [vmem:[%s355 + $0x64] sm:$0xf]
        %v649 = vld [vmem:[%s355 + $0x68] sm:$0xf]
        %v650 = vld [vmem:[%s355 + $0x6c] sm:$0xf]
        %v651 = vld [vmem:[%s355 + $0x70] sm:$0xf]
        %v652 = vld [vmem:[%s355 + $0x74] sm:$0xf]
        %v653 = vld [vmem:[%s355 + $0x78] sm:$0xf]
        %v654 = vld [vmem:[%s355 + $0x7c] sm:$0xf]
        %vm655 = vsmask.f32 256
        %vm656 = vsmask.f32 4368
        %vm657 = vmor %vm655, %vm656
        %v659 = vshrl.u32 %v623, 16
        %v661 = vrot.slane %v659, 7
        %v662 = vshll.u32 %v623, 16
        %v664 = vor.u32 %v661, %v662
        %v665 = vrot.slane %v661, 4
        %v667 = vshrl.u32 %v624, 16
        %v669 = vrot.slane %v667, 7
        %v670 = vshll.u32 %v624, 16
        %v672 = vor.u32 %v669, %v670
        %v673 = vsel %vm657, %v665, %v672
        %v674 = vrot.slane %v669, 4
        %v676 = vshrl.u32 %v625, 16
        %v678 = vrot.slane %v676, 7
        %v679 = vshll.u32 %v625, 16
        %v681 = vor.u32 %v678, %v679
        %v682 = vrot.slane %v678, 4
        %v684 = vshrl.u32 %v626, 16
        %v686 = vrot.slane %v684, 7
        %v687 = vshll.u32 %v626, 16
        %v689 = vor.u32 %v686, %v687
        %v690 = vsel %vm657, %v682, %v689
        %v691 = vrot.slane %v686, 4
        %v693 = vshrl.u32 %v627, 16
        %v695 = vrot.slane %v693, 7
        %v696 = vshll.u32 %v627, 16
        %v698 = vor.u32 %v695, %v696
        %v699 = vrot.slane %v695, 4
        %v701 = vshrl.u32 %v628, 16
        %v703 = vrot.slane %v701, 7
        %v704 = vshll.u32 %v628, 16
        %v706 = vor.u32 %v703, %v704
        %v707 = vsel %vm657, %v699, %v706
        %v708 = vrot.slane %v703, 4
        %v710 = vshrl.u32 %v629, 16
        %v712 = vrot.slane %v710, 7
        %v713 = vshll.u32 %v629, 16
        %v715 = vor.u32 %v712, %v713
        %v716 = vrot.slane %v712, 4
        %v718 = vshrl.u32 %v630, 16
        %v720 = vrot.slane %v718, 7
        %v721 = vshll.u32 %v630, 16
        %v723 = vor.u32 %v720, %v721
        %v724 = vsel %vm657, %v716, %v723
        %v725 = vrot.slane %v720, 4
        %v727 = vshrl.u32 %v631, 16
        %v729 = vrot.slane %v727, 7
        %v730 = vshll.u32 %v631, 16
        %v732 = vor.u32 %v729, %v730
        %v733 = vrot.slane %v729, 4
        %v735 = vshrl.u32 %v632, 16
        %v737 = vrot.slane %v735, 7
        %v738 = vshll.u32 %v632, 16
        %v740 = vor.u32 %v737, %v738
        %v741 = vsel %vm657, %v733, %v740
        %v742 = vrot.slane %v737, 4
        %v744 = vshrl.u32 %v633, 16
        %v746 = vrot.slane %v744, 7
        %v747 = vshll.u32 %v633, 16
        %v749 = vor.u32 %v746, %v747
        %v750 = vrot.slane %v746, 4
        %v752 = vshrl.u32 %v634, 16
        %v754 = vrot.slane %v752, 7
        %v755 = vshll.u32 %v634, 16
        %v757 = vor.u32 %v754, %v755
        %v758 = vsel %vm657, %v750, %v757
        %v759 = vrot.slane %v754, 4
        %v761 = vshrl.u32 %v635, 16
        %v763 = vrot.slane %v761, 7
        %v764 = vshll.u32 %v635, 16
        %v766 = vor.u32 %v763, %v764
        %v767 = vrot.slane %v763, 4
        %v769 = vshrl.u32 %v636, 16
        %v771 = vrot.slane %v769, 7
        %v772 = vshll.u32 %v636, 16
        %v774 = vor.u32 %v771, %v772
        %v775 = vsel %vm657, %v767, %v774
        %v776 = vrot.slane %v771, 4
        %v778 = vshrl.u32 %v637, 16
        %v780 = vrot.slane %v778, 7
        %v781 = vshll.u32 %v637, 16
        %v783 = vor.u32 %v780, %v781
        %v784 = vrot.slane %v780, 4
        %v786 = vshrl.u32 %v638, 16
        %v788 = vrot.slane %v786, 7
        %v789 = vshll.u32 %v638, 16
        %v791 = vor.u32 %v788, %v789
        %v792 = vsel %vm657, %v784, %v791
        %v793 = vrot.slane %v788, 4
        %v795 = vshrl.u32 %v639, 16
        %v797 = vrot.slane %v795, 7
        %v798 = vshll.u32 %v639, 16
        %v800 = vor.u32 %v797, %v798
        %v801 = vrot.slane %v797, 4
        %v803 = vshrl.u32 %v640, 16
        %v805 = vrot.slane %v803, 7
        %v806 = vshll.u32 %v640, 16
        %v808 = vor.u32 %v805, %v806
        %v809 = vsel %vm657, %v801, %v808
        %v810 = vrot.slane %v805, 4
        %v812 = vshrl.u32 %v641, 16
        %v814 = vrot.slane %v812, 7
        %v815 = vshll.u32 %v641, 16
        %v817 = vor.u32 %v814, %v815
        %v818 = vrot.slane %v814, 4
        %v820 = vshrl.u32 %v642, 16
        %v822 = vrot.slane %v820, 7
        %v823 = vshll.u32 %v642, 16
        %v825 = vor.u32 %v822, %v823
        %v826 = vsel %vm657, %v818, %v825
        %v827 = vrot.slane %v822, 4
        %v829 = vshrl.u32 %v643, 16
        %v831 = vrot.slane %v829, 7
        %v832 = vshll.u32 %v643, 16
        %v834 = vor.u32 %v831, %v832
        %v835 = vrot.slane %v831, 4
        %v837 = vshrl.u32 %v644, 16
        %v839 = vrot.slane %v837, 7
        %v840 = vshll.u32 %v644, 16
        %v842 = vor.u32 %v839, %v840
        %v843 = vsel %vm657, %v835, %v842
        %v844 = vrot.slane %v839, 4
        %v846 = vshrl.u32 %v645, 16
        %v848 = vrot.slane %v846, 7
        %v849 = vshll.u32 %v645, 16
        %v851 = vor.u32 %v848, %v849
        %v852 = vrot.slane %v848, 4
        %v854 = vshrl.u32 %v646, 16
        %v856 = vrot.slane %v854, 7
        %v857 = vshll.u32 %v646, 16
        %v859 = vor.u32 %v856, %v857
        %v860 = vsel %vm657, %v852, %v859
        %v861 = vrot.slane %v856, 4
        %v863 = vshrl.u32 %v647, 16
        %v865 = vrot.slane %v863, 7
        %v866 = vshll.u32 %v647, 16
        %v868 = vor.u32 %v865, %v866
        %v869 = vrot.slane %v865, 4
        %v871 = vshrl.u32 %v648, 16
        %v873 = vrot.slane %v871, 7
        %v874 = vshll.u32 %v648, 16
        %v876 = vor.u32 %v873, %v874
        %v877 = vsel %vm657, %v869, %v876
        %v878 = vrot.slane %v873, 4
        %v880 = vshrl.u32 %v649, 16
        %v882 = vrot.slane %v880, 7
        %v883 = vshll.u32 %v649, 16
        %v885 = vor.u32 %v882, %v883
        %v886 = vrot.slane %v882, 4
        %v888 = vshrl.u32 %v650, 16
        %v890 = vrot.slane %v888, 7
        %v891 = vshll.u32 %v650, 16
        %v893 = vor.u32 %v890, %v891
        %v894 = vsel %vm657, %v886, %v893
        %v895 = vrot.slane %v890, 4
        %v897 = vshrl.u32 %v651, 16
        %v899 = vrot.slane %v897, 7
        %v900 = vshll.u32 %v651, 16
        %v902 = vor.u32 %v899, %v900
        %v903 = vrot.slane %v899, 4
        %v905 = vshrl.u32 %v652, 16
        %v907 = vrot.slane %v905, 7
        %v908 = vshll.u32 %v652, 16
        %v910 = vor.u32 %v907, %v908
        %v911 = vsel %vm657, %v903, %v910
        %v912 = vrot.slane %v907, 4
        %v914 = vshrl.u32 %v653, 16
        %v916 = vrot.slane %v914, 7
        %v917 = vshll.u32 %v653, 16
        %v919 = vor.u32 %v916, %v917
        %v920 = vrot.slane %v916, 4
        %v922 = vshrl.u32 %v654, 16
        %v924 = vrot.slane %v922, 7
        %v925 = vshll.u32 %v654, 16
        %v927 = vor.u32 %v924, %v925
        %v928 = vsel %vm657, %v920, %v927
        %v929 = vrot.slane %v924, 4
        %s978 = scalar_lea.vmem [#allocation2], 12
        %vm979 = vcmask 60416
        %vm980 = vsmask.f32 7938
        %vm981 = vmand %vm979, %vm980
        %v982 = vld [vmem:[%s978] sm:$0xf]
        %v983 = vsel %vm981, %v664, %v982
        %984 = vst [vmem:[%s978] sm:$0xf] %v983
        %vm985 = vcmask 60416
        %986 = vst.msk [vmem:[%s978 + $0x4] sm:$0xf] %vm985, %v673
        %vm987 = vcmask 57344
        %vm988 = vmand %vm987, %vm655
        %v989 = vld [vmem:[%s978 + $0x8] sm:$0x1]
        %v990 = vsel %vm988, %v674, %v989
        %991 = vst [vmem:[%s978 + $0x8] sm:$0x1] %v990
        %v992 = vld [vmem:[%s978 + $0xc] sm:$0xf]
        %v993 = vsel %vm981, %v681, %v992
        %994 = vst [vmem:[%s978 + $0xc] sm:$0xf] %v993
        %995 = vst.msk [vmem:[%s978 + $0x10] sm:$0xf] %vm985, %v690
        %v996 = vld [vmem:[%s978 + $0x14] sm:$0x1]
        %v997 = vsel %vm988, %v691, %v996
        %998 = vst [vmem:[%s978 + $0x14] sm:$0x1] %v997
        %v999 = vld [vmem:[%s978 + $0x18] sm:$0xf]
        %v1000 = vsel %vm981, %v698, %v999
        %1001 = vst [vmem:[%s978 + $0x18] sm:$0xf] %v1000
        %1002 = vst.msk [vmem:[%s978 + $0x1c] sm:$0xf] %vm985, %v707
        %v1003 = vld [vmem:[%s978 + $0x20] sm:$0x1]
        %v1004 = vsel %vm988, %v708, %v1003
        %1005 = vst [vmem:[%s978 + $0x20] sm:$0x1] %v1004
        %v1006 = vld [vmem:[%s978 + $0x24] sm:$0xf]
        %v1007 = vsel %vm981, %v715, %v1006
        %1008 = vst [vmem:[%s978 + $0x24] sm:$0xf] %v1007
        %1009 = vst.msk [vmem:[%s978 + $0x28] sm:$0xf] %vm985, %v724
        %v1010 = vld [vmem:[%s978 + $0x2c] sm:$0x1]
        %v1011 = vsel %vm988, %v725, %v1010
        %1012 = vst [vmem:[%s978 + $0x2c] sm:$0x1] %v1011
        %v1013 = vld [vmem:[%s978 + $0x30] sm:$0xf]
        %v1014 = vsel %vm981, %v732, %v1013
        %1015 = vst [vmem:[%s978 + $0x30] sm:$0xf] %v1014
        %1016 = vst.msk [vmem:[%s978 + $0x34] sm:$0xf] %vm985, %v741
        %v1017 = vld [vmem:[%s978 + $0x38] sm:$0x1]
        %v1018 = vsel %vm988, %v742, %v1017
        %1019 = vst [vmem:[%s978 + $0x38] sm:$0x1] %v1018
        %v1020 = vld [vmem:[%s978 + $0x3c] sm:$0xf]
        %v1021 = vsel %vm981, %v749, %v1020
        %1022 = vst [vmem:[%s978 + $0x3c] sm:$0xf] %v1021
        %1023 = vst.msk [vmem:[%s978 + $0x40] sm:$0xf] %vm985, %v758
        %v1024 = vld [vmem:[%s978 + $0x44] sm:$0x1]
        %v1025 = vsel %vm988, %v759, %v1024
        %1026 = vst [vmem:[%s978 + $0x44] sm:$0x1] %v1025
        %v1027 = vld [vmem:[%s978 + $0x48] sm:$0xf]
        %v1028 = vsel %vm981, %v766, %v1027
        %1029 = vst [vmem:[%s978 + $0x48] sm:$0xf] %v1028
        %1030 = vst.msk [vmem:[%s978 + $0x4c] sm:$0xf] %vm985, %v775
        %v1031 = vld [vmem:[%s978 + $0x50] sm:$0x1]
        %v1032 = vsel %vm988, %v776, %v1031
        %1033 = vst [vmem:[%s978 + $0x50] sm:$0x1] %v1032
        %v1034 = vld [vmem:[%s978 + $0x54] sm:$0xf]
        %v1035 = vsel %vm981, %v783, %v1034
        %1036 = vst [vmem:[%s978 + $0x54] sm:$0xf] %v1035
        %1037 = vst.msk [vmem:[%s978 + $0x58] sm:$0xf] %vm985, %v792
        %v1038 = vld [vmem:[%s978 + $0x5c] sm:$0x1]
        %v1039 = vsel %vm988, %v793, %v1038
        %1040 = vst [vmem:[%s978 + $0x5c] sm:$0x1] %v1039
        %v1041 = vld [vmem:[%s978 + $0x60] sm:$0xf]
        %v1042 = vsel %vm981, %v800, %v1041
        %1043 = vst [vmem:[%s978 + $0x60] sm:$0xf] %v1042
        %1044 = vst.msk [vmem:[%s978 + $0x64] sm:$0xf] %vm985, %v809
        %v1045 = vld [vmem:[%s978 + $0x68] sm:$0x1]
        %v1046 = vsel %vm988, %v810, %v1045
        %1047 = vst [vmem:[%s978 + $0x68] sm:$0x1] %v1046
        %v1048 = vld [vmem:[%s978 + $0x6c] sm:$0xf]
        %v1049 = vsel %vm981, %v817, %v1048
        %1050 = vst [vmem:[%s978 + $0x6c] sm:$0xf] %v1049
        %1051 = vst.msk [vmem:[%s978 + $0x70] sm:$0xf] %vm985, %v826
        %v1052 = vld [vmem:[%s978 + $0x74] sm:$0x1]
        %v1053 = vsel %vm988, %v827, %v1052
        %1054 = vst [vmem:[%s978 + $0x74] sm:$0x1] %v1053
        %v1055 = vld [vmem:[%s978 + $0x78] sm:$0xf]
        %v1056 = vsel %vm981, %v834, %v1055
        %1057 = vst [vmem:[%s978 + $0x78] sm:$0xf] %v1056
        %1058 = vst.msk [vmem:[%s978 + $0x7c] sm:$0xf] %vm985, %v843
        %v1059 = vld [vmem:[%s978 + $0x80] sm:$0x1]
        %v1060 = vsel %vm988, %v844, %v1059
        %1061 = vst [vmem:[%s978 + $0x80] sm:$0x1] %v1060
        %v1062 = vld [vmem:[%s978 + $0x84] sm:$0xf]
        %v1063 = vsel %vm981, %v851, %v1062
        %1064 = vst [vmem:[%s978 + $0x84] sm:$0xf] %v1063
        %1065 = vst.msk [vmem:[%s978 + $0x88] sm:$0xf] %vm985, %v860
        %v1066 = vld [vmem:[%s978 + $0x8c] sm:$0x1]
        %v1067 = vsel %vm988, %v861, %v1066
        %1068 = vst [vmem:[%s978 + $0x8c] sm:$0x1] %v1067
        %v1069 = vld [vmem:[%s978 + $0x90] sm:$0xf]
        %v1070 = vsel %vm981, %v868, %v1069
        %1071 = vst [vmem:[%s978 + $0x90] sm:$0xf] %v1070
        %1072 = vst.msk [vmem:[%s978 + $0x94] sm:$0xf] %vm985, %v877
        %v1073 = vld [vmem:[%s978 + $0x98] sm:$0x1]
        %v1074 = vsel %vm988, %v878, %v1073
        %1075 = vst [vmem:[%s978 + $0x98] sm:$0x1] %v1074
        %v1076 = vld [vmem:[%s978 + $0x9c] sm:$0xf]
        %v1077 = vsel %vm981, %v885, %v1076
        %1078 = vst [vmem:[%s978 + $0x9c] sm:$0xf] %v1077
        %1079 = vst.msk [vmem:[%s978 + $0xa0] sm:$0xf] %vm985, %v894
        %v1080 = vld [vmem:[%s978 + $0xa4] sm:$0x1]
        %v1081 = vsel %vm988, %v895, %v1080
        %1082 = vst [vmem:[%s978 + $0xa4] sm:$0x1] %v1081
        %v1083 = vld [vmem:[%s978 + $0xa8] sm:$0xf]
        %v1084 = vsel %vm981, %v902, %v1083
        %1085 = vst [vmem:[%s978 + $0xa8] sm:$0xf] %v1084
        %1086 = vst.msk [vmem:[%s978 + $0xac] sm:$0xf] %vm985, %v911
        %v1087 = vld [vmem:[%s978 + $0xb0] sm:$0x1]
        %v1088 = vsel %vm988, %v912, %v1087
        %1089 = vst [vmem:[%s978 + $0xb0] sm:$0x1] %v1088
        %v1090 = vld [vmem:[%s978 + $0xb4] sm:$0xf]
        %v1091 = vsel %vm981, %v919, %v1090
        %1092 = vst [vmem:[%s978 + $0xb4] sm:$0xf] %v1091
        %1093 = vst.msk [vmem:[%s978 + $0xb8] sm:$0xf] %vm985, %v928
        %v1094 = vld [vmem:[%s978 + $0xbc] sm:$0x1]
        %v1095 = vsel %vm988, %v929, %v1094
        %1096 = vst [vmem:[%s978 + $0xbc] sm:$0x1] %v1095
        %v1097 = vld [vmem:[#allocation2] sm:$0xf]
        %v1098 = vld [vmem:[#allocation2 + $0x4] sm:$0xf]
        %v1099 = vld [vmem:[#allocation2 + $0xc] sm:$0xf]
        %v1100 = vld [vmem:[#allocation2 + $0x10] sm:$0xf]
        %v1101 = vld [vmem:[#allocation2 + $0x18] sm:$0xf]
        %v1102 = vld [vmem:[#allocation2 + $0x1c] sm:$0xf]
        %v1103 = vld [vmem:[#allocation2 + $0x24] sm:$0xf]
        %v1104 = vld [vmem:[#allocation2 + $0x28] sm:$0xf]
        %v1105 = vld [vmem:[#allocation2 + $0x30] sm:$0xf]
        %v1106 = vld [vmem:[#allocation2 + $0x34] sm:$0xf]
        %v1107 = vld [vmem:[#allocation2 + $0x3c] sm:$0xf]
        %v1108 = vld [vmem:[#allocation2 + $0x40] sm:$0xf]
        %v1109 = vld [vmem:[#allocation2 + $0x48] sm:$0xf]
        %v1110 = vld [vmem:[#allocation2 + $0x4c] sm:$0xf]
        %v1111 = vld [vmem:[#allocation2 + $0x54] sm:$0xf]
        %v1112 = vld [vmem:[#allocation2 + $0x58] sm:$0xf]
        %v1113 = vld [vmem:[#allocation2 + $0x60] sm:$0xf]
        %v1114 = vld [vmem:[#allocation2 + $0x64] sm:$0xf]
        %v1115 = vld [vmem:[#allocation2 + $0x6c] sm:$0xf]
        %v1116 = vld [vmem:[#allocation2 + $0x70] sm:$0xf]
        %v1117 = vld [vmem:[#allocation2 + $0x78] sm:$0xf]
        %v1118 = vld [vmem:[#allocation2 + $0x7c] sm:$0xf]
        %v1119 = vld [vmem:[#allocation2 + $0x84] sm:$0xf]
        %v1120 = vld [vmem:[#allocation2 + $0x88] sm:$0xf]
        %v1121 = vld [vmem:[#allocation2 + $0x90] sm:$0xf]
        %v1122 = vld [vmem:[#allocation2 + $0x94] sm:$0xf]
        %v1123 = vld [vmem:[#allocation2 + $0x9c] sm:$0xf]
        %v1124 = vld [vmem:[#allocation2 + $0xa0] sm:$0xf]
        %v1125 = vld [vmem:[#allocation2 + $0xa8] sm:$0xf]
        %v1126 = vld [vmem:[#allocation2 + $0xac] sm:$0xf]
        %v1127 = vld [vmem:[#allocation2 + $0xb4] sm:$0xf]
        %v1128 = vld [vmem:[#allocation2 + $0xb8] sm:$0xf]
        %v1129 = vld [vmem:[%s3] sm:$0xf]
        %v1130 = vld [vmem:[#allocation2 + $0x8] sm:$0x1]
        %v1131 = vld [vmem:[#allocation2 + $0x14] sm:$0x1]
        %v1132 = vld [vmem:[#allocation2 + $0x20] sm:$0x1]
        %v1133 = vld [vmem:[#allocation2 + $0x2c] sm:$0x1]
        %v1134 = vld [vmem:[#allocation2 + $0x38] sm:$0x1]
        %v1135 = vld [vmem:[#allocation2 + $0x44] sm:$0x1]
        %v1136 = vld [vmem:[#allocation2 + $0x50] sm:$0x1]
        %v1137 = vld [vmem:[#allocation2 + $0x5c] sm:$0x1]
        %v1138 = vld [vmem:[#allocation2 + $0x68] sm:$0x1]
        %v1139 = vld [vmem:[#allocation2 + $0x74] sm:$0x1]
        %v1140 = vld [vmem:[#allocation2 + $0x80] sm:$0x1]
        %v1141 = vld [vmem:[#allocation2 + $0x8c] sm:$0x1]
        %v1142 = vld [vmem:[#allocation2 + $0x98] sm:$0x1]
        %v1143 = vld [vmem:[#allocation2 + $0xa4] sm:$0x1]
        %v1144 = vld [vmem:[#allocation2 + $0xb0] sm:$0x1]
        %v1145 = vld [vmem:[#allocation2 + $0xbc] sm:$0x1]
        %vm1146 = vsmask.f32 3328
        %vm1147 = vsmask.f32 7440
        %vm1148 = vmor %vm1146, %vm1147
        %v1150 = vshrl.u32 %v1097, 16
        %v1152 = vrot.slane %v1150, 4
        %v1153 = vshll.u32 %v1097, 16
        %v1155 = vrot.slane %v1153, 5
        %v1156 = vor.u32 %v1152, %v1155
        %v1157 = vrot.slane %v1156, 4
        %v1159 = vshll.u32 %v1098, 16
        %v1161 = vrot.slane %v1159, 5
        %v1162 = vsel %vm1148, %v1157, %v1161
        %v1163 = vshrl.u32 %v1098, 16
        %v1165 = vrot.slane %v1163, 4
        %v1166 = vor.u32 %v1165, %v1161
        %v1167 = vrot.slane %v1166, 4
        %v1169 = vshll.u32 %v1130, 16
        %v1171 = vrot.slane %v1169, 5
        %v1172 = vsel %vm1148, %v1167, %v1171
        %v1174 = vshrl.u32 %v1099, 16
        %v1176 = vrot.slane %v1174, 4
        %v1177 = vshll.u32 %v1099, 16
        %v1179 = vrot.slane %v1177, 5
        %v1180 = vor.u32 %v1176, %v1179
        %v1181 = vrot.slane %v1180, 4
        %v1183 = vshll.u32 %v1100, 16
        %v1185 = vrot.slane %v1183, 5
        %v1186 = vsel %vm1148, %v1181, %v1185
        %v1187 = vshrl.u32 %v1100, 16
        %v1189 = vrot.slane %v1187, 4
        %v1190 = vor.u32 %v1189, %v1185
        %v1191 = vrot.slane %v1190, 4
        %v1193 = vshll.u32 %v1131, 16
        %v1195 = vrot.slane %v1193, 5
        %v1196 = vsel %vm1148, %v1191, %v1195
        %v1198 = vshrl.u32 %v1101, 16
        %v1200 = vrot.slane %v1198, 4
        %v1201 = vshll.u32 %v1101, 16
        %v1203 = vrot.slane %v1201, 5
        %v1204 = vor.u32 %v1200, %v1203
        %v1205 = vrot.slane %v1204, 4
        %v1207 = vshll.u32 %v1102, 16
        %v1209 = vrot.slane %v1207, 5
        %v1210 = vsel %vm1148, %v1205, %v1209
        %v1211 = vshrl.u32 %v1102, 16
        %v1213 = vrot.slane %v1211, 4
        %v1214 = vor.u32 %v1213, %v1209
        %v1215 = vrot.slane %v1214, 4
        %v1217 = vshll.u32 %v1132, 16
        %v1219 = vrot.slane %v1217, 5
        %v1220 = vsel %vm1148, %v1215, %v1219
        %v1222 = vshrl.u32 %v1103, 16
        %v1224 = vrot.slane %v1222, 4
        %v1225 = vshll.u32 %v1103, 16
        %v1227 = vrot.slane %v1225, 5
        %v1228 = vor.u32 %v1224, %v1227
        %v1229 = vrot.slane %v1228, 4
        %v1231 = vshll.u32 %v1104, 16
        %v1233 = vrot.slane %v1231, 5
        %v1234 = vsel %vm1148, %v1229, %v1233
        %v1235 = vshrl.u32 %v1104, 16
        %v1237 = vrot.slane %v1235, 4
        %v1238 = vor.u32 %v1237, %v1233
        %v1239 = vrot.slane %v1238, 4
        %v1241 = vshll.u32 %v1133, 16
        %v1243 = vrot.slane %v1241, 5
        %v1244 = vsel %vm1148, %v1239, %v1243
        %v1246 = vshrl.u32 %v1105, 16
        %v1248 = vrot.slane %v1246, 4
        %v1249 = vshll.u32 %v1105, 16
        %v1251 = vrot.slane %v1249, 5
        %v1252 = vor.u32 %v1248, %v1251
        %v1253 = vrot.slane %v1252, 4
        %v1255 = vshll.u32 %v1106, 16
        %v1257 = vrot.slane %v1255, 5
        %v1258 = vsel %vm1148, %v1253, %v1257
        %v1259 = vshrl.u32 %v1106, 16
        %v1261 = vrot.slane %v1259, 4
        %v1262 = vor.u32 %v1261, %v1257
        %v1263 = vrot.slane %v1262, 4
        %v1265 = vshll.u32 %v1134, 16
        %v1267 = vrot.slane %v1265, 5
        %v1268 = vsel %vm1148, %v1263, %v1267
        %v1270 = vshrl.u32 %v1107, 16
        %v1272 = vrot.slane %v1270, 4
        %v1273 = vshll.u32 %v1107, 16
        %v1275 = vrot.slane %v1273, 5
        %v1276 = vor.u32 %v1272, %v1275
        %v1277 = vrot.slane %v1276, 4
        %v1279 = vshll.u32 %v1108, 16
        %v1281 = vrot.slane %v1279, 5
        %v1282 = vsel %vm1148, %v1277, %v1281
        %v1283 = vshrl.u32 %v1108, 16
        %v1285 = vrot.slane %v1283, 4
        %v1286 = vor.u32 %v1285, %v1281
        %v1287 = vrot.slane %v1286, 4
        %v1289 = vshll.u32 %v1135, 16
        %v1291 = vrot.slane %v1289, 5
        %v1292 = vsel %vm1148, %v1287, %v1291
        %v1294 = vshrl.u32 %v1109, 16
        %v1296 = vrot.slane %v1294, 4
        %v1297 = vshll.u32 %v1109, 16
        %v1299 = vrot.slane %v1297, 5
        %v1300 = vor.u32 %v1296, %v1299
        %v1301 = vrot.slane %v1300, 4
        %v1303 = vshll.u32 %v1110, 16
        %v1305 = vrot.slane %v1303, 5
        %v1306 = vsel %vm1148, %v1301, %v1305
        %v1307 = vshrl.u32 %v1110, 16
        %v1309 = vrot.slane %v1307, 4
        %v1310 = vor.u32 %v1309, %v1305
        %v1311 = vrot.slane %v1310, 4
        %v1313 = vshll.u32 %v1136, 16
        %v1315 = vrot.slane %v1313, 5
        %v1316 = vsel %vm1148, %v1311, %v1315
        %v1318 = vshrl.u32 %v1111, 16
        %v1320 = vrot.slane %v1318, 4
        %v1321 = vshll.u32 %v1111, 16
        %v1323 = vrot.slane %v1321, 5
        %v1324 = vor.u32 %v1320, %v1323
        %v1325 = vrot.slane %v1324, 4
        %v1327 = vshll.u32 %v1112, 16
        %v1329 = vrot.slane %v1327, 5
        %v1330 = vsel %vm1148, %v1325, %v1329
        %v1331 = vshrl.u32 %v1112, 16
        %v1333 = vrot.slane %v1331, 4
        %v1334 = vor.u32 %v1333, %v1329
        %v1335 = vrot.slane %v1334, 4
        %v1337 = vshll.u32 %v1137, 16
        %v1339 = vrot.slane %v1337, 5
        %v1340 = vsel %vm1148, %v1335, %v1339
        %v1342 = vshrl.u32 %v1113, 16
        %v1344 = vrot.slane %v1342, 4
        %v1345 = vshll.u32 %v1113, 16
        %v1347 = vrot.slane %v1345, 5
        %v1348 = vor.u32 %v1344, %v1347
        %v1349 = vrot.slane %v1348, 4
        %v1351 = vshll.u32 %v1114, 16
        %v1353 = vrot.slane %v1351, 5
        %v1354 = vsel %vm1148, %v1349, %v1353
        %v1355 = vshrl.u32 %v1114, 16
        %v1357 = vrot.slane %v1355, 4
        %v1358 = vor.u32 %v1357, %v1353
        %v1359 = vrot.slane %v1358, 4
        %v1361 = vshll.u32 %v1138, 16
        %v1363 = vrot.slane %v1361, 5
        %v1364 = vsel %vm1148, %v1359, %v1363
        %v1366 = vshrl.u32 %v1115, 16
        %v1368 = vrot.slane %v1366, 4
        %v1369 = vshll.u32 %v1115, 16
        %v1371 = vrot.slane %v1369, 5
        %v1372 = vor.u32 %v1368, %v1371
        %v1373 = vrot.slane %v1372, 4
        %v1375 = vshll.u32 %v1116, 16
        %v1377 = vrot.slane %v1375, 5
        %v1378 = vsel %vm1148, %v1373, %v1377
        %v1379 = vshrl.u32 %v1116, 16
        %v1381 = vrot.slane %v1379, 4
        %v1382 = vor.u32 %v1381, %v1377
        %v1383 = vrot.slane %v1382, 4
        %v1385 = vshll.u32 %v1139, 16
        %v1387 = vrot.slane %v1385, 5
        %v1388 = vsel %vm1148, %v1383, %v1387
        %v1390 = vshrl.u32 %v1117, 16
        %v1392 = vrot.slane %v1390, 4
        %v1393 = vshll.u32 %v1117, 16
        %v1395 = vrot.slane %v1393, 5
        %v1396 = vor.u32 %v1392, %v1395
        %v1397 = vrot.slane %v1396, 4
        %v1399 = vshll.u32 %v1118, 16
        %v1401 = vrot.slane %v1399, 5
        %v1402 = vsel %vm1148, %v1397, %v1401
        %v1403 = vshrl.u32 %v1118, 16
        %v1405 = vrot.slane %v1403, 4
        %v1406 = vor.u32 %v1405, %v1401
        %v1407 = vrot.slane %v1406, 4
        %v1409 = vshll.u32 %v1140, 16
        %v1411 = vrot.slane %v1409, 5
        %v1412 = vsel %vm1148, %v1407, %v1411
        %v1414 = vshrl.u32 %v1119, 16
        %v1416 = vrot.slane %v1414, 4
        %v1417 = vshll.u32 %v1119, 16
        %v1419 = vrot.slane %v1417, 5
        %v1420 = vor.u32 %v1416, %v1419
        %v1421 = vrot.slane %v1420, 4
        %v1423 = vshll.u32 %v1120, 16
        %v1425 = vrot.slane %v1423, 5
        %v1426 = vsel %vm1148, %v1421, %v1425
        %v1427 = vshrl.u32 %v1120, 16
        %v1429 = vrot.slane %v1427, 4
        %v1430 = vor.u32 %v1429, %v1425
        %v1431 = vrot.slane %v1430, 4
        %v1433 = vshll.u32 %v1141, 16
        %v1435 = vrot.slane %v1433, 5
        %v1436 = vsel %vm1148, %v1431, %v1435
        %v1438 = vshrl.u32 %v1121, 16
        %v1440 = vrot.slane %v1438, 4
        %v1441 = vshll.u32 %v1121, 16
        %v1443 = vrot.slane %v1441, 5
        %v1444 = vor.u32 %v1440, %v1443
        %v1445 = vrot.slane %v1444, 4
        %v1447 = vshll.u32 %v1122, 16
        %v1449 = vrot.slane %v1447, 5
        %v1450 = vsel %vm1148, %v1445, %v1449
        %v1451 = vshrl.u32 %v1122, 16
        %v1453 = vrot.slane %v1451, 4
        %v1454 = vor.u32 %v1453, %v1449
        %v1455 = vrot.slane %v1454, 4
        %v1457 = vshll.u32 %v1142, 16
        %v1459 = vrot.slane %v1457, 5
        %v1460 = vsel %vm1148, %v1455, %v1459
        %v1462 = vshrl.u32 %v1123, 16
        %v1464 = vrot.slane %v1462, 4
        %v1465 = vshll.u32 %v1123, 16
        %v1467 = vrot.slane %v1465, 5
        %v1468 = vor.u32 %v1464, %v1467
        %v1469 = vrot.slane %v1468, 4
        %v1471 = vshll.u32 %v1124, 16
        %v1473 = vrot.slane %v1471, 5
        %v1474 = vsel %vm1148, %v1469, %v1473
        %v1475 = vshrl.u32 %v1124, 16
        %v1477 = vrot.slane %v1475, 4
        %v1478 = vor.u32 %v1477, %v1473
        %v1479 = vrot.slane %v1478, 4
        %v1481 = vshll.u32 %v1143, 16
        %v1483 = vrot.slane %v1481, 5
        %v1484 = vsel %vm1148, %v1479, %v1483
        %v1486 = vshrl.u32 %v1125, 16
        %v1488 = vrot.slane %v1486, 4
        %v1489 = vshll.u32 %v1125, 16
        %v1491 = vrot.slane %v1489, 5
        %v1492 = vor.u32 %v1488, %v1491
        %v1493 = vrot.slane %v1492, 4
        %v1495 = vshll.u32 %v1126, 16
        %v1497 = vrot.slane %v1495, 5
        %v1498 = vsel %vm1148, %v1493, %v1497
        %v1499 = vshrl.u32 %v1126, 16
        %v1501 = vrot.slane %v1499, 4
        %v1502 = vor.u32 %v1501, %v1497
        %v1503 = vrot.slane %v1502, 4
        %v1505 = vshll.u32 %v1144, 16
        %v1507 = vrot.slane %v1505, 5
        %v1508 = vsel %vm1148, %v1503, %v1507
        %v1510 = vshrl.u32 %v1127, 16
        %v1512 = vrot.slane %v1510, 4
        %v1513 = vshll.u32 %v1127, 16
        %v1515 = vrot.slane %v1513, 5
        %v1516 = vor.u32 %v1512, %v1515
        %v1517 = vrot.slane %v1516, 4
        %v1519 = vshll.u32 %v1128, 16
        %v1521 = vrot.slane %v1519, 5
        %v1522 = vsel %vm1148, %v1517, %v1521
        %v1523 = vshrl.u32 %v1128, 16
        %v1525 = vrot.slane %v1523, 4
        %v1526 = vor.u32 %v1525, %v1521
        %v1527 = vrot.slane %v1526, 4
        %v1529 = vshll.u32 %v1145, 16
        %v1531 = vrot.slane %v1529, 5
        %v1532 = vsel %vm1148, %v1527, %v1531
        %s1533 = scalar_lea.vmem %s3, 4
        %v1534 = vld [vmem:[%s1533] sm:$0xf]
        %v1535 = vunpack.c.l.b16 %v1162
        %v1536 = vunpack.c.l.b16 %v1172
        %v1537 = vunpack.c.l.b16 %v1186
        %v1538 = vunpack.c.l.b16 %v1196
        %v1539 = vunpack.c.l.b16 %v1210
        %v1540 = vunpack.c.l.b16 %v1220
        %v1541 = vunpack.c.l.b16 %v1234
        %v1542 = vunpack.c.l.b16 %v1244
        %v1543 = vunpack.c.l.b16 %v1258
        %v1544 = vunpack.c.l.b16 %v1268
        %v1545 = vunpack.c.l.b16 %v1282
        %v1546 = vunpack.c.l.b16 %v1292
        %v1547 = vunpack.c.l.b16 %v1306
        %v1548 = vunpack.c.l.b16 %v1316
        %v1549 = vunpack.c.l.b16 %v1330
        %v1550 = vunpack.c.l.b16 %v1340
        %v1551 = vunpack.c.l.b16 %v1354
        %v1552 = vunpack.c.l.b16 %v1364
        %v1553 = vunpack.c.l.b16 %v1378
        %v1554 = vunpack.c.l.b16 %v1388
        %v1555 = vunpack.c.l.b16 %v1402
        %v1556 = vunpack.c.l.b16 %v1412
        %v1557 = vunpack.c.l.b16 %v1426
        %v1558 = vunpack.c.l.b16 %v1436
        %v1559 = vunpack.c.l.b16 %v1450
        %v1560 = vunpack.c.l.b16 %v1460
        %v1561 = vunpack.c.l.b16 %v1474
        %v1562 = vunpack.c.l.b16 %v1484
        %v1563 = vunpack.c.l.b16 %v1498
        %v1564 = vunpack.c.l.b16 %v1508
        %v1565 = vunpack.c.l.b16 %v1522
        %v1566 = vunpack.c.l.b16 %v1532
        %v1567 = vpack.c.b16 %v1536, %v1535
        %v1568 = vpack.c.b16 %v1538, %v1537
        %v1569 = vpack.c.b16 %v1540, %v1539
        %v1570 = vpack.c.b16 %v1542, %v1541
        %v1571 = vpack.c.b16 %v1544, %v1543
        %v1572 = vpack.c.b16 %v1546, %v1545
        %v1573 = vpack.c.b16 %v1548, %v1547
        %v1574 = vpack.c.b16 %v1550, %v1549
        %v1575 = vpack.c.b16 %v1552, %v1551
        %v1576 = vpack.c.b16 %v1554, %v1553
        %v1577 = vpack.c.b16 %v1556, %v1555
        %v1578 = vpack.c.b16 %v1558, %v1557
        %v1579 = vpack.c.b16 %v1560, %v1559
        %v1580 = vpack.c.b16 %v1562, %v1561
        %v1581 = vpack.c.b16 %v1564, %v1563
        %v1582 = vpack.c.b16 %v1566, %v1565
        %vm1583 = vcmask 64512
        %v1585 = vsel %vm1583, %v1567, 0
        %v1588 = vsel %vm1583, %v1568, 0
        %v1591 = vsel %vm1583, %v1569, 0
        %v1594 = vsel %vm1583, %v1570, 0
        %v1597 = vsel %vm1583, %v1571, 0
        %v1600 = vsel %vm1583, %v1572, 0
        %v1603 = vsel %vm1583, %v1573, 0
        %v1606 = vsel %vm1583, %v1574, 0
        %v1609 = vsel %vm1583, %v1575, 0
        %v1612 = vsel %vm1583, %v1576, 0
        %v1615 = vsel %vm1583, %v1577, 0
        %v1618 = vsel %vm1583, %v1578, 0
        %v1621 = vsel %vm1583, %v1579, 0
        %v1624 = vsel %vm1583, %v1580, 0
        %v1627 = vsel %vm1583, %v1581, 0
        %v1630 = vsel %vm1583, %v1582, 0
        %vm1632 = vcmask 1043456
        %v1634 = vsel %vm1632, %v1534, 0
        %1636 = vmatprep.subr.bf16.mxu0 0
        %1637 = vmatpush1.bf16.msra.mxu0 %v1634
        %1638 = vmatprep.subr.bf16.mxu0 0
        %1639 = vmatpush1.bf16.msra.mxu0 0
        %1640 = vmatprep.subr.bf16.mxu0 0
        %1641 = vmatpush1.bf16.msra.mxu0 0
        %1642 = vmatprep.subr.bf16.mxu0 0
        %1643 = vmatpush1.bf16.msra.mxu0 0
        %1644 = vmatprep.subr.bf16.mxu0 0
        %1645 = vmatpush1.bf16.msra.mxu0 0
        %1646 = vmatprep.subr.bf16.mxu0 0
        %1647 = vmatpush1.bf16.msra.mxu0 0
        %1648 = vmatprep.subr.bf16.mxu0 0
        %1649 = vmatpush1.bf16.msra.mxu0 0
        %1650 = vmatprep.subr.bf16.mxu0 0
        %1651 = vmatpush1.bf16.msra.mxu0 0
        %1652 = vmatprep.subr.bf16.mxu0 0
        %1653 = vmatpush1.bf16.msra.mxu0 0
        %1654 = vmatprep.subr.bf16.mxu0 0
        %1655 = vmatpush1.bf16.msra.mxu0 0
        %1656 = vmatprep.subr.bf16.mxu0 0
        %1657 = vmatpush1.bf16.msra.mxu0 0
        %1658 = vmatprep.subr.bf16.mxu0 0
        %1659 = vmatpush1.bf16.msra.mxu0 0
        %1660 = vmatprep.subr.bf16.mxu0 0
        %1661 = vmatpush1.bf16.msra.mxu0 0
        %1662 = vmatprep.subr.bf16.mxu0 0
        %1663 = vmatpush1.bf16.msra.mxu0 0
        %1664 = vmatprep.subr.bf16.mxu0 0
        %1665 = vmatpush1.bf16.msra.mxu0 0
        %1666 = vmatprep.subr.bf16.mxu0 0
        %1667 = vmatpush1.bf16.msra.mxu0 0
        %1668 = vmatprep.mubr.bf16.mxu0 0
        %1669 = vmatmul.mubr.bf16.gmra.mrb[0].mxu0 %v1585
        %v1670 = vpop.f32.mrb[0].mxu0
        %v1671 = vadd.f32 0.0, %v1670
        %v1672 = vpop.f32.mrb[0].mxu0
        %v1673 = vpop.f32.mrb[0].mxu0
        %v1674 = vadd.f32 0.0, %v1673
        %v1675 = vpop.f32.mrb[0].mxu0
        %1676 = vmatprep.mubr.bf16.mxu0 0
        %1677 = vmatmul.mubr.bf16.gmra.mrb[0].mxu0 %v1588
        %v1678 = vpop.f32.mrb[0].mxu0
        %v1679 = vadd.f32 0.0, %v1678
        %v1680 = vpop.f32.mrb[0].mxu0
        %v1681 = vpop.f32.mrb[0].mxu0
        %v1682 = vadd.f32 0.0, %v1681
        %v1683 = vpop.f32.mrb[0].mxu0
        %1684 = vmatprep.mubr.bf16.mxu0 0
        %1685 = vmatmul.mubr.bf16.gmra.mrb[0].mxu0 %v1591
        %v1686 = vpop.f32.mrb[0].mxu0
        %v1687 = vadd.f32 0.0, %v1686
        %v1688 = vpop.f32.mrb[0].mxu0
        %v1689 = vpop.f32.mrb[0].mxu0
        %v1690 = vadd.f32 0.0, %v1689
        %v1691 = vpop.f32.mrb[0].mxu0
        %1692 = vmatprep.mubr.bf16.mxu0 0
        %1693 = vmatmul.mubr.bf16.gmra.mrb[0].mxu0 %v1594
        %v1694 = vpop.f32.mrb[0].mxu0
        %v1695 = vadd.f32 0.0, %v1694
        %v1696 = vpop.f32.mrb[0].mxu0
        %v1697 = vpop.f32.mrb[0].mxu0
        %v1698 = vadd.f32 0.0, %v1697
        %v1699 = vpop.f32.mrb[0].mxu0
        %1700 = vmatprep.mubr.bf16.mxu0 0
        %1701 = vmatmul.mubr.bf16.gmra.mrb[0].mxu0 %v1597
        %v1702 = vpop.f32.mrb[0].mxu0
        %v1703 = vadd.f32 0.0, %v1702
        %v1704 = vpop.f32.mrb[0].mxu0
        %v1705 = vpop.f32.mrb[0].mxu0
        %v1706 = vadd.f32 0.0, %v1705
        %v1707 = vpop.f32.mrb[0].mxu0
        %1708 = vmatprep.mubr.bf16.mxu0 0
        %1709 = vmatmul.mubr.bf16.gmra.mrb[0].mxu0 %v1600
        %v1710 = vpop.f32.mrb[0].mxu0
        %v1711 = vadd.f32 0.0, %v1710
        %v1712 = vpop.f32.mrb[0].mxu0
        %v1713 = vpop.f32.mrb[0].mxu0
        %v1714 = vadd.f32 0.0, %v1713
        %v1715 = vpop.f32.mrb[0].mxu0
        %1716 = vmatprep.mubr.bf16.mxu0 0
        %1717 = vmatmul.mubr.bf16.gmra.mrb[0].mxu0 %v1603
        %v1718 = vpop.f32.mrb[0].mxu0
        %v1719 = vadd.f32 0.0, %v1718
        %v1720 = vpop.f32.mrb[0].mxu0
        %v1721 = vpop.f32.mrb[0].mxu0
        %v1722 = vadd.f32 0.0, %v1721
        %v1723 = vpop.f32.mrb[0].mxu0
        %1724 = vmatprep.mubr.bf16.mxu0 0
        %1725 = vmatmul.mubr.bf16.gmra.mrb[0].mxu0 %v1606
        %v1726 = vpop.f32.mrb[0].mxu0
        %v1727 = vadd.f32 0.0, %v1726
        %v1728 = vpop.f32.mrb[0].mxu0
        %v1729 = vpop.f32.mrb[0].mxu0
        %v1730 = vadd.f32 0.0, %v1729
        %v1731 = vpop.f32.mrb[0].mxu0
        %1732 = vmatprep.mubr.bf16.mxu0 0
        %1733 = vmatmul.mubr.bf16.gmra.mrb[0].mxu0 %v1609
        %v1734 = vpop.f32.mrb[0].mxu0
        %v1735 = vadd.f32 0.0, %v1734
        %v1736 = vpop.f32.mrb[0].mxu0
        %v1737 = vpop.f32.mrb[0].mxu0
        %v1738 = vadd.f32 0.0, %v1737
        %v1739 = vpop.f32.mrb[0].mxu0
        %1740 = vmatprep.mubr.bf16.mxu0 0
        %1741 = vmatmul.mubr.bf16.gmra.mrb[0].mxu0 %v1612
        %v1742 = vpop.f32.mrb[0].mxu0
        %v1743 = vadd.f32 0.0, %v1742
        %v1744 = vpop.f32.mrb[0].mxu0
        %v1745 = vpop.f32.mrb[0].mxu0
        %v1746 = vadd.f32 0.0, %v1745
        %v1747 = vpop.f32.mrb[0].mxu0
        %1748 = vmatprep.mubr.bf16.mxu0 0
        %1749 = vmatmul.mubr.bf16.gmra.mrb[0].mxu0 %v1615
        %v1750 = vpop.f32.mrb[0].mxu0
        %v1751 = vadd.f32 0.0, %v1750
        %v1752 = vpop.f32.mrb[0].mxu0
        %v1753 = vpop.f32.mrb[0].mxu0
        %v1754 = vadd.f32 0.0, %v1753
        %v1755 = vpop.f32.mrb[0].mxu0
        %1756 = vmatprep.mubr.bf16.mxu0 0
        %1757 = vmatmul.mubr.bf16.gmra.mrb[0].mxu0 %v1618
        %v1758 = vpop.f32.mrb[0].mxu0
        %v1759 = vadd.f32 0.0, %v1758
        %v1760 = vpop.f32.mrb[0].mxu0
        %v1761 = vpop.f32.mrb[0].mxu0
        %v1762 = vadd.f32 0.0, %v1761
        %v1763 = vpop.f32.mrb[0].mxu0
        %1764 = vmatprep.mubr.bf16.mxu0 0
        %1765 = vmatmul.mubr.bf16.gmra.mrb[0].mxu0 %v1621
        %v1766 = vpop.f32.mrb[0].mxu0
        %v1767 = vadd.f32 0.0, %v1766
        %v1768 = vpop.f32.mrb[0].mxu0
        %v1769 = vpop.f32.mrb[0].mxu0
        %v1770 = vadd.f32 0.0, %v1769
        %v1771 = vpop.f32.mrb[0].mxu0
        %1772 = vmatprep.mubr.bf16.mxu0 0
        %1773 = vmatmul.mubr.bf16.gmra.mrb[0].mxu0 %v1624
        %v1774 = vpop.f32.mrb[0].mxu0
        %v1775 = vadd.f32 0.0, %v1774
        %v1776 = vpop.f32.mrb[0].mxu0
        %v1777 = vpop.f32.mrb[0].mxu0
        %v1778 = vadd.f32 0.0, %v1777
        %v1779 = vpop.f32.mrb[0].mxu0
        %1780 = vmatprep.mubr.bf16.mxu0 0
        %1781 = vmatmul.mubr.bf16.gmra.mrb[0].mxu0 %v1627
        %v1782 = vpop.f32.mrb[0].mxu0
        %v1783 = vadd.f32 0.0, %v1782
        %v1784 = vpop.f32.mrb[0].mxu0
        %v1785 = vpop.f32.mrb[0].mxu0
        %v1786 = vadd.f32 0.0, %v1785
        %v1787 = vpop.f32.mrb[0].mxu0
        %1788 = vmatprep.mubr.bf16.mxu0 0
        %1789 = vmatmul.mubr.bf16.gmra.mrb[0].mxu0 %v1630
        %v1790 = vpop.f32.mrb[0].mxu0
        %v1791 = vadd.f32 0.0, %v1790
        %v1792 = vpop.f32.mrb[0].mxu0
        %v1793 = vpop.f32.mrb[0].mxu0
        %v1794 = vadd.f32 0.0, %v1793
        %v1795 = vpop.f32.mrb[0].mxu0
        %1796 = vdwg.mxu0
        %v1829 = vunpack.c.l.b16 %v1097
        %v1830 = vunpack.c.l.b16 %v1098
        %v1831 = vunpack.c.l.b16 %v1099
        %v1832 = vunpack.c.l.b16 %v1100
        %v1833 = vunpack.c.l.b16 %v1101
        %v1834 = vunpack.c.l.b16 %v1102
        %v1835 = vunpack.c.l.b16 %v1103
        %v1836 = vunpack.c.l.b16 %v1104
        %v1837 = vunpack.c.l.b16 %v1105
        %v1838 = vunpack.c.l.b16 %v1106
        %v1839 = vunpack.c.l.b16 %v1107
        %v1840 = vunpack.c.l.b16 %v1108
        %v1841 = vunpack.c.l.b16 %v1109
        %v1842 = vunpack.c.l.b16 %v1110
        %v1843 = vunpack.c.l.b16 %v1111
        %v1844 = vunpack.c.l.b16 %v1112
        %v1845 = vunpack.c.l.b16 %v1113
        %v1846 = vunpack.c.l.b16 %v1114
        %v1847 = vunpack.c.l.b16 %v1115
        %v1848 = vunpack.c.l.b16 %v1116
        %v1849 = vunpack.c.l.b16 %v1117
        %v1850 = vunpack.c.l.b16 %v1118
        %v1851 = vunpack.c.l.b16 %v1119
        %v1852 = vunpack.c.l.b16 %v1120
        %v1853 = vunpack.c.l.b16 %v1121
        %v1854 = vunpack.c.l.b16 %v1122
        %v1855 = vunpack.c.l.b16 %v1123
        %v1856 = vunpack.c.l.b16 %v1124
        %v1857 = vunpack.c.l.b16 %v1125
        %v1858 = vunpack.c.l.b16 %v1126
        %v1859 = vunpack.c.l.b16 %v1127
        %v1860 = vunpack.c.l.b16 %v1128
        %v1861 = vpack.c.b16 %v1830, %v1829
        %v1862 = vpack.c.b16 %v1832, %v1831
        %v1863 = vpack.c.b16 %v1834, %v1833
        %v1864 = vpack.c.b16 %v1836, %v1835
        %v1865 = vpack.c.b16 %v1838, %v1837
        %v1866 = vpack.c.b16 %v1840, %v1839
        %v1867 = vpack.c.b16 %v1842, %v1841
        %v1868 = vpack.c.b16 %v1844, %v1843
        %v1869 = vpack.c.b16 %v1846, %v1845
        %v1870 = vpack.c.b16 %v1848, %v1847
        %v1871 = vpack.c.b16 %v1850, %v1849
        %v1872 = vpack.c.b16 %v1852, %v1851
        %v1873 = vpack.c.b16 %v1854, %v1853
        %v1874 = vpack.c.b16 %v1856, %v1855
        %v1875 = vpack.c.b16 %v1858, %v1857
        %v1876 = vpack.c.b16 %v1860, %v1859
        %v1878 = vsel %vm1583, %v1861, 0
        %v1881 = vsel %vm1583, %v1862, 0
        %v1884 = vsel %vm1583, %v1863, 0
        %v1887 = vsel %vm1583, %v1864, 0
        %v1890 = vsel %vm1583, %v1865, 0
        %v1893 = vsel %vm1583, %v1866, 0
        %v1896 = vsel %vm1583, %v1867, 0
        %v1899 = vsel %vm1583, %v1868, 0
        %v1902 = vsel %vm1583, %v1869, 0
        %v1905 = vsel %vm1583, %v1870, 0
        %v1908 = vsel %vm1583, %v1871, 0
        %v1911 = vsel %vm1583, %v1872, 0
        %v1914 = vsel %vm1583, %v1873, 0
        %v1917 = vsel %vm1583, %v1874, 0
        %v1920 = vsel %vm1583, %v1875, 0
        %v1923 = vsel %vm1583, %v1876, 0
        %v1926 = vsel %vm1632, %v1129, 0
        %1928 = vmatprep.subr.bf16.mxu0 0
        %1929 = vmatpush1.bf16.msra.mxu0 %v1926
        %1930 = vmatprep.subr.bf16.mxu0 0
        %1931 = vmatpush1.bf16.msra.mxu0 0
        %1932 = vmatprep.subr.bf16.mxu0 0
        %1933 = vmatpush1.bf16.msra.mxu0 0
        %1934 = vmatprep.subr.bf16.mxu0 0
        %1935 = vmatpush1.bf16.msra.mxu0 0
        %1936 = vmatprep.subr.bf16.mxu0 0
        %1937 = vmatpush1.bf16.msra.mxu0 0
        %1938 = vmatprep.subr.bf16.mxu0 0
        %1939 = vmatpush1.bf16.msra.mxu0 0
        %1940 = vmatprep.subr.bf16.mxu0 0
        %1941 = vmatpush1.bf16.msra.mxu0 0
        %1942 = vmatprep.subr.bf16.mxu0 0
        %1943 = vmatpush1.bf16.msra.mxu0 0
        %1944 = vmatprep.subr.bf16.mxu0 0
        %1945 = vmatpush1.bf16.msra.mxu0 0
        %1946 = vmatprep.subr.bf16.mxu0 0
        %1947 = vmatpush1.bf16.msra.mxu0 0
        %1948 = vmatprep.subr.bf16.mxu0 0
        %1949 = vmatpush1.bf16.msra.mxu0 0
        %1950 = vmatprep.subr.bf16.mxu0 0
        %1951 = vmatpush1.bf16.msra.mxu0 0
        %1952 = vmatprep.subr.bf16.mxu0 0
        %1953 = vmatpush1.bf16.msra.mxu0 0
        %1954 = vmatprep.subr.bf16.mxu0 0
        %1955 = vmatpush1.bf16.msra.mxu0 0
        %1956 = vmatprep.subr.bf16.mxu0 0
        %1957 = vmatpush1.bf16.msra.mxu0 0
        %1958 = vmatprep.subr.bf16.mxu0 0
        %1959 = vmatpush1.bf16.msra.mxu0 0
        %1960 = vmatprep.mubr.bf16.mxu0 0
        %1961 = vmatmul.mubr.bf16.gmra.mrb[0].mxu0 %v1878
        %v1962 = vpop.f32.mrb[0].mxu0
        %v1963 = vadd.f32 %v1671, %v1962
        %v1964 = vpop.f32.mrb[0].mxu0
        %v1965 = vpop.f32.mrb[0].mxu0
        %v1966 = vadd.f32 %v1674, %v1965
        %v1967 = vpop.f32.mrb[0].mxu0
        %1968 = vmatprep.mubr.bf16.mxu0 0
        %1969 = vmatmul.mubr.bf16.gmra.mrb[0].mxu0 %v1881
        %v1970 = vpop.f32.mrb[0].mxu0
        %v1971 = vadd.f32 %v1679, %v1970
        %v1972 = vpop.f32.mrb[0].mxu0
        %v1973 = vpop.f32.mrb[0].mxu0
        %v1974 = vadd.f32 %v1682, %v1973
        %v1975 = vpop.f32.mrb[0].mxu0
        %1976 = vmatprep.mubr.bf16.mxu0 0
        %1977 = vmatmul.mubr.bf16.gmra.mrb[0].mxu0 %v1884
        %v1978 = vpop.f32.mrb[0].mxu0
        %v1979 = vadd.f32 %v1687, %v1978
        %v1980 = vpop.f32.mrb[0].mxu0
        %v1981 = vpop.f32.mrb[0].mxu0
        %v1982 = vadd.f32 %v1690, %v1981
        %v1983 = vpop.f32.mrb[0].mxu0
        %1984 = vmatprep.mubr.bf16.mxu0 0
        %1985 = vmatmul.mubr.bf16.gmra.mrb[0].mxu0 %v1887
        %v1986 = vpop.f32.mrb[0].mxu0
        %v1987 = vadd.f32 %v1695, %v1986
        %v1988 = vpop.f32.mrb[0].mxu0
        %v1989 = vpop.f32.mrb[0].mxu0
        %v1990 = vadd.f32 %v1698, %v1989
        %v1991 = vpop.f32.mrb[0].mxu0
        %1992 = vmatprep.mubr.bf16.mxu0 0
        %1993 = vmatmul.mubr.bf16.gmra.mrb[0].mxu0 %v1890
        %v1994 = vpop.f32.mrb[0].mxu0
        %v1995 = vadd.f32 %v1703, %v1994
        %v1996 = vpop.f32.mrb[0].mxu0
        %v1997 = vpop.f32.mrb[0].mxu0
        %v1998 = vadd.f32 %v1706, %v1997
        %v1999 = vpop.f32.mrb[0].mxu0
        %2000 = vmatprep.mubr.bf16.mxu0 0
        %2001 = vmatmul.mubr.bf16.gmra.mrb[0].mxu0 %v1893
        %v2002 = vpop.f32.mrb[0].mxu0
        %v2003 = vadd.f32 %v1711, %v2002
        %v2004 = vpop.f32.mrb[0].mxu0
        %v2005 = vpop.f32.mrb[0].mxu0
        %v2006 = vadd.f32 %v1714, %v2005
        %v2007 = vpop.f32.mrb[0].mxu0
        %2008 = vmatprep.mubr.bf16.mxu0 0
        %2009 = vmatmul.mubr.bf16.gmra.mrb[0].mxu0 %v1896
        %v2010 = vpop.f32.mrb[0].mxu0
        %v2011 = vadd.f32 %v1719, %v2010
        %v2012 = vpop.f32.mrb[0].mxu0
        %v2013 = vpop.f32.mrb[0].mxu0
        %v2014 = vadd.f32 %v1722, %v2013
        %v2015 = vpop.f32.mrb[0].mxu0
        %2016 = vmatprep.mubr.bf16.mxu0 0
        %2017 = vmatmul.mubr.bf16.gmra.mrb[0].mxu0 %v1899
        %v2018 = vpop.f32.mrb[0].mxu0
        %v2019 = vadd.f32 %v1727, %v2018
        %v2020 = vpop.f32.mrb[0].mxu0
        %v2021 = vpop.f32.mrb[0].mxu0
        %v2022 = vadd.f32 %v1730, %v2021
        %v2023 = vpop.f32.mrb[0].mxu0
        %2024 = vmatprep.mubr.bf16.mxu0 0
        %2025 = vmatmul.mubr.bf16.gmra.mrb[0].mxu0 %v1902
        %v2026 = vpop.f32.mrb[0].mxu0
        %v2027 = vadd.f32 %v1735, %v2026
        %v2028 = vpop.f32.mrb[0].mxu0
        %v2029 = vpop.f32.mrb[0].mxu0
        %v2030 = vadd.f32 %v1738, %v2029
        %v2031 = vpop.f32.mrb[0].mxu0
        %2032 = vmatprep.mubr.bf16.mxu0 0
        %2033 = vmatmul.mubr.bf16.gmra.mrb[0].mxu0 %v1905
        %v2034 = vpop.f32.mrb[0].mxu0
        %v2035 = vadd.f32 %v1743, %v2034
        %v2036 = vpop.f32.mrb[0].mxu0
        %v2037 = vpop.f32.mrb[0].mxu0
        %v2038 = vadd.f32 %v1746, %v2037
        %v2039 = vpop.f32.mrb[0].mxu0
        %2040 = vmatprep.mubr.bf16.mxu0 0
        %2041 = vmatmul.mubr.bf16.gmra.mrb[0].mxu0 %v1908
        %v2042 = vpop.f32.mrb[0].mxu0
        %v2043 = vadd.f32 %v1751, %v2042
        %v2044 = vpop.f32.mrb[0].mxu0
        %v2045 = vpop.f32.mrb[0].mxu0
        %v2046 = vadd.f32 %v1754, %v2045
        %v2047 = vpop.f32.mrb[0].mxu0
        %2048 = vmatprep.mubr.bf16.mxu0 0
        %2049 = vmatmul.mubr.bf16.gmra.mrb[0].mxu0 %v1911
        %v2050 = vpop.f32.mrb[0].mxu0
        %v2051 = vadd.f32 %v1759, %v2050
        %v2052 = vpop.f32.mrb[0].mxu0
        %v2053 = vpop.f32.mrb[0].mxu0
        %v2054 = vadd.f32 %v1762, %v2053
        %v2055 = vpop.f32.mrb[0].mxu0
        %2056 = vmatprep.mubr.bf16.mxu0 0
        %2057 = vmatmul.mubr.bf16.gmra.mrb[0].mxu0 %v1914
        %v2058 = vpop.f32.mrb[0].mxu0
        %v2059 = vadd.f32 %v1767, %v2058
        %v2060 = vpop.f32.mrb[0].mxu0
        %v2061 = vpop.f32.mrb[0].mxu0
        %v2062 = vadd.f32 %v1770, %v2061
        %v2063 = vpop.f32.mrb[0].mxu0
        %2064 = vmatprep.mubr.bf16.mxu0 0
        %2065 = vmatmul.mubr.bf16.gmra.mrb[0].mxu0 %v1917
        %v2066 = vpop.f32.mrb[0].mxu0
        %v2067 = vadd.f32 %v1775, %v2066
        %v2068 = vpop.f32.mrb[0].mxu0
        %v2069 = vpop.f32.mrb[0].mxu0
        %v2070 = vadd.f32 %v1778, %v2069
        %v2071 = vpop.f32.mrb[0].mxu0
        %2072 = vmatprep.mubr.bf16.mxu0 0
        %2073 = vmatmul.mubr.bf16.gmra.mrb[0].mxu0 %v1920
        %v2074 = vpop.f32.mrb[0].mxu0
        %v2075 = vadd.f32 %v1783, %v2074
        %v2076 = vpop.f32.mrb[0].mxu0
        %v2077 = vpop.f32.mrb[0].mxu0
        %v2078 = vadd.f32 %v1786, %v2077
        %v2079 = vpop.f32.mrb[0].mxu0
        %2080 = vmatprep.mubr.bf16.mxu0 0
        %2081 = vmatmul.mubr.bf16.gmra.mrb[0].mxu0 %v1923
        %v2082 = vpop.f32.mrb[0].mxu0
        %v2083 = vadd.f32 %v1791, %v2082
        %v2084 = vpop.f32.mrb[0].mxu0
        %v2085 = vpop.f32.mrb[0].mxu0
        %v2086 = vadd.f32 %v1794, %v2085
        %v2087 = vpop.f32.mrb[0].mxu0
        %2088 = vdwg.mxu0
        %v2089 = vld [vmem:[#allocation2] sm:$0xe]
        %v2090 = vld [vmem:[#allocation2 + $0xc] sm:$0xe]
        %v2091 = vld [vmem:[#allocation2 + $0x18] sm:$0xe]
        %v2092 = vld [vmem:[#allocation2 + $0x24] sm:$0xe]
        %v2093 = vld [vmem:[#allocation2 + $0x30] sm:$0xe]
        %v2094 = vld [vmem:[#allocation2 + $0x3c] sm:$0xe]
        %v2095 = vld [vmem:[#allocation2 + $0x48] sm:$0xe]
        %v2096 = vld [vmem:[#allocation2 + $0x54] sm:$0xe]
        %v2097 = vld [vmem:[#allocation2 + $0x60] sm:$0xe]
        %v2098 = vld [vmem:[#allocation2 + $0x6c] sm:$0xe]
        %v2099 = vld [vmem:[#allocation2 + $0x78] sm:$0xe]
        %v2100 = vld [vmem:[#allocation2 + $0x84] sm:$0xe]
        %v2101 = vld [vmem:[#allocation2 + $0x90] sm:$0xe]
        %v2102 = vld [vmem:[#allocation2 + $0x9c] sm:$0xe]
        %v2103 = vld [vmem:[#allocation2 + $0xa8] sm:$0xe]
        %v2104 = vld [vmem:[#allocation2 + $0xb4] sm:$0xe]
        %vm2137 = vcmask 1042432
        %vm2138 = vcmask 1046532
        %vm2139 = vmor %vm2137, %vm2138
        %v2140 = vrot.slane %v2089, 5
        %v2141 = vrot.slane %v2140, 4
        %v2142 = vrot.slane %v1098, 5
        %v2143 = vsel %vm2139, %v2141, %v2142
        %v2144 = vrot.slane %v2142, 4
        %v2145 = vrot.slane %v1130, 5
        %v2146 = vsel %vm2139, %v2144, %v2145
        %v2147 = vrot.slane %v2090, 5
        %v2148 = vrot.slane %v2147, 4
        %v2149 = vrot.slane %v1100, 5
        %v2150 = vsel %vm2139, %v2148, %v2149
        %v2151 = vrot.slane %v2149, 4
        %v2152 = vrot.slane %v1131, 5
        %v2153 = vsel %vm2139, %v2151, %v2152
        %v2154 = vrot.slane %v2091, 5
        %v2155 = vrot.slane %v2154, 4
        %v2156 = vrot.slane %v1102, 5
        %v2157 = vsel %vm2139, %v2155, %v2156
        %v2158 = vrot.slane %v2156, 4
        %v2159 = vrot.slane %v1132, 5
        %v2160 = vsel %vm2139, %v2158, %v2159
        %v2161 = vrot.slane %v2092, 5
        %v2162 = vrot.slane %v2161, 4
        %v2163 = vrot.slane %v1104, 5
        %v2164 = vsel %vm2139, %v2162, %v2163
        %v2165 = vrot.slane %v2163, 4
        %v2166 = vrot.slane %v1133, 5
        %v2167 = vsel %vm2139, %v2165, %v2166
        %v2168 = vrot.slane %v2093, 5
        %v2169 = vrot.slane %v2168, 4
        %v2170 = vrot.slane %v1106, 5
        %v2171 = vsel %vm2139, %v2169, %v2170
        %v2172 = vrot.slane %v2170, 4
        %v2173 = vrot.slane %v1134, 5
        %v2174 = vsel %vm2139, %v2172, %v2173
        %v2175 = vrot.slane %v2094, 5
        %v2176 = vrot.slane %v2175, 4
        %v2177 = vrot.slane %v1108, 5
        %v2178 = vsel %vm2139, %v2176, %v2177
        %v2179 = vrot.slane %v2177, 4
        %v2180 = vrot.slane %v1135, 5
        %v2181 = vsel %vm2139, %v2179, %v2180
        %v2182 = vrot.slane %v2095, 5
        %v2183 = vrot.slane %v2182, 4
        %v2184 = vrot.slane %v1110, 5
        %v2185 = vsel %vm2139, %v2183, %v2184
        %v2186 = vrot.slane %v2184, 4
        %v2187 = vrot.slane %v1136, 5
        %v2188 = vsel %vm2139, %v2186, %v2187
        %v2189 = vrot.slane %v2096, 5
        %v2190 = vrot.slane %v2189, 4
        %v2191 = vrot.slane %v1112, 5
        %v2192 = vsel %vm2139, %v2190, %v2191
        %v2193 = vrot.slane %v2191, 4
        %v2194 = vrot.slane %v1137, 5
        %v2195 = vsel %vm2139, %v2193, %v2194
        %v2196 = vrot.slane %v2097, 5
        %v2197 = vrot.slane %v2196, 4
        %v2198 = vrot.slane %v1114, 5
        %v2199 = vsel %vm2139, %v2197, %v2198
        %v2200 = vrot.slane %v2198, 4
        %v2201 = vrot.slane %v1138, 5
        %v2202 = vsel %vm2139, %v2200, %v2201
        %v2203 = vrot.slane %v2098, 5
        %v2204 = vrot.slane %v2203, 4
        %v2205 = vrot.slane %v1116, 5
        %v2206 = vsel %vm2139, %v2204, %v2205
        %v2207 = vrot.slane %v2205, 4
        %v2208 = vrot.slane %v1139, 5
        %v2209 = vsel %vm2139, %v2207, %v2208
        %v2210 = vrot.slane %v2099, 5
        %v2211 = vrot.slane %v2210, 4
        %v2212 = vrot.slane %v1118, 5
        %v2213 = vsel %vm2139, %v2211, %v2212
        %v2214 = vrot.slane %v2212, 4
        %v2215 = vrot.slane %v1140, 5
        %v2216 = vsel %vm2139, %v2214, %v2215
        %v2217 = vrot.slane %v2100, 5
        %v2218 = vrot.slane %v2217, 4
        %v2219 = vrot.slane %v1120, 5
        %v2220 = vsel %vm2139, %v2218, %v2219
        %v2221 = vrot.slane %v2219, 4
        %v2222 = vrot.slane %v1141, 5
        %v2223 = vsel %vm2139, %v2221, %v2222
        %v2224 = vrot.slane %v2101, 5
        %v2225 = vrot.slane %v2224, 4
        %v2226 = vrot.slane %v1122, 5
        %v2227 = vsel %vm2139, %v2225, %v2226
        %v2228 = vrot.slane %v2226, 4
        %v2229 = vrot.slane %v1142, 5
        %v2230 = vsel %vm2139, %v2228, %v2229
        %v2231 = vrot.slane %v2102, 5
        %v2232 = vrot.slane %v2231, 4
        %v2233 = vrot.slane %v1124, 5
        %v2234 = vsel %vm2139, %v2232, %v2233
        %v2235 = vrot.slane %v2233, 4
        %v2236 = vrot.slane %v1143, 5
        %v2237 = vsel %vm2139, %v2235, %v2236
        %v2238 = vrot.slane %v2103, 5
        %v2239 = vrot.slane %v2238, 4
        %v2240 = vrot.slane %v1126, 5
        %v2241 = vsel %vm2139, %v2239, %v2240
        %v2242 = vrot.slane %v2240, 4
        %v2243 = vrot.slane %v1144, 5
        %v2244 = vsel %vm2139, %v2242, %v2243
        %v2245 = vrot.slane %v2104, 5
        %v2246 = vrot.slane %v2245, 4
        %v2247 = vrot.slane %v1128, 5
        %v2248 = vsel %vm2139, %v2246, %v2247
        %v2249 = vrot.slane %v2247, 4
        %v2250 = vrot.slane %v1145, 5
        %v2251 = vsel %vm2139, %v2249, %v2250
        %s2252 = scalar_lea.vmem %s3, 8
        %v2253 = vld [vmem:[%s2252] sm:$0xf]
        %v2254 = vunpack.c.l.b16 %v2143
        %v2255 = vunpack.c.l.b16 %v2146
        %v2256 = vunpack.c.l.b16 %v2150
        %v2257 = vunpack.c.l.b16 %v2153
        %v2258 = vunpack.c.l.b16 %v2157
        %v2259 = vunpack.c.l.b16 %v2160
        %v2260 = vunpack.c.l.b16 %v2164
        %v2261 = vunpack.c.l.b16 %v2167
        %v2262 = vunpack.c.l.b16 %v2171
        %v2263 = vunpack.c.l.b16 %v2174
        %v2264 = vunpack.c.l.b16 %v2178
        %v2265 = vunpack.c.l.b16 %v2181
        %v2266 = vunpack.c.l.b16 %v2185
        %v2267 = vunpack.c.l.b16 %v2188
        %v2268 = vunpack.c.l.b16 %v2192
        %v2269 = vunpack.c.l.b16 %v2195
        %v2270 = vunpack.c.l.b16 %v2199
        %v2271 = vunpack.c.l.b16 %v2202
        %v2272 = vunpack.c.l.b16 %v2206
        %v2273 = vunpack.c.l.b16 %v2209
        %v2274 = vunpack.c.l.b16 %v2213
        %v2275 = vunpack.c.l.b16 %v2216
        %v2276 = vunpack.c.l.b16 %v2220
        %v2277 = vunpack.c.l.b16 %v2223
        %v2278 = vunpack.c.l.b16 %v2227
        %v2279 = vunpack.c.l.b16 %v2230
        %v2280 = vunpack.c.l.b16 %v2234
        %v2281 = vunpack.c.l.b16 %v2237
        %v2282 = vunpack.c.l.b16 %v2241
        %v2283 = vunpack.c.l.b16 %v2244
        %v2284 = vunpack.c.l.b16 %v2248
        %v2285 = vunpack.c.l.b16 %v2251
        %v2286 = vpack.c.b16 %v2255, %v2254
        %v2287 = vpack.c.b16 %v2257, %v2256
        %v2288 = vpack.c.b16 %v2259, %v2258
        %v2289 = vpack.c.b16 %v2261, %v2260
        %v2290 = vpack.c.b16 %v2263, %v2262
        %v2291 = vpack.c.b16 %v2265, %v2264
        %v2292 = vpack.c.b16 %v2267, %v2266
        %v2293 = vpack.c.b16 %v2269, %v2268
        %v2294 = vpack.c.b16 %v2271, %v2270
        %v2295 = vpack.c.b16 %v2273, %v2272
        %v2296 = vpack.c.b16 %v2275, %v2274
        %v2297 = vpack.c.b16 %v2277, %v2276
        %v2298 = vpack.c.b16 %v2279, %v2278
        %v2299 = vpack.c.b16 %v2281, %v2280
        %v2300 = vpack.c.b16 %v2283, %v2282
        %v2301 = vpack.c.b16 %v2285, %v2284
        %v2303 = vsel %vm1583, %v2286, 0
        %v2306 = vsel %vm1583, %v2287, 0
        %v2309 = vsel %vm1583, %v2288, 0
        %v2312 = vsel %vm1583, %v2289, 0
        %v2315 = vsel %vm1583, %v2290, 0
        %v2318 = vsel %vm1583, %v2291, 0
        %v2321 = vsel %vm1583, %v2292, 0
        %v2324 = vsel %vm1583, %v2293, 0
        %v2327 = vsel %vm1583, %v2294, 0
        %v2330 = vsel %vm1583, %v2295, 0
        %v2333 = vsel %vm1583, %v2296, 0
        %v2336 = vsel %vm1583, %v2297, 0
        %v2339 = vsel %vm1583, %v2298, 0
        %v2342 = vsel %vm1583, %v2299, 0
        %v2345 = vsel %vm1583, %v2300, 0
        %v2348 = vsel %vm1583, %v2301, 0
        %v2351 = vsel %vm1632, %v2253, 0
        %2353 = vmatprep.subr.bf16.mxu0 0
        %2354 = vmatpush1.bf16.msra.mxu0 %v2351
        %2355 = vmatprep.subr.bf16.mxu0 0
        %2356 = vmatpush1.bf16.msra.mxu0 0
        %2357 = vmatprep.subr.bf16.mxu0 0
        %2358 = vmatpush1.bf16.msra.mxu0 0
        %2359 = vmatprep.subr.bf16.mxu0 0
        %2360 = vmatpush1.bf16.msra.mxu0 0
        %2361 = vmatprep.subr.bf16.mxu0 0
        %2362 = vmatpush1.bf16.msra.mxu0 0
        %2363 = vmatprep.subr.bf16.mxu0 0
        %2364 = vmatpush1.bf16.msra.mxu0 0
        %2365 = vmatprep.subr.bf16.mxu0 0
        %2366 = vmatpush1.bf16.msra.mxu0 0
        %2367 = vmatprep.subr.bf16.mxu0 0
        %2368 = vmatpush1.bf16.msra.mxu0 0
        %2369 = vmatprep.subr.bf16.mxu0 0
        %2370 = vmatpush1.bf16.msra.mxu0 0
        %2371 = vmatprep.subr.bf16.mxu0 0
        %2372 = vmatpush1.bf16.msra.mxu0 0
        %2373 = vmatprep.subr.bf16.mxu0 0
        %2374 = vmatpush1.bf16.msra.mxu0 0
        %2375 = vmatprep.subr.bf16.mxu0 0
        %2376 = vmatpush1.bf16.msra.mxu0 0
        %2377 = vmatprep.subr.bf16.mxu0 0
        %2378 = vmatpush1.bf16.msra.mxu0 0
        %2379 = vmatprep.subr.bf16.mxu0 0
        %2380 = vmatpush1.bf16.msra.mxu0 0
        %2381 = vmatprep.subr.bf16.mxu0 0
        %2382 = vmatpush1.bf16.msra.mxu0 0
        %2383 = vmatprep.subr.bf16.mxu0 0
        %2384 = vmatpush1.bf16.msra.mxu0 0
        %2385 = vmatprep.mubr.bf16.mxu0 0
        %2386 = vmatmul.mubr.bf16.gmra.mrb[0].mxu0 %v2303
        %v2387 = vpop.f32.mrb[0].mxu0
        %v2388 = vadd.f32 0.0, %v2387
        %v2389 = vpop.f32.mrb[0].mxu0
        %v2390 = vpop.f32.mrb[0].mxu0
        %v2391 = vadd.f32 0.0, %v2390
        %v2392 = vpop.f32.mrb[0].mxu0
        %2393 = vmatprep.mubr.bf16.mxu0 0
        %2394 = vmatmul.mubr.bf16.gmra.mrb[0].mxu0 %v2306
        %v2395 = vpop.f32.mrb[0].mxu0
        %v2396 = vadd.f32 0.0, %v2395
        %v2397 = vpop.f32.mrb[0].mxu0
        %v2398 = vpop.f32.mrb[0].mxu0
        %v2399 = vadd.f32 0.0, %v2398
        %v2400 = vpop.f32.mrb[0].mxu0
        %2401 = vmatprep.mubr.bf16.mxu0 0
        %2402 = vmatmul.mubr.bf16.gmra.mrb[0].mxu0 %v2309
        %v2403 = vpop.f32.mrb[0].mxu0
        %v2404 = vadd.f32 0.0, %v2403
        %v2405 = vpop.f32.mrb[0].mxu0
        %v2406 = vpop.f32.mrb[0].mxu0
        %v2407 = vadd.f32 0.0, %v2406
        %v2408 = vpop.f32.mrb[0].mxu0
        %2409 = vmatprep.mubr.bf16.mxu0 0
        %2410 = vmatmul.mubr.bf16.gmra.mrb[0].mxu0 %v2312
        %v2411 = vpop.f32.mrb[0].mxu0
        %v2412 = vadd.f32 0.0, %v2411
        %v2413 = vpop.f32.mrb[0].mxu0
        %v2414 = vpop.f32.mrb[0].mxu0
        %v2415 = vadd.f32 0.0, %v2414
        %v2416 = vpop.f32.mrb[0].mxu0
        %2417 = vmatprep.mubr.bf16.mxu0 0
        %2418 = vmatmul.mubr.bf16.gmra.mrb[0].mxu0 %v2315
        %v2419 = vpop.f32.mrb[0].mxu0
        %v2420 = vadd.f32 0.0, %v2419
        %v2421 = vpop.f32.mrb[0].mxu0
        %v2422 = vpop.f32.mrb[0].mxu0
        %v2423 = vadd.f32 0.0, %v2422
        %v2424 = vpop.f32.mrb[0].mxu0
        %2425 = vmatprep.mubr.bf16.mxu0 0
        %2426 = vmatmul.mubr.bf16.gmra.mrb[0].mxu0 %v2318
        %v2427 = vpop.f32.mrb[0].mxu0
        %v2428 = vadd.f32 0.0, %v2427
        %v2429 = vpop.f32.mrb[0].mxu0
        %v2430 = vpop.f32.mrb[0].mxu0
        %v2431 = vadd.f32 0.0, %v2430
        %v2432 = vpop.f32.mrb[0].mxu0
        %2433 = vmatprep.mubr.bf16.mxu0 0
        %2434 = vmatmul.mubr.bf16.gmra.mrb[0].mxu0 %v2321
        %v2435 = vpop.f32.mrb[0].mxu0
        %v2436 = vadd.f32 0.0, %v2435
        %v2437 = vpop.f32.mrb[0].mxu0
        %v2438 = vpop.f32.mrb[0].mxu0
        %v2439 = vadd.f32 0.0, %v2438
        %v2440 = vpop.f32.mrb[0].mxu0
        %2441 = vmatprep.mubr.bf16.mxu0 0
        %2442 = vmatmul.mubr.bf16.gmra.mrb[0].mxu0 %v2324
        %v2443 = vpop.f32.mrb[0].mxu0
        %v2444 = vadd.f32 0.0, %v2443
        %v2445 = vpop.f32.mrb[0].mxu0
        %v2446 = vpop.f32.mrb[0].mxu0
        %v2447 = vadd.f32 0.0, %v2446
        %v2448 = vpop.f32.mrb[0].mxu0
        %2449 = vmatprep.mubr.bf16.mxu0 0
        %2450 = vmatmul.mubr.bf16.gmra.mrb[0].mxu0 %v2327
        %v2451 = vpop.f32.mrb[0].mxu0
        %v2452 = vadd.f32 0.0, %v2451
        %v2453 = vpop.f32.mrb[0].mxu0
        %v2454 = vpop.f32.mrb[0].mxu0
        %v2455 = vadd.f32 0.0, %v2454
        %v2456 = vpop.f32.mrb[0].mxu0
        %2457 = vmatprep.mubr.bf16.mxu0 0
        %2458 = vmatmul.mubr.bf16.gmra.mrb[0].mxu0 %v2330
        %v2459 = vpop.f32.mrb[0].mxu0
        %v2460 = vadd.f32 0.0, %v2459
        %v2461 = vpop.f32.mrb[0].mxu0
        %v2462 = vpop.f32.mrb[0].mxu0
        %v2463 = vadd.f32 0.0, %v2462
        %v2464 = vpop.f32.mrb[0].mxu0
        %2465 = vmatprep.mubr.bf16.mxu0 0
        %2466 = vmatmul.mubr.bf16.gmra.mrb[0].mxu0 %v2333
        %v2467 = vpop.f32.mrb[0].mxu0
        %v2468 = vadd.f32 0.0, %v2467
        %v2469 = vpop.f32.mrb[0].mxu0
        %v2470 = vpop.f32.mrb[0].mxu0
        %v2471 = vadd.f32 0.0, %v2470
        %v2472 = vpop.f32.mrb[0].mxu0
        %2473 = vmatprep.mubr.bf16.mxu0 0
        %2474 = vmatmul.mubr.bf16.gmra.mrb[0].mxu0 %v2336
        %v2475 = vpop.f32.mrb[0].mxu0
        %v2476 = vadd.f32 0.0, %v2475
        %v2477 = vpop.f32.mrb[0].mxu0
        %v2478 = vpop.f32.mrb[0].mxu0
        %v2479 = vadd.f32 0.0, %v2478
        %v2480 = vpop.f32.mrb[0].mxu0
        %2481 = vmatprep.mubr.bf16.mxu0 0
        %2482 = vmatmul.mubr.bf16.gmra.mrb[0].mxu0 %v2339
        %v2483 = vpop.f32.mrb[0].mxu0
        %v2484 = vadd.f32 0.0, %v2483
        %v2485 = vpop.f32.mrb[0].mxu0
        %v2486 = vpop.f32.mrb[0].mxu0
        %v2487 = vadd.f32 0.0, %v2486
        %v2488 = vpop.f32.mrb[0].mxu0
        %2489 = vmatprep.mubr.bf16.mxu0 0
        %2490 = vmatmul.mubr.bf16.gmra.mrb[0].mxu0 %v2342
        %v2491 = vpop.f32.mrb[0].mxu0
        %v2492 = vadd.f32 0.0, %v2491
        %v2493 = vpop.f32.mrb[0].mxu0
        %v2494 = vpop.f32.mrb[0].mxu0
        %v2495 = vadd.f32 0.0, %v2494
        %v2496 = vpop.f32.mrb[0].mxu0
        %2497 = vmatprep.mubr.bf16.mxu0 0
        %2498 = vmatmul.mubr.bf16.gmra.mrb[0].mxu0 %v2345
        %v2499 = vpop.f32.mrb[0].mxu0
        %v2500 = vadd.f32 0.0, %v2499
        %v2501 = vpop.f32.mrb[0].mxu0
        %v2502 = vpop.f32.mrb[0].mxu0
        %v2503 = vadd.f32 0.0, %v2502
        %v2504 = vpop.f32.mrb[0].mxu0
        %2505 = vmatprep.mubr.bf16.mxu0 0
        %2506 = vmatmul.mubr.bf16.gmra.mrb[0].mxu0 %v2348
        %v2507 = vpop.f32.mrb[0].mxu0
        %v2508 = vadd.f32 0.0, %v2507
        %v2509 = vpop.f32.mrb[0].mxu0
        %v2510 = vpop.f32.mrb[0].mxu0
        %v2511 = vadd.f32 0.0, %v2510
        %v2512 = vpop.f32.mrb[0].mxu0
        %2513 = vdwg.mxu0
        %v2514 = vadd.f32 %v1963, %v2388
        %v2515 = vadd.f32 %v1966, %v2391
        %v2516 = vadd.f32 %v1971, %v2396
        %v2517 = vadd.f32 %v1974, %v2399
        %v2518 = vadd.f32 %v1979, %v2404
        %v2519 = vadd.f32 %v1982, %v2407
        %v2520 = vadd.f32 %v1987, %v2412
        %v2521 = vadd.f32 %v1990, %v2415
        %v2522 = vadd.f32 %v1995, %v2420
        %v2523 = vadd.f32 %v1998, %v2423
        %v2524 = vadd.f32 %v2003, %v2428
        %v2525 = vadd.f32 %v2006, %v2431
        %v2526 = vadd.f32 %v2011, %v2436
        %v2527 = vadd.f32 %v2014, %v2439
        %v2528 = vadd.f32 %v2019, %v2444
        %v2529 = vadd.f32 %v2022, %v2447
        %v2530 = vadd.f32 %v2027, %v2452
        %v2531 = vadd.f32 %v2030, %v2455
        %v2532 = vadd.f32 %v2035, %v2460
        %v2533 = vadd.f32 %v2038, %v2463
        %v2534 = vadd.f32 %v2043, %v2468
        %v2535 = vadd.f32 %v2046, %v2471
        %v2536 = vadd.f32 %v2051, %v2476
        %v2537 = vadd.f32 %v2054, %v2479
        %v2538 = vadd.f32 %v2059, %v2484
        %v2539 = vadd.f32 %v2062, %v2487
        %v2540 = vadd.f32 %v2067, %v2492
        %v2541 = vadd.f32 %v2070, %v2495
        %v2542 = vadd.f32 %v2075, %v2500
        %v2543 = vadd.f32 %v2078, %v2503
        %v2544 = vadd.f32 %v2083, %v2508
        %v2545 = vadd.f32 %v2086, %v2511
        %v2546 = vld [vmem:[%s978] sm:$0xf]
        %v2547 = vld [vmem:[%s978 + $0x4] sm:$0xf]
        %v2548 = vld [vmem:[%s978 + $0xc] sm:$0xf]
        %v2549 = vld [vmem:[%s978 + $0x10] sm:$0xf]
        %v2550 = vld [vmem:[%s978 + $0x18] sm:$0xf]
        %v2551 = vld [vmem:[%s978 + $0x1c] sm:$0xf]
        %v2552 = vld [vmem:[%s978 + $0x24] sm:$0xf]
        %v2553 = vld [vmem:[%s978 + $0x28] sm:$0xf]
        %v2554 = vld [vmem:[%s978 + $0x30] sm:$0xf]
        %v2555 = vld [vmem:[%s978 + $0x34] sm:$0xf]
        %v2556 = vld [vmem:[%s978 + $0x3c] sm:$0xf]
        %v2557 = vld [vmem:[%s978 + $0x40] sm:$0xf]
        %v2558 = vld [vmem:[%s978 + $0x48] sm:$0xf]
        %v2559 = vld [vmem:[%s978 + $0x4c] sm:$0xf]
        %v2560 = vld [vmem:[%s978 + $0x54] sm:$0xf]
        %v2561 = vld [vmem:[%s978 + $0x58] sm:$0xf]
        %v2562 = vld [vmem:[%s978 + $0x60] sm:$0xf]
        %v2563 = vld [vmem:[%s978 + $0x64] sm:$0xf]
        %v2564 = vld [vmem:[%s978 + $0x6c] sm:$0xf]
        %v2565 = vld [vmem:[%s978 + $0x70] sm:$0xf]
        %v2566 = vld [vmem:[%s978 + $0x78] sm:$0xf]
        %v2567 = vld [vmem:[%s978 + $0x7c] sm:$0xf]
        %v2568 = vld [vmem:[%s978 + $0x84] sm:$0xf]
        %v2569 = vld [vmem:[%s978 + $0x88] sm:$0xf]
        %v2570 = vld [vmem:[%s978 + $0x90] sm:$0xf]
        %v2571 = vld [vmem:[%s978 + $0x94] sm:$0xf]
        %v2572 = vld [vmem:[%s978 + $0x9c] sm:$0xf]
        %v2573 = vld [vmem:[%s978 + $0xa0] sm:$0xf]
        %v2574 = vld [vmem:[%s978 + $0xa8] sm:$0xf]
        %v2575 = vld [vmem:[%s978 + $0xac] sm:$0xf]
        %v2576 = vld [vmem:[%s978 + $0xb4] sm:$0xf]
        %v2577 = vld [vmem:[%s978 + $0xb8] sm:$0xf]
        %s2578 = scalar_lea.vmem %s3, 12
        %v2579 = vld [vmem:[%s2578] sm:$0xf]
        %v2612 = vunpack.c.l.b16 %v2546
        %v2613 = vunpack.c.l.b16 %v2547
        %v2614 = vunpack.c.l.b16 %v2548
        %v2615 = vunpack.c.l.b16 %v2549
        %v2616 = vunpack.c.l.b16 %v2550
        %v2617 = vunpack.c.l.b16 %v2551
        %v2618 = vunpack.c.l.b16 %v2552
        %v2619 = vunpack.c.l.b16 %v2553
        %v2620 = vunpack.c.l.b16 %v2554
        %v2621 = vunpack.c.l.b16 %v2555
        %v2622 = vunpack.c.l.b16 %v2556
        %v2623 = vunpack.c.l.b16 %v2557
        %v2624 = vunpack.c.l.b16 %v2558
        %v2625 = vunpack.c.l.b16 %v2559
        %v2626 = vunpack.c.l.b16 %v2560
        %v2627 = vunpack.c.l.b16 %v2561
        %v2628 = vunpack.c.l.b16 %v2562
        %v2629 = vunpack.c.l.b16 %v2563
        %v2630 = vunpack.c.l.b16 %v2564
        %v2631 = vunpack.c.l.b16 %v2565
        %v2632 = vunpack.c.l.b16 %v2566
        %v2633 = vunpack.c.l.b16 %v2567
        %v2634 = vunpack.c.l.b16 %v2568
        %v2635 = vunpack.c.l.b16 %v2569
        %v2636 = vunpack.c.l.b16 %v2570
        %v2637 = vunpack.c.l.b16 %v2571
        %v2638 = vunpack.c.l.b16 %v2572
        %v2639 = vunpack.c.l.b16 %v2573
        %v2640 = vunpack.c.l.b16 %v2574
        %v2641 = vunpack.c.l.b16 %v2575
        %v2642 = vunpack.c.l.b16 %v2576
        %v2643 = vunpack.c.l.b16 %v2577
        %v2644 = vpack.c.b16 %v2613, %v2612
        %v2645 = vpack.c.b16 %v2615, %v2614
        %v2646 = vpack.c.b16 %v2617, %v2616
        %v2647 = vpack.c.b16 %v2619, %v2618
        %v2648 = vpack.c.b16 %v2621, %v2620
        %v2649 = vpack.c.b16 %v2623, %v2622
        %v2650 = vpack.c.b16 %v2625, %v2624
        %v2651 = vpack.c.b16 %v2627, %v2626
        %v2652 = vpack.c.b16 %v2629, %v2628
        %v2653 = vpack.c.b16 %v2631, %v2630
        %v2654 = vpack.c.b16 %v2633, %v2632
        %v2655 = vpack.c.b16 %v2635, %v2634
        %v2656 = vpack.c.b16 %v2637, %v2636
        %v2657 = vpack.c.b16 %v2639, %v2638
        %v2658 = vpack.c.b16 %v2641, %v2640
        %v2659 = vpack.c.b16 %v2643, %v2642
        %v2661 = vsel %vm1583, %v2644, 0
        %v2664 = vsel %vm1583, %v2645, 0
        %v2667 = vsel %vm1583, %v2646, 0
        %v2670 = vsel %vm1583, %v2647, 0
        %v2673 = vsel %vm1583, %v2648, 0
        %v2676 = vsel %vm1583, %v2649, 0
        %v2679 = vsel %vm1583, %v2650, 0
        %v2682 = vsel %vm1583, %v2651, 0
        %v2685 = vsel %vm1583, %v2652, 0
        %v2688 = vsel %vm1583, %v2653, 0
        %v2691 = vsel %vm1583, %v2654, 0
        %v2694 = vsel %vm1583, %v2655, 0
        %v2697 = vsel %vm1583, %v2656, 0
        %v2700 = vsel %vm1583, %v2657, 0
        %v2703 = vsel %vm1583, %v2658, 0
        %v2706 = vsel %vm1583, %v2659, 0
        %v2709 = vsel %vm1632, %v2579, 0
        %2711 = vmatprep.subr.bf16.mxu0 0
        %2712 = vmatpush1.bf16.msra.mxu0 %v2709
        %2713 = vmatprep.subr.bf16.mxu0 0
        %2714 = vmatpush1.bf16.msra.mxu0 0
        %2715 = vmatprep.subr.bf16.mxu0 0
        %2716 = vmatpush1.bf16.msra.mxu0 0
        %2717 = vmatprep.subr.bf16.mxu0 0
        %2718 = vmatpush1.bf16.msra.mxu0 0
        %2719 = vmatprep.subr.bf16.mxu0 0
        %2720 = vmatpush1.bf16.msra.mxu0 0
        %2721 = vmatprep.subr.bf16.mxu0 0
        %2722 = vmatpush1.bf16.msra.mxu0 0
        %2723 = vmatprep.subr.bf16.mxu0 0
        %2724 = vmatpush1.bf16.msra.mxu0 0
        %2725 = vmatprep.subr.bf16.mxu0 0
        %2726 = vmatpush1.bf16.msra.mxu0 0
        %2727 = vmatprep.subr.bf16.mxu0 0
        %2728 = vmatpush1.bf16.msra.mxu0 0
        %2729 = vmatprep.subr.bf16.mxu0 0
        %2730 = vmatpush1.bf16.msra.mxu0 0
        %2731 = vmatprep.subr.bf16.mxu0 0
        %2732 = vmatpush1.bf16.msra.mxu0 0
        %2733 = vmatprep.subr.bf16.mxu0 0
        %2734 = vmatpush1.bf16.msra.mxu0 0
        %2735 = vmatprep.subr.bf16.mxu0 0
        %2736 = vmatpush1.bf16.msra.mxu0 0
        %2737 = vmatprep.subr.bf16.mxu0 0
        %2738 = vmatpush1.bf16.msra.mxu0 0
        %2739 = vmatprep.subr.bf16.mxu0 0
        %2740 = vmatpush1.bf16.msra.mxu0 0
        %2741 = vmatprep.subr.bf16.mxu0 0
        %2742 = vmatpush1.bf16.msra.mxu0 0
        %2743 = vmatprep.mubr.bf16.mxu0 0
        %2744 = vmatmul.mubr.bf16.gmra.mrb[0].mxu0 %v2661
        %v2745 = vpop.f32.mrb[0].mxu0
        %v2746 = vadd.f32 0.0, %v2745
        %v2747 = vpop.f32.mrb[0].mxu0
        %v2748 = vpop.f32.mrb[0].mxu0
        %v2749 = vadd.f32 0.0, %v2748
        %v2750 = vpop.f32.mrb[0].mxu0
        %2751 = vmatprep.mubr.bf16.mxu0 0
        %2752 = vmatmul.mubr.bf16.gmra.mrb[0].mxu0 %v2664
        %v2753 = vpop.f32.mrb[0].mxu0
        %v2754 = vadd.f32 0.0, %v2753
        %v2755 = vpop.f32.mrb[0].mxu0
        %v2756 = vpop.f32.mrb[0].mxu0
        %v2757 = vadd.f32 0.0, %v2756
        %v2758 = vpop.f32.mrb[0].mxu0
        %2759 = vmatprep.mubr.bf16.mxu0 0
        %2760 = vmatmul.mubr.bf16.gmra.mrb[0].mxu0 %v2667
        %v2761 = vpop.f32.mrb[0].mxu0
        %v2762 = vadd.f32 0.0, %v2761
        %v2763 = vpop.f32.mrb[0].mxu0
        %v2764 = vpop.f32.mrb[0].mxu0
        %v2765 = vadd.f32 0.0, %v2764
        %v2766 = vpop.f32.mrb[0].mxu0
        %2767 = vmatprep.mubr.bf16.mxu0 0
        %2768 = vmatmul.mubr.bf16.gmra.mrb[0].mxu0 %v2670
        %v2769 = vpop.f32.mrb[0].mxu0
        %v2770 = vadd.f32 0.0, %v2769
        %v2771 = vpop.f32.mrb[0].mxu0
        %v2772 = vpop.f32.mrb[0].mxu0
        %v2773 = vadd.f32 0.0, %v2772
        %v2774 = vpop.f32.mrb[0].mxu0
        %2775 = vmatprep.mubr.bf16.mxu0 0
        %2776 = vmatmul.mubr.bf16.gmra.mrb[0].mxu0 %v2673
        %v2777 = vpop.f32.mrb[0].mxu0
        %v2778 = vadd.f32 0.0, %v2777
        %v2779 = vpop.f32.mrb[0].mxu0
        %v2780 = vpop.f32.mrb[0].mxu0
        %v2781 = vadd.f32 0.0, %v2780
        %v2782 = vpop.f32.mrb[0].mxu0
        %2783 = vmatprep.mubr.bf16.mxu0 0
        %2784 = vmatmul.mubr.bf16.gmra.mrb[0].mxu0 %v2676
        %v2785 = vpop.f32.mrb[0].mxu0
        %v2786 = vadd.f32 0.0, %v2785
        %v2787 = vpop.f32.mrb[0].mxu0
        %v2788 = vpop.f32.mrb[0].mxu0
        %v2789 = vadd.f32 0.0, %v2788
        %v2790 = vpop.f32.mrb[0].mxu0
        %2791 = vmatprep.mubr.bf16.mxu0 0
        %2792 = vmatmul.mubr.bf16.gmra.mrb[0].mxu0 %v2679
        %v2793 = vpop.f32.mrb[0].mxu0
        %v2794 = vadd.f32 0.0, %v2793
        %v2795 = vpop.f32.mrb[0].mxu0
        %v2796 = vpop.f32.mrb[0].mxu0
        %v2797 = vadd.f32 0.0, %v2796
        %v2798 = vpop.f32.mrb[0].mxu0
        %2799 = vmatprep.mubr.bf16.mxu0 0
        %2800 = vmatmul.mubr.bf16.gmra.mrb[0].mxu0 %v2682
        %v2801 = vpop.f32.mrb[0].mxu0
        %v2802 = vadd.f32 0.0, %v2801
        %v2803 = vpop.f32.mrb[0].mxu0
        %v2804 = vpop.f32.mrb[0].mxu0
        %v2805 = vadd.f32 0.0, %v2804
        %v2806 = vpop.f32.mrb[0].mxu0
        %2807 = vmatprep.mubr.bf16.mxu0 0
        %2808 = vmatmul.mubr.bf16.gmra.mrb[0].mxu0 %v2685
        %v2809 = vpop.f32.mrb[0].mxu0
        %v2810 = vadd.f32 0.0, %v2809
        %v2811 = vpop.f32.mrb[0].mxu0
        %v2812 = vpop.f32.mrb[0].mxu0
        %v2813 = vadd.f32 0.0, %v2812
        %v2814 = vpop.f32.mrb[0].mxu0
        %2815 = vmatprep.mubr.bf16.mxu0 0
        %2816 = vmatmul.mubr.bf16.gmra.mrb[0].mxu0 %v2688
        %v2817 = vpop.f32.mrb[0].mxu0
        %v2818 = vadd.f32 0.0, %v2817
        %v2819 = vpop.f32.mrb[0].mxu0
        %v2820 = vpop.f32.mrb[0].mxu0
        %v2821 = vadd.f32 0.0, %v2820
        %v2822 = vpop.f32.mrb[0].mxu0
        %2823 = vmatprep.mubr.bf16.mxu0 0
        %2824 = vmatmul.mubr.bf16.gmra.mrb[0].mxu0 %v2691
        %v2825 = vpop.f32.mrb[0].mxu0
        %v2826 = vadd.f32 0.0, %v2825
        %v2827 = vpop.f32.mrb[0].mxu0
        %v2828 = vpop.f32.mrb[0].mxu0
        %v2829 = vadd.f32 0.0, %v2828
        %v2830 = vpop.f32.mrb[0].mxu0
        %2831 = vmatprep.mubr.bf16.mxu0 0
        %2832 = vmatmul.mubr.bf16.gmra.mrb[0].mxu0 %v2694
        %v2833 = vpop.f32.mrb[0].mxu0
        %v2834 = vadd.f32 0.0, %v2833
        %v2835 = vpop.f32.mrb[0].mxu0
        %v2836 = vpop.f32.mrb[0].mxu0
        %v2837 = vadd.f32 0.0, %v2836
        %v2838 = vpop.f32.mrb[0].mxu0
        %2839 = vmatprep.mubr.bf16.mxu0 0
        %2840 = vmatmul.mubr.bf16.gmra.mrb[0].mxu0 %v2697
        %v2841 = vpop.f32.mrb[0].mxu0
        %v2842 = vadd.f32 0.0, %v2841
        %v2843 = vpop.f32.mrb[0].mxu0
        %v2844 = vpop.f32.mrb[0].mxu0
        %v2845 = vadd.f32 0.0, %v2844
        %v2846 = vpop.f32.mrb[0].mxu0
        %2847 = vmatprep.mubr.bf16.mxu0 0
        %2848 = vmatmul.mubr.bf16.gmra.mrb[0].mxu0 %v2700
        %v2849 = vpop.f32.mrb[0].mxu0
        %v2850 = vadd.f32 0.0, %v2849
        %v2851 = vpop.f32.mrb[0].mxu0
        %v2852 = vpop.f32.mrb[0].mxu0
        %v2853 = vadd.f32 0.0, %v2852
        %v2854 = vpop.f32.mrb[0].mxu0
        %2855 = vmatprep.mubr.bf16.mxu0 0
        %2856 = vmatmul.mubr.bf16.gmra.mrb[0].mxu0 %v2703
        %v2857 = vpop.f32.mrb[0].mxu0
        %v2858 = vadd.f32 0.0, %v2857
        %v2859 = vpop.f32.mrb[0].mxu0
        %v2860 = vpop.f32.mrb[0].mxu0
        %v2861 = vadd.f32 0.0, %v2860
        %v2862 = vpop.f32.mrb[0].mxu0
        %2863 = vmatprep.mubr.bf16.mxu0 0
        %2864 = vmatmul.mubr.bf16.gmra.mrb[0].mxu0 %v2706
        %v2865 = vpop.f32.mrb[0].mxu0
        %v2866 = vadd.f32 0.0, %v2865
        %v2867 = vpop.f32.mrb[0].mxu0
        %v2868 = vpop.f32.mrb[0].mxu0
        %v2869 = vadd.f32 0.0, %v2868
        %v2870 = vpop.f32.mrb[0].mxu0
        %2871 = vdwg.mxu0
        %v2872 = vadd.f32 %v2514, %v2746
        %v2873 = vadd.f32 %v2515, %v2749
        %v2874 = vadd.f32 %v2516, %v2754
        %v2875 = vadd.f32 %v2517, %v2757
        %v2876 = vadd.f32 %v2518, %v2762
        %v2877 = vadd.f32 %v2519, %v2765
        %v2878 = vadd.f32 %v2520, %v2770
        %v2879 = vadd.f32 %v2521, %v2773
        %v2880 = vadd.f32 %v2522, %v2778
        %v2881 = vadd.f32 %v2523, %v2781
        %v2882 = vadd.f32 %v2524, %v2786
        %v2883 = vadd.f32 %v2525, %v2789
        %v2884 = vadd.f32 %v2526, %v2794
        %v2885 = vadd.f32 %v2527, %v2797
        %v2886 = vadd.f32 %v2528, %v2802
        %v2887 = vadd.f32 %v2529, %v2805
        %v2888 = vadd.f32 %v2530, %v2810
        %v2889 = vadd.f32 %v2531, %v2813
        %v2890 = vadd.f32 %v2532, %v2818
        %v2891 = vadd.f32 %v2533, %v2821
        %v2892 = vadd.f32 %v2534, %v2826
        %v2893 = vadd.f32 %v2535, %v2829
        %v2894 = vadd.f32 %v2536, %v2834
        %v2895 = vadd.f32 %v2537, %v2837
        %v2896 = vadd.f32 %v2538, %v2842
        %v2897 = vadd.f32 %v2539, %v2845
        %v2898 = vadd.f32 %v2540, %v2850
        %v2899 = vadd.f32 %v2541, %v2853
        %v2900 = vadd.f32 %v2542, %v2858
        %v2901 = vadd.f32 %v2543, %v2861
        %v2902 = vadd.f32 %v2544, %v2866
        %v2903 = vadd.f32 %v2545, %v2869
        %v2904 = vld [vmem:[%s978] sm:$0xf]
        %v2905 = vld [vmem:[%s978 + $0x4] sm:$0xf]
        %v2906 = vld [vmem:[%s978 + $0x8] sm:$0x1]
        %v2907 = vld [vmem:[%s978 + $0xc] sm:$0xf]
        %v2908 = vld [vmem:[%s978 + $0x10] sm:$0xf]
        %v2909 = vld [vmem:[%s978 + $0x14] sm:$0x1]
        %v2910 = vld [vmem:[%s978 + $0x18] sm:$0xf]
        %v2911 = vld [vmem:[%s978 + $0x1c] sm:$0xf]
        %v2912 = vld [vmem:[%s978 + $0x20] sm:$0x1]
        %v2913 = vld [vmem:[%s978 + $0x24] sm:$0xf]
        %v2914 = vld [vmem:[%s978 + $0x28] sm:$0xf]
        %v2915 = vld [vmem:[%s978 + $0x2c] sm:$0x1]
        %v2916 = vld [vmem:[%s978 + $0x30] sm:$0xf]
        %v2917 = vld [vmem:[%s978 + $0x34] sm:$0xf]
        %v2918 = vld [vmem:[%s978 + $0x38] sm:$0x1]
        %v2919 = vld [vmem:[%s978 + $0x3c] sm:$0xf]
        %v2920 = vld [vmem:[%s978 + $0x40] sm:$0xf]
        %v2921 = vld [vmem:[%s978 + $0x44] sm:$0x1]
        %v2922 = vld [vmem:[%s978 + $0x48] sm:$0xf]
        %v2923 = vld [vmem:[%s978 + $0x4c] sm:$0xf]
        %v2924 = vld [vmem:[%s978 + $0x50] sm:$0x1]
        %v2925 = vld [vmem:[%s978 + $0x54] sm:$0xf]
        %v2926 = vld [vmem:[%s978 + $0x58] sm:$0xf]
        %v2927 = vld [vmem:[%s978 + $0x5c] sm:$0x1]
        %v2928 = vld [vmem:[%s978 + $0x60] sm:$0xf]
        %v2929 = vld [vmem:[%s978 + $0x64] sm:$0xf]
        %v2930 = vld [vmem:[%s978 + $0x68] sm:$0x1]
        %v2931 = vld [vmem:[%s978 + $0x6c] sm:$0xf]
        %v2932 = vld [vmem:[%s978 + $0x70] sm:$0xf]
        %v2933 = vld [vmem:[%s978 + $0x74] sm:$0x1]
        %v2934 = vld [vmem:[%s978 + $0x78] sm:$0xf]
        %v2935 = vld [vmem:[%s978 + $0x7c] sm:$0xf]
        %v2936 = vld [vmem:[%s978 + $0x80] sm:$0x1]
        %v2937 = vld [vmem:[%s978 + $0x84] sm:$0xf]
        %v2938 = vld [vmem:[%s978 + $0x88] sm:$0xf]
        %v2939 = vld [vmem:[%s978 + $0x8c] sm:$0x1]
        %v2940 = vld [vmem:[%s978 + $0x90] sm:$0xf]
        %v2941 = vld [vmem:[%s978 + $0x94] sm:$0xf]
        %v2942 = vld [vmem:[%s978 + $0x98] sm:$0x1]
        %v2943 = vld [vmem:[%s978 + $0x9c] sm:$0xf]
        %v2944 = vld [vmem:[%s978 + $0xa0] sm:$0xf]
        %v2945 = vld [vmem:[%s978 + $0xa4] sm:$0x1]
        %v2946 = vld [vmem:[%s978 + $0xa8] sm:$0xf]
        %v2947 = vld [vmem:[%s978 + $0xac] sm:$0xf]
        %v2948 = vld [vmem:[%s978 + $0xb0] sm:$0x1]
        %v2949 = vld [vmem:[%s978 + $0xb4] sm:$0xf]
        %v2950 = vld [vmem:[%s978 + $0xb8] sm:$0xf]
        %v2951 = vld [vmem:[%s978 + $0xbc] sm:$0x1]
        %v2953 = vshrl.u32 %v2904, 16
        %v2955 = vrot.slane %v2953, 4
        %v2956 = vshll.u32 %v2904, 16
        %v2958 = vrot.slane %v2956, 5
        %v2959 = vor.u32 %v2955, %v2958
        %v2960 = vrot.slane %v2959, 4
        %v2962 = vshll.u32 %v2905, 16
        %v2964 = vrot.slane %v2962, 5
        %v2965 = vsel %vm1148, %v2960, %v2964
        %v2966 = vshrl.u32 %v2905, 16
        %v2968 = vrot.slane %v2966, 4
        %v2969 = vor.u32 %v2968, %v2964
        %v2970 = vrot.slane %v2969, 4
        %v2972 = vshll.u32 %v2906, 16
        %v2974 = vrot.slane %v2972, 5
        %v2975 = vsel %vm1148, %v2970, %v2974
        %v2977 = vshrl.u32 %v2907, 16
        %v2979 = vrot.slane %v2977, 4
        %v2980 = vshll.u32 %v2907, 16
        %v2982 = vrot.slane %v2980, 5
        %v2983 = vor.u32 %v2979, %v2982
        %v2984 = vrot.slane %v2983, 4
        %v2986 = vshll.u32 %v2908, 16
        %v2988 = vrot.slane %v2986, 5
        %v2989 = vsel %vm1148, %v2984, %v2988
        %v2990 = vshrl.u32 %v2908, 16
        %v2992 = vrot.slane %v2990, 4
        %v2993 = vor.u32 %v2992, %v2988
        %v2994 = vrot.slane %v2993, 4
        %v2996 = vshll.u32 %v2909, 16
        %v2998 = vrot.slane %v2996, 5
        %v2999 = vsel %vm1148, %v2994, %v2998
        %v3001 = vshrl.u32 %v2910, 16
        %v3003 = vrot.slane %v3001, 4
        %v3004 = vshll.u32 %v2910, 16
        %v3006 = vrot.slane %v3004, 5
        %v3007 = vor.u32 %v3003, %v3006
        %v3008 = vrot.slane %v3007, 4
        %v3010 = vshll.u32 %v2911, 16
        %v3012 = vrot.slane %v3010, 5
        %v3013 = vsel %vm1148, %v3008, %v3012
        %v3014 = vshrl.u32 %v2911, 16
        %v3016 = vrot.slane %v3014, 4
        %v3017 = vor.u32 %v3016, %v3012
        %v3018 = vrot.slane %v3017, 4
        %v3020 = vshll.u32 %v2912, 16
        %v3022 = vrot.slane %v3020, 5
        %v3023 = vsel %vm1148, %v3018, %v3022
        %v3025 = vshrl.u32 %v2913, 16
        %v3027 = vrot.slane %v3025, 4
        %v3028 = vshll.u32 %v2913, 16
        %v3030 = vrot.slane %v3028, 5
        %v3031 = vor.u32 %v3027, %v3030
        %v3032 = vrot.slane %v3031, 4
        %v3034 = vshll.u32 %v2914, 16
        %v3036 = vrot.slane %v3034, 5
        %v3037 = vsel %vm1148, %v3032, %v3036
        %v3038 = vshrl.u32 %v2914, 16
        %v3040 = vrot.slane %v3038, 4
        %v3041 = vor.u32 %v3040, %v3036
        %v3042 = vrot.slane %v3041, 4
        %v3044 = vshll.u32 %v2915, 16
        %v3046 = vrot.slane %v3044, 5
        %v3047 = vsel %vm1148, %v3042, %v3046
        %v3049 = vshrl.u32 %v2916, 16
        %v3051 = vrot.slane %v3049, 4
        %v3052 = vshll.u32 %v2916, 16
        %v3054 = vrot.slane %v3052, 5
        %v3055 = vor.u32 %v3051, %v3054
        %v3056 = vrot.slane %v3055, 4
        %v3058 = vshll.u32 %v2917, 16
        %v3060 = vrot.slane %v3058, 5
        %v3061 = vsel %vm1148, %v3056, %v3060
        %v3062 = vshrl.u32 %v2917, 16
        %v3064 = vrot.slane %v3062, 4
        %v3065 = vor.u32 %v3064, %v3060
        %v3066 = vrot.slane %v3065, 4
        %v3068 = vshll.u32 %v2918, 16
        %v3070 = vrot.slane %v3068, 5
        %v3071 = vsel %vm1148, %v3066, %v3070
        %v3073 = vshrl.u32 %v2919, 16
        %v3075 = vrot.slane %v3073, 4
        %v3076 = vshll.u32 %v2919, 16
        %v3078 = vrot.slane %v3076, 5
        %v3079 = vor.u32 %v3075, %v3078
        %v3080 = vrot.slane %v3079, 4
        %v3082 = vshll.u32 %v2920, 16
        %v3084 = vrot.slane %v3082, 5
        %v3085 = vsel %vm1148, %v3080, %v3084
        %v3086 = vshrl.u32 %v2920, 16
        %v3088 = vrot.slane %v3086, 4
        %v3089 = vor.u32 %v3088, %v3084
        %v3090 = vrot.slane %v3089, 4
        %v3092 = vshll.u32 %v2921, 16
        %v3094 = vrot.slane %v3092, 5
        %v3095 = vsel %vm1148, %v3090, %v3094
        %v3097 = vshrl.u32 %v2922, 16
        %v3099 = vrot.slane %v3097, 4
        %v3100 = vshll.u32 %v2922, 16
        %v3102 = vrot.slane %v3100, 5
        %v3103 = vor.u32 %v3099, %v3102
        %v3104 = vrot.slane %v3103, 4
        %v3106 = vshll.u32 %v2923, 16
        %v3108 = vrot.slane %v3106, 5
        %v3109 = vsel %vm1148, %v3104, %v3108
        %v3110 = vshrl.u32 %v2923, 16
        %v3112 = vrot.slane %v3110, 4
        %v3113 = vor.u32 %v3112, %v3108
        %v3114 = vrot.slane %v3113, 4
        %v3116 = vshll.u32 %v2924, 16
        %v3118 = vrot.slane %v3116, 5
        %v3119 = vsel %vm1148, %v3114, %v3118
        %v3121 = vshrl.u32 %v2925, 16
        %v3123 = vrot.slane %v3121, 4
        %v3124 = vshll.u32 %v2925, 16
        %v3126 = vrot.slane %v3124, 5
        %v3127 = vor.u32 %v3123, %v3126
        %v3128 = vrot.slane %v3127, 4
        %v3130 = vshll.u32 %v2926, 16
        %v3132 = vrot.slane %v3130, 5
        %v3133 = vsel %vm1148, %v3128, %v3132
        %v3134 = vshrl.u32 %v2926, 16
        %v3136 = vrot.slane %v3134, 4
        %v3137 = vor.u32 %v3136, %v3132
        %v3138 = vrot.slane %v3137, 4
        %v3140 = vshll.u32 %v2927, 16
        %v3142 = vrot.slane %v3140, 5
        %v3143 = vsel %vm1148, %v3138, %v3142
        %v3145 = vshrl.u32 %v2928, 16
        %v3147 = vrot.slane %v3145, 4
        %v3148 = vshll.u32 %v2928, 16
        %v3150 = vrot.slane %v3148, 5
        %v3151 = vor.u32 %v3147, %v3150
        %v3152 = vrot.slane %v3151, 4
        %v3154 = vshll.u32 %v2929, 16
        %v3156 = vrot.slane %v3154, 5
        %v3157 = vsel %vm1148, %v3152, %v3156
        %v3158 = vshrl.u32 %v2929, 16
        %v3160 = vrot.slane %v3158, 4
        %v3161 = vor.u32 %v3160, %v3156
        %v3162 = vrot.slane %v3161, 4
        %v3164 = vshll.u32 %v2930, 16
        %v3166 = vrot.slane %v3164, 5
        %v3167 = vsel %vm1148, %v3162, %v3166
        %v3169 = vshrl.u32 %v2931, 16
        %v3171 = vrot.slane %v3169, 4
        %v3172 = vshll.u32 %v2931, 16
        %v3174 = vrot.slane %v3172, 5
        %v3175 = vor.u32 %v3171, %v3174
        %v3176 = vrot.slane %v3175, 4
        %v3178 = vshll.u32 %v2932, 16
        %v3180 = vrot.slane %v3178, 5
        %v3181 = vsel %vm1148, %v3176, %v3180
        %v3182 = vshrl.u32 %v2932, 16
        %v3184 = vrot.slane %v3182, 4
        %v3185 = vor.u32 %v3184, %v3180
        %v3186 = vrot.slane %v3185, 4
        %v3188 = vshll.u32 %v2933, 16
        %v3190 = vrot.slane %v3188, 5
        %v3191 = vsel %vm1148, %v3186, %v3190
        %v3193 = vshrl.u32 %v2934, 16
        %v3195 = vrot.slane %v3193, 4
        %v3196 = vshll.u32 %v2934, 16
        %v3198 = vrot.slane %v3196, 5
        %v3199 = vor.u32 %v3195, %v3198
        %v3200 = vrot.slane %v3199, 4
        %v3202 = vshll.u32 %v2935, 16
        %v3204 = vrot.slane %v3202, 5
        %v3205 = vsel %vm1148, %v3200, %v3204
        %v3206 = vshrl.u32 %v2935, 16
        %v3208 = vrot.slane %v3206, 4
        %v3209 = vor.u32 %v3208, %v3204
        %v3210 = vrot.slane %v3209, 4
        %v3212 = vshll.u32 %v2936, 16
        %v3214 = vrot.slane %v3212, 5
        %v3215 = vsel %vm1148, %v3210, %v3214
        %v3217 = vshrl.u32 %v2937, 16
        %v3219 = vrot.slane %v3217, 4
        %v3220 = vshll.u32 %v2937, 16
        %v3222 = vrot.slane %v3220, 5
        %v3223 = vor.u32 %v3219, %v3222
        %v3224 = vrot.slane %v3223, 4
        %v3226 = vshll.u32 %v2938, 16
        %v3228 = vrot.slane %v3226, 5
        %v3229 = vsel %vm1148, %v3224, %v3228
        %v3230 = vshrl.u32 %v2938, 16
        %v3232 = vrot.slane %v3230, 4
        %v3233 = vor.u32 %v3232, %v3228
        %v3234 = vrot.slane %v3233, 4
        %v3236 = vshll.u32 %v2939, 16
        %v3238 = vrot.slane %v3236, 5
        %v3239 = vsel %vm1148, %v3234, %v3238
        %v3241 = vshrl.u32 %v2940, 16
        %v3243 = vrot.slane %v3241, 4
        %v3244 = vshll.u32 %v2940, 16
        %v3246 = vrot.slane %v3244, 5
        %v3247 = vor.u32 %v3243, %v3246
        %v3248 = vrot.slane %v3247, 4
        %v3250 = vshll.u32 %v2941, 16
        %v3252 = vrot.slane %v3250, 5
        %v3253 = vsel %vm1148, %v3248, %v3252
        %v3254 = vshrl.u32 %v2941, 16
        %v3256 = vrot.slane %v3254, 4
        %v3257 = vor.u32 %v3256, %v3252
        %v3258 = vrot.slane %v3257, 4
        %v3260 = vshll.u32 %v2942, 16
        %v3262 = vrot.slane %v3260, 5
        %v3263 = vsel %vm1148, %v3258, %v3262
        %v3265 = vshrl.u32 %v2943, 16
        %v3267 = vrot.slane %v3265, 4
        %v3268 = vshll.u32 %v2943, 16
        %v3270 = vrot.slane %v3268, 5
        %v3271 = vor.u32 %v3267, %v3270
        %v3272 = vrot.slane %v3271, 4
        %v3274 = vshll.u32 %v2944, 16
        %v3276 = vrot.slane %v3274, 5
        %v3277 = vsel %vm1148, %v3272, %v3276
        %v3278 = vshrl.u32 %v2944, 16
        %v3280 = vrot.slane %v3278, 4
        %v3281 = vor.u32 %v3280, %v3276
        %v3282 = vrot.slane %v3281, 4
        %v3284 = vshll.u32 %v2945, 16
        %v3286 = vrot.slane %v3284, 5
        %v3287 = vsel %vm1148, %v3282, %v3286
        %v3289 = vshrl.u32 %v2946, 16
        %v3291 = vrot.slane %v3289, 4
        %v3292 = vshll.u32 %v2946, 16
        %v3294 = vrot.slane %v3292, 5
        %v3295 = vor.u32 %v3291, %v3294
        %v3296 = vrot.slane %v3295, 4
        %v3298 = vshll.u32 %v2947, 16
        %v3300 = vrot.slane %v3298, 5
        %v3301 = vsel %vm1148, %v3296, %v3300
        %v3302 = vshrl.u32 %v2947, 16
        %v3304 = vrot.slane %v3302, 4
        %v3305 = vor.u32 %v3304, %v3300
        %v3306 = vrot.slane %v3305, 4
        %v3308 = vshll.u32 %v2948, 16
        %v3310 = vrot.slane %v3308, 5
        %v3311 = vsel %vm1148, %v3306, %v3310
        %v3313 = vshrl.u32 %v2949, 16
        %v3315 = vrot.slane %v3313, 4
        %v3316 = vshll.u32 %v2949, 16
        %v3318 = vrot.slane %v3316, 5
        %v3319 = vor.u32 %v3315, %v3318
        %v3320 = vrot.slane %v3319, 4
        %v3322 = vshll.u32 %v2950, 16
        %v3324 = vrot.slane %v3322, 5
        %v3325 = vsel %vm1148, %v3320, %v3324
        %v3326 = vshrl.u32 %v2950, 16
        %v3328 = vrot.slane %v3326, 4
        %v3329 = vor.u32 %v3328, %v3324
        %v3330 = vrot.slane %v3329, 4
        %v3332 = vshll.u32 %v2951, 16
        %v3334 = vrot.slane %v3332, 5
        %v3335 = vsel %vm1148, %v3330, %v3334
        %s3336 = scalar_lea.vmem %s3, 16
        %v3337 = vld [vmem:[%s3336] sm:$0xf]
        %v3338 = vunpack.c.l.b16 %v2965
        %v3339 = vunpack.c.l.b16 %v2975
        %v3340 = vunpack.c.l.b16 %v2989
        %v3341 = vunpack.c.l.b16 %v2999
        %v3342 = vunpack.c.l.b16 %v3013
        %v3343 = vunpack.c.l.b16 %v3023
        %v3344 = vunpack.c.l.b16 %v3037
        %v3345 = vunpack.c.l.b16 %v3047
        %v3346 = vunpack.c.l.b16 %v3061
        %v3347 = vunpack.c.l.b16 %v3071
        %v3348 = vunpack.c.l.b16 %v3085
        %v3349 = vunpack.c.l.b16 %v3095
        %v3350 = vunpack.c.l.b16 %v3109
        %v3351 = vunpack.c.l.b16 %v3119
        %v3352 = vunpack.c.l.b16 %v3133
        %v3353 = vunpack.c.l.b16 %v3143
        %v3354 = vunpack.c.l.b16 %v3157
        %v3355 = vunpack.c.l.b16 %v3167
        %v3356 = vunpack.c.l.b16 %v3181
        %v3357 = vunpack.c.l.b16 %v3191
        %v3358 = vunpack.c.l.b16 %v3205
        %v3359 = vunpack.c.l.b16 %v3215
        %v3360 = vunpack.c.l.b16 %v3229
        %v3361 = vunpack.c.l.b16 %v3239
        %v3362 = vunpack.c.l.b16 %v3253
        %v3363 = vunpack.c.l.b16 %v3263
        %v3364 = vunpack.c.l.b16 %v3277
        %v3365 = vunpack.c.l.b16 %v3287
        %v3366 = vunpack.c.l.b16 %v3301
        %v3367 = vunpack.c.l.b16 %v3311
        %v3368 = vunpack.c.l.b16 %v3325
        %v3369 = vunpack.c.l.b16 %v3335
        %v3370 = vpack.c.b16 %v3339, %v3338
        %v3371 = vpack.c.b16 %v3341, %v3340
        %v3372 = vpack.c.b16 %v3343, %v3342
        %v3373 = vpack.c.b16 %v3345, %v3344
        %v3374 = vpack.c.b16 %v3347, %v3346
        %v3375 = vpack.c.b16 %v3349, %v3348
        %v3376 = vpack.c.b16 %v3351, %v3350
        %v3377 = vpack.c.b16 %v3353, %v3352
        %v3378 = vpack.c.b16 %v3355, %v3354
        %v3379 = vpack.c.b16 %v3357, %v3356
        %v3380 = vpack.c.b16 %v3359, %v3358
        %v3381 = vpack.c.b16 %v3361, %v3360
        %v3382 = vpack.c.b16 %v3363, %v3362
        %v3383 = vpack.c.b16 %v3365, %v3364
        %v3384 = vpack.c.b16 %v3367, %v3366
        %v3385 = vpack.c.b16 %v3369, %v3368
        %v3387 = vsel %vm1583, %v3370, 0
        %v3390 = vsel %vm1583, %v3371, 0
        %v3393 = vsel %vm1583, %v3372, 0
        %v3396 = vsel %vm1583, %v3373, 0
        %v3399 = vsel %vm1583, %v3374, 0
        %v3402 = vsel %vm1583, %v3375, 0
        %v3405 = vsel %vm1583, %v3376, 0
        %v3408 = vsel %vm1583, %v3377, 0
        %v3411 = vsel %vm1583, %v3378, 0
        %v3414 = vsel %vm1583, %v3379, 0
        %v3417 = vsel %vm1583, %v3380, 0
        %v3420 = vsel %vm1583, %v3381, 0
        %v3423 = vsel %vm1583, %v3382, 0
        %v3426 = vsel %vm1583, %v3383, 0
        %v3429 = vsel %vm1583, %v3384, 0
        %v3432 = vsel %vm1583, %v3385, 0
        %v3435 = vsel %vm1632, %v3337, 0
        %3437 = vmatprep.subr.bf16.mxu0 0
        %3438 = vmatpush1.bf16.msra.mxu0 %v3435
        %3439 = vmatprep.subr.bf16.mxu0 0
        %3440 = vmatpush1.bf16.msra.mxu0 0
        %3441 = vmatprep.subr.bf16.mxu0 0
        %3442 = vmatpush1.bf16.msra.mxu0 0
        %3443 = vmatprep.subr.bf16.mxu0 0
        %3444 = vmatpush1.bf16.msra.mxu0 0
        %3445 = vmatprep.subr.bf16.mxu0 0
        %3446 = vmatpush1.bf16.msra.mxu0 0
        %3447 = vmatprep.subr.bf16.mxu0 0
        %3448 = vmatpush1.bf16.msra.mxu0 0
        %3449 = vmatprep.subr.bf16.mxu0 0
        %3450 = vmatpush1.bf16.msra.mxu0 0
        %3451 = vmatprep.subr.bf16.mxu0 0
        %3452 = vmatpush1.bf16.msra.mxu0 0
        %3453 = vmatprep.subr.bf16.mxu0 0
        %3454 = vmatpush1.bf16.msra.mxu0 0
        %3455 = vmatprep.subr.bf16.mxu0 0
        %3456 = vmatpush1.bf16.msra.mxu0 0
        %3457 = vmatprep.subr.bf16.mxu0 0
        %3458 = vmatpush1.bf16.msra.mxu0 0
        %3459 = vmatprep.subr.bf16.mxu0 0
        %3460 = vmatpush1.bf16.msra.mxu0 0
        %3461 = vmatprep.subr.bf16.mxu0 0
        %3462 = vmatpush1.bf16.msra.mxu0 0
        %3463 = vmatprep.subr.bf16.mxu0 0
        %3464 = vmatpush1.bf16.msra.mxu0 0
        %3465 = vmatprep.subr.bf16.mxu0 0
        %3466 = vmatpush1.bf16.msra.mxu0 0
        %3467 = vmatprep.subr.bf16.mxu0 0
        %3468 = vmatpush1.bf16.msra.mxu0 0
        %3469 = vmatprep.mubr.bf16.mxu0 0
        %3470 = vmatmul.mubr.bf16.gmra.mrb[0].mxu0 %v3387
        %v3471 = vpop.f32.mrb[0].mxu0
        %v3472 = vadd.f32 0.0, %v3471
        %v3473 = vpop.f32.mrb[0].mxu0
        %v3474 = vpop.f32.mrb[0].mxu0
        %v3475 = vadd.f32 0.0, %v3474
        %v3476 = vpop.f32.mrb[0].mxu0
        %3477 = vmatprep.mubr.bf16.mxu0 0
        %3478 = vmatmul.mubr.bf16.gmra.mrb[0].mxu0 %v3390
        %v3479 = vpop.f32.mrb[0].mxu0
        %v3480 = vadd.f32 0.0, %v3479
        %v3481 = vpop.f32.mrb[0].mxu0
        %v3482 = vpop.f32.mrb[0].mxu0
        %v3483 = vadd.f32 0.0, %v3482
        %v3484 = vpop.f32.mrb[0].mxu0
        %3485 = vmatprep.mubr.bf16.mxu0 0
        %3486 = vmatmul.mubr.bf16.gmra.mrb[0].mxu0 %v3393
        %v3487 = vpop.f32.mrb[0].mxu0
        %v3488 = vadd.f32 0.0, %v3487
        %v3489 = vpop.f32.mrb[0].mxu0
        %v3490 = vpop.f32.mrb[0].mxu0
        %v3491 = vadd.f32 0.0, %v3490
        %v3492 = vpop.f32.mrb[0].mxu0
        %3493 = vmatprep.mubr.bf16.mxu0 0
        %3494 = vmatmul.mubr.bf16.gmra.mrb[0].mxu0 %v3396
        %v3495 = vpop.f32.mrb[0].mxu0
        %v3496 = vadd.f32 0.0, %v3495
        %v3497 = vpop.f32.mrb[0].mxu0
        %v3498 = vpop.f32.mrb[0].mxu0
        %v3499 = vadd.f32 0.0, %v3498
        %v3500 = vpop.f32.mrb[0].mxu0
        %3501 = vmatprep.mubr.bf16.mxu0 0
        %3502 = vmatmul.mubr.bf16.gmra.mrb[0].mxu0 %v3399
        %v3503 = vpop.f32.mrb[0].mxu0
        %v3504 = vadd.f32 0.0, %v3503
        %v3505 = vpop.f32.mrb[0].mxu0
        %v3506 = vpop.f32.mrb[0].mxu0
        %v3507 = vadd.f32 0.0, %v3506
        %v3508 = vpop.f32.mrb[0].mxu0
        %3509 = vmatprep.mubr.bf16.mxu0 0
        %3510 = vmatmul.mubr.bf16.gmra.mrb[0].mxu0 %v3402
        %v3511 = vpop.f32.mrb[0].mxu0
        %v3512 = vadd.f32 0.0, %v3511
        %v3513 = vpop.f32.mrb[0].mxu0
        %v3514 = vpop.f32.mrb[0].mxu0
        %v3515 = vadd.f32 0.0, %v3514
        %v3516 = vpop.f32.mrb[0].mxu0
        %3517 = vmatprep.mubr.bf16.mxu0 0
        %3518 = vmatmul.mubr.bf16.gmra.mrb[0].mxu0 %v3405
        %v3519 = vpop.f32.mrb[0].mxu0
        %v3520 = vadd.f32 0.0, %v3519
        %v3521 = vpop.f32.mrb[0].mxu0
        %v3522 = vpop.f32.mrb[0].mxu0
        %v3523 = vadd.f32 0.0, %v3522
        %v3524 = vpop.f32.mrb[0].mxu0
        %3525 = vmatprep.mubr.bf16.mxu0 0
        %3526 = vmatmul.mubr.bf16.gmra.mrb[0].mxu0 %v3408
        %v3527 = vpop.f32.mrb[0].mxu0
        %v3528 = vadd.f32 0.0, %v3527
        %v3529 = vpop.f32.mrb[0].mxu0
        %v3530 = vpop.f32.mrb[0].mxu0
        %v3531 = vadd.f32 0.0, %v3530
        %v3532 = vpop.f32.mrb[0].mxu0
        %3533 = vmatprep.mubr.bf16.mxu0 0
        %3534 = vmatmul.mubr.bf16.gmra.mrb[0].mxu0 %v3411
        %v3535 = vpop.f32.mrb[0].mxu0
        %v3536 = vadd.f32 0.0, %v3535
        %v3537 = vpop.f32.mrb[0].mxu0
        %v3538 = vpop.f32.mrb[0].mxu0
        %v3539 = vadd.f32 0.0, %v3538
        %v3540 = vpop.f32.mrb[0].mxu0
        %3541 = vmatprep.mubr.bf16.mxu0 0
        %3542 = vmatmul.mubr.bf16.gmra.mrb[0].mxu0 %v3414
        %v3543 = vpop.f32.mrb[0].mxu0
        %v3544 = vadd.f32 0.0, %v3543
        %v3545 = vpop.f32.mrb[0].mxu0
        %v3546 = vpop.f32.mrb[0].mxu0
        %v3547 = vadd.f32 0.0, %v3546
        %v3548 = vpop.f32.mrb[0].mxu0
        %3549 = vmatprep.mubr.bf16.mxu0 0
        %3550 = vmatmul.mubr.bf16.gmra.mrb[0].mxu0 %v3417
        %v3551 = vpop.f32.mrb[0].mxu0
        %v3552 = vadd.f32 0.0, %v3551
        %v3553 = vpop.f32.mrb[0].mxu0
        %v3554 = vpop.f32.mrb[0].mxu0
        %v3555 = vadd.f32 0.0, %v3554
        %v3556 = vpop.f32.mrb[0].mxu0
        %3557 = vmatprep.mubr.bf16.mxu0 0
        %3558 = vmatmul.mubr.bf16.gmra.mrb[0].mxu0 %v3420
        %v3559 = vpop.f32.mrb[0].mxu0
        %v3560 = vadd.f32 0.0, %v3559
        %v3561 = vpop.f32.mrb[0].mxu0
        %v3562 = vpop.f32.mrb[0].mxu0
        %v3563 = vadd.f32 0.0, %v3562
        %v3564 = vpop.f32.mrb[0].mxu0
        %3565 = vmatprep.mubr.bf16.mxu0 0
        %3566 = vmatmul.mubr.bf16.gmra.mrb[0].mxu0 %v3423
        %v3567 = vpop.f32.mrb[0].mxu0
        %v3568 = vadd.f32 0.0, %v3567
        %v3569 = vpop.f32.mrb[0].mxu0
        %v3570 = vpop.f32.mrb[0].mxu0
        %v3571 = vadd.f32 0.0, %v3570
        %v3572 = vpop.f32.mrb[0].mxu0
        %3573 = vmatprep.mubr.bf16.mxu0 0
        %3574 = vmatmul.mubr.bf16.gmra.mrb[0].mxu0 %v3426
        %v3575 = vpop.f32.mrb[0].mxu0
        %v3576 = vadd.f32 0.0, %v3575
        %v3577 = vpop.f32.mrb[0].mxu0
        %v3578 = vpop.f32.mrb[0].mxu0
        %v3579 = vadd.f32 0.0, %v3578
        %v3580 = vpop.f32.mrb[0].mxu0
        %3581 = vmatprep.mubr.bf16.mxu0 0
        %3582 = vmatmul.mubr.bf16.gmra.mrb[0].mxu0 %v3429
        %v3583 = vpop.f32.mrb[0].mxu0
        %v3584 = vadd.f32 0.0, %v3583
        %v3585 = vpop.f32.mrb[0].mxu0
        %v3586 = vpop.f32.mrb[0].mxu0
        %v3587 = vadd.f32 0.0, %v3586
        %v3588 = vpop.f32.mrb[0].mxu0
        %3589 = vmatprep.mubr.bf16.mxu0 0
        %3590 = vmatmul.mubr.bf16.gmra.mrb[0].mxu0 %v3432
        %v3591 = vpop.f32.mrb[0].mxu0
        %v3592 = vadd.f32 0.0, %v3591
        %v3593 = vpop.f32.mrb[0].mxu0
        %v3594 = vpop.f32.mrb[0].mxu0
        %v3595 = vadd.f32 0.0, %v3594
        %v3596 = vpop.f32.mrb[0].mxu0
        %3597 = vdwg.mxu0
        %v3598 = vadd.f32 %v2872, %v3472
        %v3599 = vadd.f32 %v2873, %v3475
        %v3600 = vadd.f32 %v2874, %v3480
        %v3601 = vadd.f32 %v2875, %v3483
        %v3602 = vadd.f32 %v2876, %v3488
        %v3603 = vadd.f32 %v2877, %v3491
        %v3604 = vadd.f32 %v2878, %v3496
        %v3605 = vadd.f32 %v2879, %v3499
        %v3606 = vadd.f32 %v2880, %v3504
        %v3607 = vadd.f32 %v2881, %v3507
        %v3608 = vadd.f32 %v2882, %v3512
        %v3609 = vadd.f32 %v2883, %v3515
        %v3610 = vadd.f32 %v2884, %v3520
        %v3611 = vadd.f32 %v2885, %v3523
        %v3612 = vadd.f32 %v2886, %v3528
        %v3613 = vadd.f32 %v2887, %v3531
        %v3614 = vadd.f32 %v2888, %v3536
        %v3615 = vadd.f32 %v2889, %v3539
        %v3616 = vadd.f32 %v2890, %v3544
        %v3617 = vadd.f32 %v2891, %v3547
        %v3618 = vadd.f32 %v2892, %v3552
        %v3619 = vadd.f32 %v2893, %v3555
        %v3620 = vadd.f32 %v2894, %v3560
        %v3621 = vadd.f32 %v2895, %v3563
        %v3622 = vadd.f32 %v2896, %v3568
        %v3623 = vadd.f32 %v2897, %v3571
        %v3624 = vadd.f32 %v2898, %v3576
        %v3625 = vadd.f32 %v2899, %v3579
        %v3626 = vadd.f32 %v2900, %v3584
        %v3627 = vadd.f32 %v2901, %v3587
        %v3628 = vadd.f32 %v2902, %v3592
        %v3629 = vadd.f32 %v2903, %v3595
        %v3630 = vld [vmem:[%s978] sm:$0xe]
        %v3631 = vld [vmem:[%s978 + $0xc] sm:$0xe]
        %v3632 = vld [vmem:[%s978 + $0x18] sm:$0xe]
        %v3633 = vld [vmem:[%s978 + $0x24] sm:$0xe]
        %v3634 = vld [vmem:[%s978 + $0x30] sm:$0xe]
        %v3635 = vld [vmem:[%s978 + $0x3c] sm:$0xe]
        %v3636 = vld [vmem:[%s978 + $0x48] sm:$0xe]
        %v3637 = vld [vmem:[%s978 + $0x54] sm:$0xe]
        %v3638 = vld [vmem:[%s978 + $0x60] sm:$0xe]
        %v3639 = vld [vmem:[%s978 + $0x6c] sm:$0xe]
        %v3640 = vld [vmem:[%s978 + $0x78] sm:$0xe]
        %v3641 = vld [vmem:[%s978 + $0x84] sm:$0xe]
        %v3642 = vld [vmem:[%s978 + $0x90] sm:$0xe]
        %v3643 = vld [vmem:[%s978 + $0x9c] sm:$0xe]
        %v3644 = vld [vmem:[%s978 + $0xa8] sm:$0xe]
        %v3645 = vld [vmem:[%s978 + $0xb4] sm:$0xe]
        %v3694 = vrot.slane %v3630, 5
        %v3695 = vrot.slane %v3694, 4
        %v3696 = vrot.slane %v2905, 5
        %v3697 = vsel %vm2139, %v3695, %v3696
        %v3698 = vrot.slane %v3696, 4
        %v3699 = vrot.slane %v2906, 5
        %v3700 = vsel %vm2139, %v3698, %v3699
        %v3701 = vrot.slane %v3631, 5
        %v3702 = vrot.slane %v3701, 4
        %v3703 = vrot.slane %v2908, 5
        %v3704 = vsel %vm2139, %v3702, %v3703
        %v3705 = vrot.slane %v3703, 4
        %v3706 = vrot.slane %v2909, 5
        %v3707 = vsel %vm2139, %v3705, %v3706
        %v3708 = vrot.slane %v3632, 5
        %v3709 = vrot.slane %v3708, 4
        %v3710 = vrot.slane %v2911, 5
        %v3711 = vsel %vm2139, %v3709, %v3710
        %v3712 = vrot.slane %v3710, 4
        %v3713 = vrot.slane %v2912, 5
        %v3714 = vsel %vm2139, %v3712, %v3713
        %v3715 = vrot.slane %v3633, 5
        %v3716 = vrot.slane %v3715, 4
        %v3717 = vrot.slane %v2914, 5
        %v3718 = vsel %vm2139, %v3716, %v3717
        %v3719 = vrot.slane %v3717, 4
        %v3720 = vrot.slane %v2915, 5
        %v3721 = vsel %vm2139, %v3719, %v3720
        %v3722 = vrot.slane %v3634, 5
        %v3723 = vrot.slane %v3722, 4
        %v3724 = vrot.slane %v2917, 5
        %v3725 = vsel %vm2139, %v3723, %v3724
        %v3726 = vrot.slane %v3724, 4
        %v3727 = vrot.slane %v2918, 5
        %v3728 = vsel %vm2139, %v3726, %v3727
        %v3729 = vrot.slane %v3635, 5
        %v3730 = vrot.slane %v3729, 4
        %v3731 = vrot.slane %v2920, 5
        %v3732 = vsel %vm2139, %v3730, %v3731
        %v3733 = vrot.slane %v3731, 4
        %v3734 = vrot.slane %v2921, 5
        %v3735 = vsel %vm2139, %v3733, %v3734
        %v3736 = vrot.slane %v3636, 5
        %v3737 = vrot.slane %v3736, 4
        %v3738 = vrot.slane %v2923, 5
        %v3739 = vsel %vm2139, %v3737, %v3738
        %v3740 = vrot.slane %v3738, 4
        %v3741 = vrot.slane %v2924, 5
        %v3742 = vsel %vm2139, %v3740, %v3741
        %v3743 = vrot.slane %v3637, 5
        %v3744 = vrot.slane %v3743, 4
        %v3745 = vrot.slane %v2926, 5
        %v3746 = vsel %vm2139, %v3744, %v3745
        %v3747 = vrot.slane %v3745, 4
        %v3748 = vrot.slane %v2927, 5
        %v3749 = vsel %vm2139, %v3747, %v3748
        %v3750 = vrot.slane %v3638, 5
        %v3751 = vrot.slane %v3750, 4
        %v3752 = vrot.slane %v2929, 5
        %v3753 = vsel %vm2139, %v3751, %v3752
        %v3754 = vrot.slane %v3752, 4
        %v3755 = vrot.slane %v2930, 5
        %v3756 = vsel %vm2139, %v3754, %v3755
        %v3757 = vrot.slane %v3639, 5
        %v3758 = vrot.slane %v3757, 4
        %v3759 = vrot.slane %v2932, 5
        %v3760 = vsel %vm2139, %v3758, %v3759
        %v3761 = vrot.slane %v3759, 4
        %v3762 = vrot.slane %v2933, 5
        %v3763 = vsel %vm2139, %v3761, %v3762
        %v3764 = vrot.slane %v3640, 5
        %v3765 = vrot.slane %v3764, 4
        %v3766 = vrot.slane %v2935, 5
        %v3767 = vsel %vm2139, %v3765, %v3766
        %v3768 = vrot.slane %v3766, 4
        %v3769 = vrot.slane %v2936, 5
        %v3770 = vsel %vm2139, %v3768, %v3769
        %v3771 = vrot.slane %v3641, 5
        %v3772 = vrot.slane %v3771, 4
        %v3773 = vrot.slane %v2938, 5
        %v3774 = vsel %vm2139, %v3772, %v3773
        %v3775 = vrot.slane %v3773, 4
        %v3776 = vrot.slane %v2939, 5
        %v3777 = vsel %vm2139, %v3775, %v3776
        %v3778 = vrot.slane %v3642, 5
        %v3779 = vrot.slane %v3778, 4
        %v3780 = vrot.slane %v2941, 5
        %v3781 = vsel %vm2139, %v3779, %v3780
        %v3782 = vrot.slane %v3780, 4
        %v3783 = vrot.slane %v2942, 5
        %v3784 = vsel %vm2139, %v3782, %v3783
        %v3785 = vrot.slane %v3643, 5
        %v3786 = vrot.slane %v3785, 4
        %v3787 = vrot.slane %v2944, 5
        %v3788 = vsel %vm2139, %v3786, %v3787
        %v3789 = vrot.slane %v3787, 4
        %v3790 = vrot.slane %v2945, 5
        %v3791 = vsel %vm2139, %v3789, %v3790
        %v3792 = vrot.slane %v3644, 5
        %v3793 = vrot.slane %v3792, 4
        %v3794 = vrot.slane %v2947, 5
        %v3795 = vsel %vm2139, %v3793, %v3794
        %v3796 = vrot.slane %v3794, 4
        %v3797 = vrot.slane %v2948, 5
        %v3798 = vsel %vm2139, %v3796, %v3797
        %v3799 = vrot.slane %v3645, 5
        %v3800 = vrot.slane %v3799, 4
        %v3801 = vrot.slane %v2950, 5
        %v3802 = vsel %vm2139, %v3800, %v3801
        %v3803 = vrot.slane %v3801, 4
        %v3804 = vrot.slane %v2951, 5
        %v3805 = vsel %vm2139, %v3803, %v3804
        %s3806 = scalar_lea.vmem %s3, 20
        %v3807 = vld [vmem:[%s3806] sm:$0xf]
        %v3808 = vunpack.c.l.b16 %v3697
        %v3809 = vunpack.c.l.b16 %v3700
        %v3810 = vunpack.c.l.b16 %v3704
        %v3811 = vunpack.c.l.b16 %v3707
        %v3812 = vunpack.c.l.b16 %v3711
        %v3813 = vunpack.c.l.b16 %v3714
        %v3814 = vunpack.c.l.b16 %v3718
        %v3815 = vunpack.c.l.b16 %v3721
        %v3816 = vunpack.c.l.b16 %v3725
        %v3817 = vunpack.c.l.b16 %v3728
        %v3818 = vunpack.c.l.b16 %v3732
        %v3819 = vunpack.c.l.b16 %v3735
        %v3820 = vunpack.c.l.b16 %v3739
        %v3821 = vunpack.c.l.b16 %v3742
        %v3822 = vunpack.c.l.b16 %v3746
        %v3823 = vunpack.c.l.b16 %v3749
        %v3824 = vunpack.c.l.b16 %v3753
        %v3825 = vunpack.c.l.b16 %v3756
        %v3826 = vunpack.c.l.b16 %v3760
        %v3827 = vunpack.c.l.b16 %v3763
        %v3828 = vunpack.c.l.b16 %v3767
        %v3829 = vunpack.c.l.b16 %v3770
        %v3830 = vunpack.c.l.b16 %v3774
        %v3831 = vunpack.c.l.b16 %v3777
        %v3832 = vunpack.c.l.b16 %v3781
        %v3833 = vunpack.c.l.b16 %v3784
        %v3834 = vunpack.c.l.b16 %v3788
        %v3835 = vunpack.c.l.b16 %v3791
        %v3836 = vunpack.c.l.b16 %v3795
        %v3837 = vunpack.c.l.b16 %v3798
        %v3838 = vunpack.c.l.b16 %v3802
        %v3839 = vunpack.c.l.b16 %v3805
        %v3840 = vpack.c.b16 %v3809, %v3808
        %v3841 = vpack.c.b16 %v3811, %v3810
        %v3842 = vpack.c.b16 %v3813, %v3812
        %v3843 = vpack.c.b16 %v3815, %v3814
        %v3844 = vpack.c.b16 %v3817, %v3816
        %v3845 = vpack.c.b16 %v3819, %v3818
        %v3846 = vpack.c.b16 %v3821, %v3820
        %v3847 = vpack.c.b16 %v3823, %v3822
        %v3848 = vpack.c.b16 %v3825, %v3824
        %v3849 = vpack.c.b16 %v3827, %v3826
        %v3850 = vpack.c.b16 %v3829, %v3828
        %v3851 = vpack.c.b16 %v3831, %v3830
        %v3852 = vpack.c.b16 %v3833, %v3832
        %v3853 = vpack.c.b16 %v3835, %v3834
        %v3854 = vpack.c.b16 %v3837, %v3836
        %v3855 = vpack.c.b16 %v3839, %v3838
        %v3857 = vsel %vm1583, %v3840, 0
        %v3860 = vsel %vm1583, %v3841, 0
        %v3863 = vsel %vm1583, %v3842, 0
        %v3866 = vsel %vm1583, %v3843, 0
        %v3869 = vsel %vm1583, %v3844, 0
        %v3872 = vsel %vm1583, %v3845, 0
        %v3875 = vsel %vm1583, %v3846, 0
        %v3878 = vsel %vm1583, %v3847, 0
        %v3881 = vsel %vm1583, %v3848, 0
        %v3884 = vsel %vm1583, %v3849, 0
        %v3887 = vsel %vm1583, %v3850, 0
        %v3890 = vsel %vm1583, %v3851, 0
        %v3893 = vsel %vm1583, %v3852, 0
        %v3896 = vsel %vm1583, %v3853, 0
        %v3899 = vsel %vm1583, %v3854, 0
        %v3902 = vsel %vm1583, %v3855, 0
        %v3905 = vsel %vm1632, %v3807, 0
        %3907 = vmatprep.subr.bf16.mxu0 0
        %3908 = vmatpush1.bf16.msra.mxu0 %v3905
        %3909 = vmatprep.subr.bf16.mxu0 0
        %3910 = vmatpush1.bf16.msra.mxu0 0
        %3911 = vmatprep.subr.bf16.mxu0 0
        %3912 = vmatpush1.bf16.msra.mxu0 0
        %3913 = vmatprep.subr.bf16.mxu0 0
        %3914 = vmatpush1.bf16.msra.mxu0 0
        %3915 = vmatprep.subr.bf16.mxu0 0
        %3916 = vmatpush1.bf16.msra.mxu0 0
        %3917 = vmatprep.subr.bf16.mxu0 0
        %3918 = vmatpush1.bf16.msra.mxu0 0
        %3919 = vmatprep.subr.bf16.mxu0 0
        %3920 = vmatpush1.bf16.msra.mxu0 0
        %3921 = vmatprep.subr.bf16.mxu0 0
        %3922 = vmatpush1.bf16.msra.mxu0 0
        %3923 = vmatprep.subr.bf16.mxu0 0
        %3924 = vmatpush1.bf16.msra.mxu0 0
        %3925 = vmatprep.subr.bf16.mxu0 0
        %3926 = vmatpush1.bf16.msra.mxu0 0
        %3927 = vmatprep.subr.bf16.mxu0 0
        %3928 = vmatpush1.bf16.msra.mxu0 0
        %3929 = vmatprep.subr.bf16.mxu0 0
        %3930 = vmatpush1.bf16.msra.mxu0 0
        %3931 = vmatprep.subr.bf16.mxu0 0
        %3932 = vmatpush1.bf16.msra.mxu0 0
        %3933 = vmatprep.subr.bf16.mxu0 0
        %3934 = vmatpush1.bf16.msra.mxu0 0
        %3935 = vmatprep.subr.bf16.mxu0 0
        %3936 = vmatpush1.bf16.msra.mxu0 0
        %3937 = vmatprep.subr.bf16.mxu0 0
        %3938 = vmatpush1.bf16.msra.mxu0 0
        %3939 = vmatprep.mubr.bf16.mxu0 0
        %3940 = vmatmul.mubr.bf16.gmra.mrb[0].mxu0 %v3857
        %v3941 = vpop.f32.mrb[0].mxu0
        %v3942 = vadd.f32 0.0, %v3941
        %v3943 = vpop.f32.mrb[0].mxu0
        %v3944 = vpop.f32.mrb[0].mxu0
        %v3945 = vadd.f32 0.0, %v3944
        %v3946 = vpop.f32.mrb[0].mxu0
        %3947 = vmatprep.mubr.bf16.mxu0 0
        %3948 = vmatmul.mubr.bf16.gmra.mrb[0].mxu0 %v3860
        %v3949 = vpop.f32.mrb[0].mxu0
        %v3950 = vadd.f32 0.0, %v3949
        %v3951 = vpop.f32.mrb[0].mxu0
        %v3952 = vpop.f32.mrb[0].mxu0
        %v3953 = vadd.f32 0.0, %v3952
        %v3954 = vpop.f32.mrb[0].mxu0
        %3955 = vmatprep.mubr.bf16.mxu0 0
        %3956 = vmatmul.mubr.bf16.gmra.mrb[0].mxu0 %v3863
        %v3957 = vpop.f32.mrb[0].mxu0
        %v3958 = vadd.f32 0.0, %v3957
        %v3959 = vpop.f32.mrb[0].mxu0
        %v3960 = vpop.f32.mrb[0].mxu0
        %v3961 = vadd.f32 0.0, %v3960
        %v3962 = vpop.f32.mrb[0].mxu0
        %3963 = vmatprep.mubr.bf16.mxu0 0
        %3964 = vmatmul.mubr.bf16.gmra.mrb[0].mxu0 %v3866
        %v3965 = vpop.f32.mrb[0].mxu0
        %v3966 = vadd.f32 0.0, %v3965
        %v3967 = vpop.f32.mrb[0].mxu0
        %v3968 = vpop.f32.mrb[0].mxu0
        %v3969 = vadd.f32 0.0, %v3968
        %v3970 = vpop.f32.mrb[0].mxu0
        %3971 = vmatprep.mubr.bf16.mxu0 0
        %3972 = vmatmul.mubr.bf16.gmra.mrb[0].mxu0 %v3869
        %v3973 = vpop.f32.mrb[0].mxu0
        %v3974 = vadd.f32 0.0, %v3973
        %v3975 = vpop.f32.mrb[0].mxu0
        %v3976 = vpop.f32.mrb[0].mxu0
        %v3977 = vadd.f32 0.0, %v3976
        %v3978 = vpop.f32.mrb[0].mxu0
        %3979 = vmatprep.mubr.bf16.mxu0 0
        %3980 = vmatmul.mubr.bf16.gmra.mrb[0].mxu0 %v3872
        %v3981 = vpop.f32.mrb[0].mxu0
        %v3982 = vadd.f32 0.0, %v3981
        %v3983 = vpop.f32.mrb[0].mxu0
        %v3984 = vpop.f32.mrb[0].mxu0
        %v3985 = vadd.f32 0.0, %v3984
        %v3986 = vpop.f32.mrb[0].mxu0
        %3987 = vmatprep.mubr.bf16.mxu0 0
        %3988 = vmatmul.mubr.bf16.gmra.mrb[0].mxu0 %v3875
        %v3989 = vpop.f32.mrb[0].mxu0
        %v3990 = vadd.f32 0.0, %v3989
        %v3991 = vpop.f32.mrb[0].mxu0
        %v3992 = vpop.f32.mrb[0].mxu0
        %v3993 = vadd.f32 0.0, %v3992
        %v3994 = vpop.f32.mrb[0].mxu0
        %3995 = vmatprep.mubr.bf16.mxu0 0
        %3996 = vmatmul.mubr.bf16.gmra.mrb[0].mxu0 %v3878
        %v3997 = vpop.f32.mrb[0].mxu0
        %v3998 = vadd.f32 0.0, %v3997
        %v3999 = vpop.f32.mrb[0].mxu0
        %v4000 = vpop.f32.mrb[0].mxu0
        %v4001 = vadd.f32 0.0, %v4000
        %v4002 = vpop.f32.mrb[0].mxu0
        %4003 = vmatprep.mubr.bf16.mxu0 0
        %4004 = vmatmul.mubr.bf16.gmra.mrb[0].mxu0 %v3881
        %v4005 = vpop.f32.mrb[0].mxu0
        %v4006 = vadd.f32 0.0, %v4005
        %v4007 = vpop.f32.mrb[0].mxu0
        %v4008 = vpop.f32.mrb[0].mxu0
        %v4009 = vadd.f32 0.0, %v4008
        %v4010 = vpop.f32.mrb[0].mxu0
        %4011 = vmatprep.mubr.bf16.mxu0 0
        %4012 = vmatmul.mubr.bf16.gmra.mrb[0].mxu0 %v3884
        %v4013 = vpop.f32.mrb[0].mxu0
        %v4014 = vadd.f32 0.0, %v4013
        %v4015 = vpop.f32.mrb[0].mxu0
        %v4016 = vpop.f32.mrb[0].mxu0
        %v4017 = vadd.f32 0.0, %v4016
        %v4018 = vpop.f32.mrb[0].mxu0
        %4019 = vmatprep.mubr.bf16.mxu0 0
        %4020 = vmatmul.mubr.bf16.gmra.mrb[0].mxu0 %v3887
        %v4021 = vpop.f32.mrb[0].mxu0
        %v4022 = vadd.f32 0.0, %v4021
        %v4023 = vpop.f32.mrb[0].mxu0
        %v4024 = vpop.f32.mrb[0].mxu0
        %v4025 = vadd.f32 0.0, %v4024
        %v4026 = vpop.f32.mrb[0].mxu0
        %4027 = vmatprep.mubr.bf16.mxu0 0
        %4028 = vmatmul.mubr.bf16.gmra.mrb[0].mxu0 %v3890
        %v4029 = vpop.f32.mrb[0].mxu0
        %v4030 = vadd.f32 0.0, %v4029
        %v4031 = vpop.f32.mrb[0].mxu0
        %v4032 = vpop.f32.mrb[0].mxu0
        %v4033 = vadd.f32 0.0, %v4032
        %v4034 = vpop.f32.mrb[0].mxu0
        %4035 = vmatprep.mubr.bf16.mxu0 0
        %4036 = vmatmul.mubr.bf16.gmra.mrb[0].mxu0 %v3893
        %v4037 = vpop.f32.mrb[0].mxu0
        %v4038 = vadd.f32 0.0, %v4037
        %v4039 = vpop.f32.mrb[0].mxu0
        %v4040 = vpop.f32.mrb[0].mxu0
        %v4041 = vadd.f32 0.0, %v4040
        %v4042 = vpop.f32.mrb[0].mxu0
        %4043 = vmatprep.mubr.bf16.mxu0 0
        %4044 = vmatmul.mubr.bf16.gmra.mrb[0].mxu0 %v3896
        %v4045 = vpop.f32.mrb[0].mxu0
        %v4046 = vadd.f32 0.0, %v4045
        %v4047 = vpop.f32.mrb[0].mxu0
        %v4048 = vpop.f32.mrb[0].mxu0
        %v4049 = vadd.f32 0.0, %v4048
        %v4050 = vpop.f32.mrb[0].mxu0
        %4051 = vmatprep.mubr.bf16.mxu0 0
        %4052 = vmatmul.mubr.bf16.gmra.mrb[0].mxu0 %v3899
        %v4053 = vpop.f32.mrb[0].mxu0
        %v4054 = vadd.f32 0.0, %v4053
        %v4055 = vpop.f32.mrb[0].mxu0
        %v4056 = vpop.f32.mrb[0].mxu0
        %v4057 = vadd.f32 0.0, %v4056
        %v4058 = vpop.f32.mrb[0].mxu0
        %4059 = vmatprep.mubr.bf16.mxu0 0
        %4060 = vmatmul.mubr.bf16.gmra.mrb[0].mxu0 %v3902
        %v4061 = vpop.f32.mrb[0].mxu0
        %v4062 = vadd.f32 0.0, %v4061
        %v4063 = vpop.f32.mrb[0].mxu0
        %v4064 = vpop.f32.mrb[0].mxu0
        %v4065 = vadd.f32 0.0, %v4064
        %v4066 = vpop.f32.mrb[0].mxu0
        %4067 = vdwg.mxu0
        %v4068 = vadd.f32 %v3598, %v3942
        %v4069 = vadd.f32 %v3599, %v3945
        %v4070 = vadd.f32 %v3600, %v3950
        %v4071 = vadd.f32 %v3601, %v3953
        %v4072 = vadd.f32 %v3602, %v3958
        %v4073 = vadd.f32 %v3603, %v3961
        %v4074 = vadd.f32 %v3604, %v3966
        %v4075 = vadd.f32 %v3605, %v3969
        %v4076 = vadd.f32 %v3606, %v3974
        %v4077 = vadd.f32 %v3607, %v3977
        %v4078 = vadd.f32 %v3608, %v3982
        %v4079 = vadd.f32 %v3609, %v3985
        %v4080 = vadd.f32 %v3610, %v3990
        %v4081 = vadd.f32 %v3611, %v3993
        %v4082 = vadd.f32 %v3612, %v3998
        %v4083 = vadd.f32 %v3613, %v4001
        %v4084 = vadd.f32 %v3614, %v4006
        %v4085 = vadd.f32 %v3615, %v4009
        %v4086 = vadd.f32 %v3616, %v4014
        %v4087 = vadd.f32 %v3617, %v4017
        %v4088 = vadd.f32 %v3618, %v4022
        %v4089 = vadd.f32 %v3619, %v4025
        %v4090 = vadd.f32 %v3620, %v4030
        %v4091 = vadd.f32 %v3621, %v4033
        %v4092 = vadd.f32 %v3622, %v4038
        %v4093 = vadd.f32 %v3623, %v4041
        %v4094 = vadd.f32 %v3624, %v4046
        %v4095 = vadd.f32 %v3625, %v4049
        %v4096 = vadd.f32 %v3626, %v4054
        %v4097 = vadd.f32 %v3627, %v4057
        %v4098 = vadd.f32 %v3628, %v4062
        %v4099 = vadd.f32 %v3629, %v4065
        %s4100 = scalar_lea.vmem [#allocation2], 24
        %v4101 = vld [vmem:[%s4100] sm:$0xf]
        %v4102 = vld [vmem:[%s4100 + $0x4] sm:$0xf]
        %v4103 = vld [vmem:[%s4100 + $0xc] sm:$0xf]
        %v4104 = vld [vmem:[%s4100 + $0x10] sm:$0xf]
        %v4105 = vld [vmem:[%s4100 + $0x18] sm:$0xf]
        %v4106 = vld [vmem:[%s4100 + $0x1c] sm:$0xf]
        %v4107 = vld [vmem:[%s4100 + $0x24] sm:$0xf]
        %v4108 = vld [vmem:[%s4100 + $0x28] sm:$0xf]
        %v4109 = vld [vmem:[%s4100 + $0x30] sm:$0xf]
        %v4110 = vld [vmem:[%s4100 + $0x34] sm:$0xf]
        %v4111 = vld [vmem:[%s4100 + $0x3c] sm:$0xf]
        %v4112 = vld [vmem:[%s4100 + $0x40] sm:$0xf]
        %v4113 = vld [vmem:[%s4100 + $0x48] sm:$0xf]
        %v4114 = vld [vmem:[%s4100 + $0x4c] sm:$0xf]
        %v4115 = vld [vmem:[%s4100 + $0x54] sm:$0xf]
        %v4116 = vld [vmem:[%s4100 + $0x58] sm:$0xf]
        %v4117 = vld [vmem:[%s4100 + $0x60] sm:$0xf]
        %v4118 = vld [vmem:[%s4100 + $0x64] sm:$0xf]
        %v4119 = vld [vmem:[%s4100 + $0x6c] sm:$0xf]
        %v4120 = vld [vmem:[%s4100 + $0x70] sm:$0xf]
        %v4121 = vld [vmem:[%s4100 + $0x78] sm:$0xf]
        %v4122 = vld [vmem:[%s4100 + $0x7c] sm:$0xf]
        %v4123 = vld [vmem:[%s4100 + $0x84] sm:$0xf]
        %v4124 = vld [vmem:[%s4100 + $0x88] sm:$0xf]
        %v4125 = vld [vmem:[%s4100 + $0x90] sm:$0xf]
        %v4126 = vld [vmem:[%s4100 + $0x94] sm:$0xf]
        %v4127 = vld [vmem:[%s4100 + $0x9c] sm:$0xf]
        %v4128 = vld [vmem:[%s4100 + $0xa0] sm:$0xf]
        %v4129 = vld [vmem:[%s4100 + $0xa8] sm:$0xf]
        %v4130 = vld [vmem:[%s4100 + $0xac] sm:$0xf]
        %v4131 = vld [vmem:[%s4100 + $0xb4] sm:$0xf]
        %v4132 = vld [vmem:[%s4100 + $0xb8] sm:$0xf]
        %s4133 = scalar_lea.vmem %s3, 24
        %v4134 = vld [vmem:[%s4133] sm:$0xf]
        %v4167 = vunpack.c.l.b16 %v4101
        %v4168 = vunpack.c.l.b16 %v4102
        %v4169 = vunpack.c.l.b16 %v4103
        %v4170 = vunpack.c.l.b16 %v4104
        %v4171 = vunpack.c.l.b16 %v4105
        %v4172 = vunpack.c.l.b16 %v4106
        %v4173 = vunpack.c.l.b16 %v4107
        %v4174 = vunpack.c.l.b16 %v4108
        %v4175 = vunpack.c.l.b16 %v4109
        %v4176 = vunpack.c.l.b16 %v4110
        %v4177 = vunpack.c.l.b16 %v4111
        %v4178 = vunpack.c.l.b16 %v4112
        %v4179 = vunpack.c.l.b16 %v4113
        %v4180 = vunpack.c.l.b16 %v4114
        %v4181 = vunpack.c.l.b16 %v4115
        %v4182 = vunpack.c.l.b16 %v4116
        %v4183 = vunpack.c.l.b16 %v4117
        %v4184 = vunpack.c.l.b16 %v4118
        %v4185 = vunpack.c.l.b16 %v4119
        %v4186 = vunpack.c.l.b16 %v4120
        %v4187 = vunpack.c.l.b16 %v4121
        %v4188 = vunpack.c.l.b16 %v4122
        %v4189 = vunpack.c.l.b16 %v4123
        %v4190 = vunpack.c.l.b16 %v4124
        %v4191 = vunpack.c.l.b16 %v4125
        %v4192 = vunpack.c.l.b16 %v4126
        %v4193 = vunpack.c.l.b16 %v4127
        %v4194 = vunpack.c.l.b16 %v4128
        %v4195 = vunpack.c.l.b16 %v4129
        %v4196 = vunpack.c.l.b16 %v4130
        %v4197 = vunpack.c.l.b16 %v4131
        %v4198 = vunpack.c.l.b16 %v4132
        %v4199 = vpack.c.b16 %v4168, %v4167
        %v4200 = vpack.c.b16 %v4170, %v4169
        %v4201 = vpack.c.b16 %v4172, %v4171
        %v4202 = vpack.c.b16 %v4174, %v4173
        %v4203 = vpack.c.b16 %v4176, %v4175
        %v4204 = vpack.c.b16 %v4178, %v4177
        %v4205 = vpack.c.b16 %v4180, %v4179
        %v4206 = vpack.c.b16 %v4182, %v4181
        %v4207 = vpack.c.b16 %v4184, %v4183
        %v4208 = vpack.c.b16 %v4186, %v4185
        %v4209 = vpack.c.b16 %v4188, %v4187
        %v4210 = vpack.c.b16 %v4190, %v4189
        %v4211 = vpack.c.b16 %v4192, %v4191
        %v4212 = vpack.c.b16 %v4194, %v4193
        %v4213 = vpack.c.b16 %v4196, %v4195
        %v4214 = vpack.c.b16 %v4198, %v4197
        %v4216 = vsel %vm1583, %v4199, 0
        %v4219 = vsel %vm1583, %v4200, 0
        %v4222 = vsel %vm1583, %v4201, 0
        %v4225 = vsel %vm1583, %v4202, 0
        %v4228 = vsel %vm1583, %v4203, 0
        %v4231 = vsel %vm1583, %v4204, 0
        %v4234 = vsel %vm1583, %v4205, 0
        %v4237 = vsel %vm1583, %v4206, 0
        %v4240 = vsel %vm1583, %v4207, 0
        %v4243 = vsel %vm1583, %v4208, 0
        %v4246 = vsel %vm1583, %v4209, 0
        %v4249 = vsel %vm1583, %v4210, 0
        %v4252 = vsel %vm1583, %v4211, 0
        %v4255 = vsel %vm1583, %v4212, 0
        %v4258 = vsel %vm1583, %v4213, 0
        %v4261 = vsel %vm1583, %v4214, 0
        %v4264 = vsel %vm1632, %v4134, 0
        %4266 = vmatprep.subr.bf16.mxu0 0
        %4267 = vmatpush1.bf16.msra.mxu0 %v4264
        %4268 = vmatprep.subr.bf16.mxu0 0
        %4269 = vmatpush1.bf16.msra.mxu0 0
        %4270 = vmatprep.subr.bf16.mxu0 0
        %4271 = vmatpush1.bf16.msra.mxu0 0
        %4272 = vmatprep.subr.bf16.mxu0 0
        %4273 = vmatpush1.bf16.msra.mxu0 0
        %4274 = vmatprep.subr.bf16.mxu0 0
        %4275 = vmatpush1.bf16.msra.mxu0 0
        %4276 = vmatprep.subr.bf16.mxu0 0
        %4277 = vmatpush1.bf16.msra.mxu0 0
        %4278 = vmatprep.subr.bf16.mxu0 0
        %4279 = vmatpush1.bf16.msra.mxu0 0
        %4280 = vmatprep.subr.bf16.mxu0 0
        %4281 = vmatpush1.bf16.msra.mxu0 0
        %4282 = vmatprep.subr.bf16.mxu0 0
        %4283 = vmatpush1.bf16.msra.mxu0 0
        %4284 = vmatprep.subr.bf16.mxu0 0
        %4285 = vmatpush1.bf16.msra.mxu0 0
        %4286 = vmatprep.subr.bf16.mxu0 0
        %4287 = vmatpush1.bf16.msra.mxu0 0
        %4288 = vmatprep.subr.bf16.mxu0 0
        %4289 = vmatpush1.bf16.msra.mxu0 0
        %4290 = vmatprep.subr.bf16.mxu0 0
        %4291 = vmatpush1.bf16.msra.mxu0 0
        %4292 = vmatprep.subr.bf16.mxu0 0
        %4293 = vmatpush1.bf16.msra.mxu0 0
        %4294 = vmatprep.subr.bf16.mxu0 0
        %4295 = vmatpush1.bf16.msra.mxu0 0
        %4296 = vmatprep.subr.bf16.mxu0 0
        %4297 = vmatpush1.bf16.msra.mxu0 0
        %4298 = vmatprep.mubr.bf16.mxu0 0
        %4299 = vmatmul.mubr.bf16.gmra.mrb[0].mxu0 %v4216
        %v4300 = vpop.f32.mrb[0].mxu0
        %v4301 = vadd.f32 0.0, %v4300
        %v4302 = vpop.f32.mrb[0].mxu0
        %v4303 = vpop.f32.mrb[0].mxu0
        %v4304 = vadd.f32 0.0, %v4303
        %v4305 = vpop.f32.mrb[0].mxu0
        %4306 = vmatprep.mubr.bf16.mxu0 0
        %4307 = vmatmul.mubr.bf16.gmra.mrb[0].mxu0 %v4219
        %v4308 = vpop.f32.mrb[0].mxu0
        %v4309 = vadd.f32 0.0, %v4308
        %v4310 = vpop.f32.mrb[0].mxu0
        %v4311 = vpop.f32.mrb[0].mxu0
        %v4312 = vadd.f32 0.0, %v4311
        %v4313 = vpop.f32.mrb[0].mxu0
        %4314 = vmatprep.mubr.bf16.mxu0 0
        %4315 = vmatmul.mubr.bf16.gmra.mrb[0].mxu0 %v4222
        %v4316 = vpop.f32.mrb[0].mxu0
        %v4317 = vadd.f32 0.0, %v4316
        %v4318 = vpop.f32.mrb[0].mxu0
        %v4319 = vpop.f32.mrb[0].mxu0
        %v4320 = vadd.f32 0.0, %v4319
        %v4321 = vpop.f32.mrb[0].mxu0
        %4322 = vmatprep.mubr.bf16.mxu0 0
        %4323 = vmatmul.mubr.bf16.gmra.mrb[0].mxu0 %v4225
        %v4324 = vpop.f32.mrb[0].mxu0
        %v4325 = vadd.f32 0.0, %v4324
        %v4326 = vpop.f32.mrb[0].mxu0
        %v4327 = vpop.f32.mrb[0].mxu0
        %v4328 = vadd.f32 0.0, %v4327
        %v4329 = vpop.f32.mrb[0].mxu0
        %4330 = vmatprep.mubr.bf16.mxu0 0
        %4331 = vmatmul.mubr.bf16.gmra.mrb[0].mxu0 %v4228
        %v4332 = vpop.f32.mrb[0].mxu0
        %v4333 = vadd.f32 0.0, %v4332
        %v4334 = vpop.f32.mrb[0].mxu0
        %v4335 = vpop.f32.mrb[0].mxu0
        %v4336 = vadd.f32 0.0, %v4335
        %v4337 = vpop.f32.mrb[0].mxu0
        %4338 = vmatprep.mubr.bf16.mxu0 0
        %4339 = vmatmul.mubr.bf16.gmra.mrb[0].mxu0 %v4231
        %v4340 = vpop.f32.mrb[0].mxu0
        %v4341 = vadd.f32 0.0, %v4340
        %v4342 = vpop.f32.mrb[0].mxu0
        %v4343 = vpop.f32.mrb[0].mxu0
        %v4344 = vadd.f32 0.0, %v4343
        %v4345 = vpop.f32.mrb[0].mxu0
        %4346 = vmatprep.mubr.bf16.mxu0 0
        %4347 = vmatmul.mubr.bf16.gmra.mrb[0].mxu0 %v4234
        %v4348 = vpop.f32.mrb[0].mxu0
        %v4349 = vadd.f32 0.0, %v4348
        %v4350 = vpop.f32.mrb[0].mxu0
        %v4351 = vpop.f32.mrb[0].mxu0
        %v4352 = vadd.f32 0.0, %v4351
        %v4353 = vpop.f32.mrb[0].mxu0
        %4354 = vmatprep.mubr.bf16.mxu0 0
        %4355 = vmatmul.mubr.bf16.gmra.mrb[0].mxu0 %v4237
        %v4356 = vpop.f32.mrb[0].mxu0
        %v4357 = vadd.f32 0.0, %v4356
        %v4358 = vpop.f32.mrb[0].mxu0
        %v4359 = vpop.f32.mrb[0].mxu0
        %v4360 = vadd.f32 0.0, %v4359
        %v4361 = vpop.f32.mrb[0].mxu0
        %4362 = vmatprep.mubr.bf16.mxu0 0
        %4363 = vmatmul.mubr.bf16.gmra.mrb[0].mxu0 %v4240
        %v4364 = vpop.f32.mrb[0].mxu0
        %v4365 = vadd.f32 0.0, %v4364
        %v4366 = vpop.f32.mrb[0].mxu0
        %v4367 = vpop.f32.mrb[0].mxu0
        %v4368 = vadd.f32 0.0, %v4367
        %v4369 = vpop.f32.mrb[0].mxu0
        %4370 = vmatprep.mubr.bf16.mxu0 0
        %4371 = vmatmul.mubr.bf16.gmra.mrb[0].mxu0 %v4243
        %v4372 = vpop.f32.mrb[0].mxu0
        %v4373 = vadd.f32 0.0, %v4372
        %v4374 = vpop.f32.mrb[0].mxu0
        %v4375 = vpop.f32.mrb[0].mxu0
        %v4376 = vadd.f32 0.0, %v4375
        %v4377 = vpop.f32.mrb[0].mxu0
        %4378 = vmatprep.mubr.bf16.mxu0 0
        %4379 = vmatmul.mubr.bf16.gmra.mrb[0].mxu0 %v4246
        %v4380 = vpop.f32.mrb[0].mxu0
        %v4381 = vadd.f32 0.0, %v4380
        %v4382 = vpop.f32.mrb[0].mxu0
        %v4383 = vpop.f32.mrb[0].mxu0
        %v4384 = vadd.f32 0.0, %v4383
        %v4385 = vpop.f32.mrb[0].mxu0
        %4386 = vmatprep.mubr.bf16.mxu0 0
        %4387 = vmatmul.mubr.bf16.gmra.mrb[0].mxu0 %v4249
        %v4388 = vpop.f32.mrb[0].mxu0
        %v4389 = vadd.f32 0.0, %v4388
        %v4390 = vpop.f32.mrb[0].mxu0
        %v4391 = vpop.f32.mrb[0].mxu0
        %v4392 = vadd.f32 0.0, %v4391
        %v4393 = vpop.f32.mrb[0].mxu0
        %4394 = vmatprep.mubr.bf16.mxu0 0
        %4395 = vmatmul.mubr.bf16.gmra.mrb[0].mxu0 %v4252
        %v4396 = vpop.f32.mrb[0].mxu0
        %v4397 = vadd.f32 0.0, %v4396
        %v4398 = vpop.f32.mrb[0].mxu0
        %v4399 = vpop.f32.mrb[0].mxu0
        %v4400 = vadd.f32 0.0, %v4399
        %v4401 = vpop.f32.mrb[0].mxu0
        %4402 = vmatprep.mubr.bf16.mxu0 0
        %4403 = vmatmul.mubr.bf16.gmra.mrb[0].mxu0 %v4255
        %v4404 = vpop.f32.mrb[0].mxu0
        %v4405 = vadd.f32 0.0, %v4404
        %v4406 = vpop.f32.mrb[0].mxu0
        %v4407 = vpop.f32.mrb[0].mxu0
        %v4408 = vadd.f32 0.0, %v4407
        %v4409 = vpop.f32.mrb[0].mxu0
        %4410 = vmatprep.mubr.bf16.mxu0 0
        %4411 = vmatmul.mubr.bf16.gmra.mrb[0].mxu0 %v4258
        %v4412 = vpop.f32.mrb[0].mxu0
        %v4413 = vadd.f32 0.0, %v4412
        %v4414 = vpop.f32.mrb[0].mxu0
        %v4415 = vpop.f32.mrb[0].mxu0
        %v4416 = vadd.f32 0.0, %v4415
        %v4417 = vpop.f32.mrb[0].mxu0
        %4418 = vmatprep.mubr.bf16.mxu0 0
        %4419 = vmatmul.mubr.bf16.gmra.mrb[0].mxu0 %v4261
        %v4420 = vpop.f32.mrb[0].mxu0
        %v4421 = vadd.f32 0.0, %v4420
        %v4422 = vpop.f32.mrb[0].mxu0
        %v4423 = vpop.f32.mrb[0].mxu0
        %v4424 = vadd.f32 0.0, %v4423
        %v4425 = vpop.f32.mrb[0].mxu0
        %4426 = vdwg.mxu0
        %v4427 = vadd.f32 %v4068, %v4301
        %v4428 = vadd.f32 %v4069, %v4304
        %v4429 = vadd.f32 %v4070, %v4309
        %v4430 = vadd.f32 %v4071, %v4312
        %v4431 = vadd.f32 %v4072, %v4317
        %v4432 = vadd.f32 %v4073, %v4320
        %v4433 = vadd.f32 %v4074, %v4325
        %v4434 = vadd.f32 %v4075, %v4328
        %v4435 = vadd.f32 %v4076, %v4333
        %v4436 = vadd.f32 %v4077, %v4336
        %v4437 = vadd.f32 %v4078, %v4341
        %v4438 = vadd.f32 %v4079, %v4344
        %v4439 = vadd.f32 %v4080, %v4349
        %v4440 = vadd.f32 %v4081, %v4352
        %v4441 = vadd.f32 %v4082, %v4357
        %v4442 = vadd.f32 %v4083, %v4360
        %v4443 = vadd.f32 %v4084, %v4365
        %v4444 = vadd.f32 %v4085, %v4368
        %v4445 = vadd.f32 %v4086, %v4373
        %v4446 = vadd.f32 %v4087, %v4376
        %v4447 = vadd.f32 %v4088, %v4381
        %v4448 = vadd.f32 %v4089, %v4384
        %v4449 = vadd.f32 %v4090, %v4389
        %v4450 = vadd.f32 %v4091, %v4392
        %v4451 = vadd.f32 %v4092, %v4397
        %v4452 = vadd.f32 %v4093, %v4400
        %v4453 = vadd.f32 %v4094, %v4405
        %v4454 = vadd.f32 %v4095, %v4408
        %v4455 = vadd.f32 %v4096, %v4413
        %v4456 = vadd.f32 %v4097, %v4416
        %v4457 = vadd.f32 %v4098, %v4421
        %v4458 = vadd.f32 %v4099, %v4424
        %v4459 = vld [vmem:[%s4100] sm:$0xf]
        %v4460 = vld [vmem:[%s4100 + $0x4] sm:$0xf]
        %v4461 = vld [vmem:[%s4100 + $0x8] sm:$0x1]
        %v4462 = vld [vmem:[%s4100 + $0xc] sm:$0xf]
        %v4463 = vld [vmem:[%s4100 + $0x10] sm:$0xf]
        %v4464 = vld [vmem:[%s4100 + $0x14] sm:$0x1]
        %v4465 = vld [vmem:[%s4100 + $0x18] sm:$0xf]
        %v4466 = vld [vmem:[%s4100 + $0x1c] sm:$0xf]
        %v4467 = vld [vmem:[%s4100 + $0x20] sm:$0x1]
        %v4468 = vld [vmem:[%s4100 + $0x24] sm:$0xf]
        %v4469 = vld [vmem:[%s4100 + $0x28] sm:$0xf]
        %v4470 = vld [vmem:[%s4100 + $0x2c] sm:$0x1]
        %v4471 = vld [vmem:[%s4100 + $0x30] sm:$0xf]
        %v4472 = vld [vmem:[%s4100 + $0x34] sm:$0xf]
        %v4473 = vld [vmem:[%s4100 + $0x38] sm:$0x1]
        %v4474 = vld [vmem:[%s4100 + $0x3c] sm:$0xf]
        %v4475 = vld [vmem:[%s4100 + $0x40] sm:$0xf]
        %v4476 = vld [vmem:[%s4100 + $0x44] sm:$0x1]
        %v4477 = vld [vmem:[%s4100 + $0x48] sm:$0xf]
        %v4478 = vld [vmem:[%s4100 + $0x4c] sm:$0xf]
        %v4479 = vld [vmem:[%s4100 + $0x50] sm:$0x1]
        %v4480 = vld [vmem:[%s4100 + $0x54] sm:$0xf]
        %v4481 = vld [vmem:[%s4100 + $0x58] sm:$0xf]
        %v4482 = vld [vmem:[%s4100 + $0x5c] sm:$0x1]
        %v4483 = vld [vmem:[%s4100 + $0x60] sm:$0xf]
        %v4484 = vld [vmem:[%s4100 + $0x64] sm:$0xf]
        %v4485 = vld [vmem:[%s4100 + $0x68] sm:$0x1]
        %v4486 = vld [vmem:[%s4100 + $0x6c] sm:$0xf]
        %v4487 = vld [vmem:[%s4100 + $0x70] sm:$0xf]
        %v4488 = vld [vmem:[%s4100 + $0x74] sm:$0x1]
        %v4489 = vld [vmem:[%s4100 + $0x78] sm:$0xf]
        %v4490 = vld [vmem:[%s4100 + $0x7c] sm:$0xf]
        %v4491 = vld [vmem:[%s4100 + $0x80] sm:$0x1]
        %v4492 = vld [vmem:[%s4100 + $0x84] sm:$0xf]
        %v4493 = vld [vmem:[%s4100 + $0x88] sm:$0xf]
        %v4494 = vld [vmem:[%s4100 + $0x8c] sm:$0x1]
        %v4495 = vld [vmem:[%s4100 + $0x90] sm:$0xf]
        %v4496 = vld [vmem:[%s4100 + $0x94] sm:$0xf]
        %v4497 = vld [vmem:[%s4100 + $0x98] sm:$0x1]
        %v4498 = vld [vmem:[%s4100 + $0x9c] sm:$0xf]
        %v4499 = vld [vmem:[%s4100 + $0xa0] sm:$0xf]
        %v4500 = vld [vmem:[%s4100 + $0xa4] sm:$0x1]
        %v4501 = vld [vmem:[%s4100 + $0xa8] sm:$0xf]
        %v4502 = vld [vmem:[%s4100 + $0xac] sm:$0xf]
        %v4503 = vld [vmem:[%s4100 + $0xb0] sm:$0x1]
        %v4504 = vld [vmem:[%s4100 + $0xb4] sm:$0xf]
        %v4505 = vld [vmem:[%s4100 + $0xb8] sm:$0xf]
        %v4506 = vld [vmem:[%s4100 + $0xbc] sm:$0x1]
        %v4508 = vshrl.u32 %v4459, 16
        %v4510 = vrot.slane %v4508, 4
        %v4511 = vshll.u32 %v4459, 16
        %v4513 = vrot.slane %v4511, 5
        %v4514 = vor.u32 %v4510, %v4513
        %v4515 = vrot.slane %v4514, 4
        %v4517 = vshll.u32 %v4460, 16
        %v4519 = vrot.slane %v4517, 5
        %v4520 = vsel %vm1148, %v4515, %v4519
        %v4521 = vshrl.u32 %v4460, 16
        %v4523 = vrot.slane %v4521, 4
        %v4524 = vor.u32 %v4523, %v4519
        %v4525 = vrot.slane %v4524, 4
        %v4527 = vshll.u32 %v4461, 16
        %v4529 = vrot.slane %v4527, 5
        %v4530 = vsel %vm1148, %v4525, %v4529
        %v4532 = vshrl.u32 %v4462, 16
        %v4534 = vrot.slane %v4532, 4
        %v4535 = vshll.u32 %v4462, 16
        %v4537 = vrot.slane %v4535, 5
        %v4538 = vor.u32 %v4534, %v4537
        %v4539 = vrot.slane %v4538, 4
        %v4541 = vshll.u32 %v4463, 16
        %v4543 = vrot.slane %v4541, 5
        %v4544 = vsel %vm1148, %v4539, %v4543
        %v4545 = vshrl.u32 %v4463, 16
        %v4547 = vrot.slane %v4545, 4
        %v4548 = vor.u32 %v4547, %v4543
        %v4549 = vrot.slane %v4548, 4
        %v4551 = vshll.u32 %v4464, 16
        %v4553 = vrot.slane %v4551, 5
        %v4554 = vsel %vm1148, %v4549, %v4553
        %v4556 = vshrl.u32 %v4465, 16
        %v4558 = vrot.slane %v4556, 4
        %v4559 = vshll.u32 %v4465, 16
        %v4561 = vrot.slane %v4559, 5
        %v4562 = vor.u32 %v4558, %v4561
        %v4563 = vrot.slane %v4562, 4
        %v4565 = vshll.u32 %v4466, 16
        %v4567 = vrot.slane %v4565, 5
        %v4568 = vsel %vm1148, %v4563, %v4567
        %v4569 = vshrl.u32 %v4466, 16
        %v4571 = vrot.slane %v4569, 4
        %v4572 = vor.u32 %v4571, %v4567
        %v4573 = vrot.slane %v4572, 4
        %v4575 = vshll.u32 %v4467, 16
        %v4577 = vrot.slane %v4575, 5
        %v4578 = vsel %vm1148, %v4573, %v4577
        %v4580 = vshrl.u32 %v4468, 16
        %v4582 = vrot.slane %v4580, 4
        %v4583 = vshll.u32 %v4468, 16
        %v4585 = vrot.slane %v4583, 5
        %v4586 = vor.u32 %v4582, %v4585
        %v4587 = vrot.slane %v4586, 4
        %v4589 = vshll.u32 %v4469, 16
        %v4591 = vrot.slane %v4589, 5
        %v4592 = vsel %vm1148, %v4587, %v4591
        %v4593 = vshrl.u32 %v4469, 16
        %v4595 = vrot.slane %v4593, 4
        %v4596 = vor.u32 %v4595, %v4591
        %v4597 = vrot.slane %v4596, 4
        %v4599 = vshll.u32 %v4470, 16
        %v4601 = vrot.slane %v4599, 5
        %v4602 = vsel %vm1148, %v4597, %v4601
        %v4604 = vshrl.u32 %v4471, 16
        %v4606 = vrot.slane %v4604, 4
        %v4607 = vshll.u32 %v4471, 16
        %v4609 = vrot.slane %v4607, 5
        %v4610 = vor.u32 %v4606, %v4609
        %v4611 = vrot.slane %v4610, 4
        %v4613 = vshll.u32 %v4472, 16
        %v4615 = vrot.slane %v4613, 5
        %v4616 = vsel %vm1148, %v4611, %v4615
        %v4617 = vshrl.u32 %v4472, 16
        %v4619 = vrot.slane %v4617, 4
        %v4620 = vor.u32 %v4619, %v4615
        %v4621 = vrot.slane %v4620, 4
        %v4623 = vshll.u32 %v4473, 16
        %v4625 = vrot.slane %v4623, 5
        %v4626 = vsel %vm1148, %v4621, %v4625
        %v4628 = vshrl.u32 %v4474, 16
        %v4630 = vrot.slane %v4628, 4
        %v4631 = vshll.u32 %v4474, 16
        %v4633 = vrot.slane %v4631, 5
        %v4634 = vor.u32 %v4630, %v4633
        %v4635 = vrot.slane %v4634, 4
        %v4637 = vshll.u32 %v4475, 16
        %v4639 = vrot.slane %v4637, 5
        %v4640 = vsel %vm1148, %v4635, %v4639
        %v4641 = vshrl.u32 %v4475, 16
        %v4643 = vrot.slane %v4641, 4
        %v4644 = vor.u32 %v4643, %v4639
        %v4645 = vrot.slane %v4644, 4
        %v4647 = vshll.u32 %v4476, 16
        %v4649 = vrot.slane %v4647, 5
        %v4650 = vsel %vm1148, %v4645, %v4649
        %v4652 = vshrl.u32 %v4477, 16
        %v4654 = vrot.slane %v4652, 4
        %v4655 = vshll.u32 %v4477, 16
        %v4657 = vrot.slane %v4655, 5
        %v4658 = vor.u32 %v4654, %v4657
        %v4659 = vrot.slane %v4658, 4
        %v4661 = vshll.u32 %v4478, 16
        %v4663 = vrot.slane %v4661, 5
        %v4664 = vsel %vm1148, %v4659, %v4663
        %v4665 = vshrl.u32 %v4478, 16
        %v4667 = vrot.slane %v4665, 4
        %v4668 = vor.u32 %v4667, %v4663
        %v4669 = vrot.slane %v4668, 4
        %v4671 = vshll.u32 %v4479, 16
        %v4673 = vrot.slane %v4671, 5
        %v4674 = vsel %vm1148, %v4669, %v4673
        %v4676 = vshrl.u32 %v4480, 16
        %v4678 = vrot.slane %v4676, 4
        %v4679 = vshll.u32 %v4480, 16
        %v4681 = vrot.slane %v4679, 5
        %v4682 = vor.u32 %v4678, %v4681
        %v4683 = vrot.slane %v4682, 4
        %v4685 = vshll.u32 %v4481, 16
        %v4687 = vrot.slane %v4685, 5
        %v4688 = vsel %vm1148, %v4683, %v4687
        %v4689 = vshrl.u32 %v4481, 16
        %v4691 = vrot.slane %v4689, 4
        %v4692 = vor.u32 %v4691, %v4687
        %v4693 = vrot.slane %v4692, 4
        %v4695 = vshll.u32 %v4482, 16
        %v4697 = vrot.slane %v4695, 5
        %v4698 = vsel %vm1148, %v4693, %v4697
        %v4700 = vshrl.u32 %v4483, 16
        %v4702 = vrot.slane %v4700, 4
        %v4703 = vshll.u32 %v4483, 16
        %v4705 = vrot.slane %v4703, 5
        %v4706 = vor.u32 %v4702, %v4705
        %v4707 = vrot.slane %v4706, 4
        %v4709 = vshll.u32 %v4484, 16
        %v4711 = vrot.slane %v4709, 5
        %v4712 = vsel %vm1148, %v4707, %v4711
        %v4713 = vshrl.u32 %v4484, 16
        %v4715 = vrot.slane %v4713, 4
        %v4716 = vor.u32 %v4715, %v4711
        %v4717 = vrot.slane %v4716, 4
        %v4719 = vshll.u32 %v4485, 16
        %v4721 = vrot.slane %v4719, 5
        %v4722 = vsel %vm1148, %v4717, %v4721
        %v4724 = vshrl.u32 %v4486, 16
        %v4726 = vrot.slane %v4724, 4
        %v4727 = vshll.u32 %v4486, 16
        %v4729 = vrot.slane %v4727, 5
        %v4730 = vor.u32 %v4726, %v4729
        %v4731 = vrot.slane %v4730, 4
        %v4733 = vshll.u32 %v4487, 16
        %v4735 = vrot.slane %v4733, 5
        %v4736 = vsel %vm1148, %v4731, %v4735
        %v4737 = vshrl.u32 %v4487, 16
        %v4739 = vrot.slane %v4737, 4
        %v4740 = vor.u32 %v4739, %v4735
        %v4741 = vrot.slane %v4740, 4
        %v4743 = vshll.u32 %v4488, 16
        %v4745 = vrot.slane %v4743, 5
        %v4746 = vsel %vm1148, %v4741, %v4745
        %v4748 = vshrl.u32 %v4489, 16
        %v4750 = vrot.slane %v4748, 4
        %v4751 = vshll.u32 %v4489, 16
        %v4753 = vrot.slane %v4751, 5
        %v4754 = vor.u32 %v4750, %v4753
        %v4755 = vrot.slane %v4754, 4
        %v4757 = vshll.u32 %v4490, 16
        %v4759 = vrot.slane %v4757, 5
        %v4760 = vsel %vm1148, %v4755, %v4759
        %v4761 = vshrl.u32 %v4490, 16
        %v4763 = vrot.slane %v4761, 4
        %v4764 = vor.u32 %v4763, %v4759
        %v4765 = vrot.slane %v4764, 4
        %v4767 = vshll.u32 %v4491, 16
        %v4769 = vrot.slane %v4767, 5
        %v4770 = vsel %vm1148, %v4765, %v4769
        %v4772 = vshrl.u32 %v4492, 16
        %v4774 = vrot.slane %v4772, 4
        %v4775 = vshll.u32 %v4492, 16
        %v4777 = vrot.slane %v4775, 5
        %v4778 = vor.u32 %v4774, %v4777
        %v4779 = vrot.slane %v4778, 4
        %v4781 = vshll.u32 %v4493, 16
        %v4783 = vrot.slane %v4781, 5
        %v4784 = vsel %vm1148, %v4779, %v4783
        %v4785 = vshrl.u32 %v4493, 16
        %v4787 = vrot.slane %v4785, 4
        %v4788 = vor.u32 %v4787, %v4783
        %v4789 = vrot.slane %v4788, 4
        %v4791 = vshll.u32 %v4494, 16
        %v4793 = vrot.slane %v4791, 5
        %v4794 = vsel %vm1148, %v4789, %v4793
        %v4796 = vshrl.u32 %v4495, 16
        %v4798 = vrot.slane %v4796, 4
        %v4799 = vshll.u32 %v4495, 16
        %v4801 = vrot.slane %v4799, 5
        %v4802 = vor.u32 %v4798, %v4801
        %v4803 = vrot.slane %v4802, 4
        %v4805 = vshll.u32 %v4496, 16
        %v4807 = vrot.slane %v4805, 5
        %v4808 = vsel %vm1148, %v4803, %v4807
        %v4809 = vshrl.u32 %v4496, 16
        %v4811 = vrot.slane %v4809, 4
        %v4812 = vor.u32 %v4811, %v4807
        %v4813 = vrot.slane %v4812, 4
        %v4815 = vshll.u32 %v4497, 16
        %v4817 = vrot.slane %v4815, 5
        %v4818 = vsel %vm1148, %v4813, %v4817
        %v4820 = vshrl.u32 %v4498, 16
        %v4822 = vrot.slane %v4820, 4
        %v4823 = vshll.u32 %v4498, 16
        %v4825 = vrot.slane %v4823, 5
        %v4826 = vor.u32 %v4822, %v4825
        %v4827 = vrot.slane %v4826, 4
        %v4829 = vshll.u32 %v4499, 16
        %v4831 = vrot.slane %v4829, 5
        %v4832 = vsel %vm1148, %v4827, %v4831
        %v4833 = vshrl.u32 %v4499, 16
        %v4835 = vrot.slane %v4833, 4
        %v4836 = vor.u32 %v4835, %v4831
        %v4837 = vrot.slane %v4836, 4
        %v4839 = vshll.u32 %v4500, 16
        %v4841 = vrot.slane %v4839, 5
        %v4842 = vsel %vm1148, %v4837, %v4841
        %v4844 = vshrl.u32 %v4501, 16
        %v4846 = vrot.slane %v4844, 4
        %v4847 = vshll.u32 %v4501, 16
        %v4849 = vrot.slane %v4847, 5
        %v4850 = vor.u32 %v4846, %v4849
        %v4851 = vrot.slane %v4850, 4
        %v4853 = vshll.u32 %v4502, 16
        %v4855 = vrot.slane %v4853, 5
        %v4856 = vsel %vm1148, %v4851, %v4855
        %v4857 = vshrl.u32 %v4502, 16
        %v4859 = vrot.slane %v4857, 4
        %v4860 = vor.u32 %v4859, %v4855
        %v4861 = vrot.slane %v4860, 4
        %v4863 = vshll.u32 %v4503, 16
        %v4865 = vrot.slane %v4863, 5
        %v4866 = vsel %vm1148, %v4861, %v4865
        %v4868 = vshrl.u32 %v4504, 16
        %v4870 = vrot.slane %v4868, 4
        %v4871 = vshll.u32 %v4504, 16
        %v4873 = vrot.slane %v4871, 5
        %v4874 = vor.u32 %v4870, %v4873
        %v4875 = vrot.slane %v4874, 4
        %v4877 = vshll.u32 %v4505, 16
        %v4879 = vrot.slane %v4877, 5
        %v4880 = vsel %vm1148, %v4875, %v4879
        %v4881 = vshrl.u32 %v4505, 16
        %v4883 = vrot.slane %v4881, 4
        %v4884 = vor.u32 %v4883, %v4879
        %v4885 = vrot.slane %v4884, 4
        %v4887 = vshll.u32 %v4506, 16
        %v4889 = vrot.slane %v4887, 5
        %v4890 = vsel %vm1148, %v4885, %v4889
        %s4891 = scalar_lea.vmem %s3, 28
        %v4892 = vld [vmem:[%s4891] sm:$0xf]
        %v4893 = vunpack.c.l.b16 %v4520
        %v4894 = vunpack.c.l.b16 %v4530
        %v4895 = vunpack.c.l.b16 %v4544
        %v4896 = vunpack.c.l.b16 %v4554
        %v4897 = vunpack.c.l.b16 %v4568
        %v4898 = vunpack.c.l.b16 %v4578
        %v4899 = vunpack.c.l.b16 %v4592
        %v4900 = vunpack.c.l.b16 %v4602
        %v4901 = vunpack.c.l.b16 %v4616
        %v4902 = vunpack.c.l.b16 %v4626
        %v4903 = vunpack.c.l.b16 %v4640
        %v4904 = vunpack.c.l.b16 %v4650
        %v4905 = vunpack.c.l.b16 %v4664
        %v4906 = vunpack.c.l.b16 %v4674
        %v4907 = vunpack.c.l.b16 %v4688
        %v4908 = vunpack.c.l.b16 %v4698
        %v4909 = vunpack.c.l.b16 %v4712
        %v4910 = vunpack.c.l.b16 %v4722
        %v4911 = vunpack.c.l.b16 %v4736
        %v4912 = vunpack.c.l.b16 %v4746
        %v4913 = vunpack.c.l.b16 %v4760
        %v4914 = vunpack.c.l.b16 %v4770
        %v4915 = vunpack.c.l.b16 %v4784
        %v4916 = vunpack.c.l.b16 %v4794
        %v4917 = vunpack.c.l.b16 %v4808
        %v4918 = vunpack.c.l.b16 %v4818
        %v4919 = vunpack.c.l.b16 %v4832
        %v4920 = vunpack.c.l.b16 %v4842
        %v4921 = vunpack.c.l.b16 %v4856
        %v4922 = vunpack.c.l.b16 %v4866
        %v4923 = vunpack.c.l.b16 %v4880
        %v4924 = vunpack.c.l.b16 %v4890
        %v4925 = vpack.c.b16 %v4894, %v4893
        %v4926 = vpack.c.b16 %v4896, %v4895
        %v4927 = vpack.c.b16 %v4898, %v4897
        %v4928 = vpack.c.b16 %v4900, %v4899
        %v4929 = vpack.c.b16 %v4902, %v4901
        %v4930 = vpack.c.b16 %v4904, %v4903
        %v4931 = vpack.c.b16 %v4906, %v4905
        %v4932 = vpack.c.b16 %v4908, %v4907
        %v4933 = vpack.c.b16 %v4910, %v4909
        %v4934 = vpack.c.b16 %v4912, %v4911
        %v4935 = vpack.c.b16 %v4914, %v4913
        %v4936 = vpack.c.b16 %v4916, %v4915
        %v4937 = vpack.c.b16 %v4918, %v4917
        %v4938 = vpack.c.b16 %v4920, %v4919
        %v4939 = vpack.c.b16 %v4922, %v4921
        %v4940 = vpack.c.b16 %v4924, %v4923
        %v4942 = vsel %vm1583, %v4925, 0
        %v4945 = vsel %vm1583, %v4926, 0
        %v4948 = vsel %vm1583, %v4927, 0
        %v4951 = vsel %vm1583, %v4928, 0
        %v4954 = vsel %vm1583, %v4929, 0
        %v4957 = vsel %vm1583, %v4930, 0
        %v4960 = vsel %vm1583, %v4931, 0
        %v4963 = vsel %vm1583, %v4932, 0
        %v4966 = vsel %vm1583, %v4933, 0
        %v4969 = vsel %vm1583, %v4934, 0
        %v4972 = vsel %vm1583, %v4935, 0
        %v4975 = vsel %vm1583, %v4936, 0
        %v4978 = vsel %vm1583, %v4937, 0
        %v4981 = vsel %vm1583, %v4938, 0
        %v4984 = vsel %vm1583, %v4939, 0
        %v4987 = vsel %vm1583, %v4940, 0
        %v4990 = vsel %vm1632, %v4892, 0
        %4992 = vmatprep.subr.bf16.mxu0 0
        %4993 = vmatpush1.bf16.msra.mxu0 %v4990
        %4994 = vmatprep.subr.bf16.mxu0 0
        %4995 = vmatpush1.bf16.msra.mxu0 0
        %4996 = vmatprep.subr.bf16.mxu0 0
        %4997 = vmatpush1.bf16.msra.mxu0 0
        %4998 = vmatprep.subr.bf16.mxu0 0
        %4999 = vmatpush1.bf16.msra.mxu0 0
        %5000 = vmatprep.subr.bf16.mxu0 0
        %5001 = vmatpush1.bf16.msra.mxu0 0
        %5002 = vmatprep.subr.bf16.mxu0 0
        %5003 = vmatpush1.bf16.msra.mxu0 0
        %5004 = vmatprep.subr.bf16.mxu0 0
        %5005 = vmatpush1.bf16.msra.mxu0 0
        %5006 = vmatprep.subr.bf16.mxu0 0
        %5007 = vmatpush1.bf16.msra.mxu0 0
        %5008 = vmatprep.subr.bf16.mxu0 0
        %5009 = vmatpush1.bf16.msra.mxu0 0
        %5010 = vmatprep.subr.bf16.mxu0 0
        %5011 = vmatpush1.bf16.msra.mxu0 0
        %5012 = vmatprep.subr.bf16.mxu0 0
        %5013 = vmatpush1.bf16.msra.mxu0 0
        %5014 = vmatprep.subr.bf16.mxu0 0
        %5015 = vmatpush1.bf16.msra.mxu0 0
        %5016 = vmatprep.subr.bf16.mxu0 0
        %5017 = vmatpush1.bf16.msra.mxu0 0
        %5018 = vmatprep.subr.bf16.mxu0 0
        %5019 = vmatpush1.bf16.msra.mxu0 0
        %5020 = vmatprep.subr.bf16.mxu0 0
        %5021 = vmatpush1.bf16.msra.mxu0 0
        %5022 = vmatprep.subr.bf16.mxu0 0
        %5023 = vmatpush1.bf16.msra.mxu0 0
        %5024 = vmatprep.mubr.bf16.mxu0 0
        %5025 = vmatmul.mubr.bf16.gmra.mrb[0].mxu0 %v4942
        %v5026 = vpop.f32.mrb[0].mxu0
        %v5027 = vadd.f32 0.0, %v5026
        %v5028 = vpop.f32.mrb[0].mxu0
        %v5029 = vpop.f32.mrb[0].mxu0
        %v5030 = vadd.f32 0.0, %v5029
        %v5031 = vpop.f32.mrb[0].mxu0
        %5032 = vmatprep.mubr.bf16.mxu0 0
        %5033 = vmatmul.mubr.bf16.gmra.mrb[0].mxu0 %v4945
        %v5034 = vpop.f32.mrb[0].mxu0
        %v5035 = vadd.f32 0.0, %v5034
        %v5036 = vpop.f32.mrb[0].mxu0
        %v5037 = vpop.f32.mrb[0].mxu0
        %v5038 = vadd.f32 0.0, %v5037
        %v5039 = vpop.f32.mrb[0].mxu0
        %5040 = vmatprep.mubr.bf16.mxu0 0
        %5041 = vmatmul.mubr.bf16.gmra.mrb[0].mxu0 %v4948
        %v5042 = vpop.f32.mrb[0].mxu0
        %v5043 = vadd.f32 0.0, %v5042
        %v5044 = vpop.f32.mrb[0].mxu0
        %v5045 = vpop.f32.mrb[0].mxu0
        %v5046 = vadd.f32 0.0, %v5045
        %v5047 = vpop.f32.mrb[0].mxu0
        %5048 = vmatprep.mubr.bf16.mxu0 0
        %5049 = vmatmul.mubr.bf16.gmra.mrb[0].mxu0 %v4951
        %v5050 = vpop.f32.mrb[0].mxu0
        %v5051 = vadd.f32 0.0, %v5050
        %v5052 = vpop.f32.mrb[0].mxu0
        %v5053 = vpop.f32.mrb[0].mxu0
        %v5054 = vadd.f32 0.0, %v5053
        %v5055 = vpop.f32.mrb[0].mxu0
        %5056 = vmatprep.mubr.bf16.mxu0 0
        %5057 = vmatmul.mubr.bf16.gmra.mrb[0].mxu0 %v4954
        %v5058 = vpop.f32.mrb[0].mxu0
        %v5059 = vadd.f32 0.0, %v5058
        %v5060 = vpop.f32.mrb[0].mxu0
        %v5061 = vpop.f32.mrb[0].mxu0
        %v5062 = vadd.f32 0.0, %v5061
        %v5063 = vpop.f32.mrb[0].mxu0
        %5064 = vmatprep.mubr.bf16.mxu0 0
        %5065 = vmatmul.mubr.bf16.gmra.mrb[0].mxu0 %v4957
        %v5066 = vpop.f32.mrb[0].mxu0
        %v5067 = vadd.f32 0.0, %v5066
        %v5068 = vpop.f32.mrb[0].mxu0
        %v5069 = vpop.f32.mrb[0].mxu0
        %v5070 = vadd.f32 0.0, %v5069
        %v5071 = vpop.f32.mrb[0].mxu0
        %5072 = vmatprep.mubr.bf16.mxu0 0
        %5073 = vmatmul.mubr.bf16.gmra.mrb[0].mxu0 %v4960
        %v5074 = vpop.f32.mrb[0].mxu0
        %v5075 = vadd.f32 0.0, %v5074
        %v5076 = vpop.f32.mrb[0].mxu0
        %v5077 = vpop.f32.mrb[0].mxu0
        %v5078 = vadd.f32 0.0, %v5077
        %v5079 = vpop.f32.mrb[0].mxu0
        %5080 = vmatprep.mubr.bf16.mxu0 0
        %5081 = vmatmul.mubr.bf16.gmra.mrb[0].mxu0 %v4963
        %v5082 = vpop.f32.mrb[0].mxu0
        %v5083 = vadd.f32 0.0, %v5082
        %v5084 = vpop.f32.mrb[0].mxu0
        %v5085 = vpop.f32.mrb[0].mxu0
        %v5086 = vadd.f32 0.0, %v5085
        %v5087 = vpop.f32.mrb[0].mxu0
        %5088 = vmatprep.mubr.bf16.mxu0 0
        %5089 = vmatmul.mubr.bf16.gmra.mrb[0].mxu0 %v4966
        %v5090 = vpop.f32.mrb[0].mxu0
        %v5091 = vadd.f32 0.0, %v5090
        %v5092 = vpop.f32.mrb[0].mxu0
        %v5093 = vpop.f32.mrb[0].mxu0
        %v5094 = vadd.f32 0.0, %v5093
        %v5095 = vpop.f32.mrb[0].mxu0
        %5096 = vmatprep.mubr.bf16.mxu0 0
        %5097 = vmatmul.mubr.bf16.gmra.mrb[0].mxu0 %v4969
        %v5098 = vpop.f32.mrb[0].mxu0
        %v5099 = vadd.f32 0.0, %v5098
        %v5100 = vpop.f32.mrb[0].mxu0
        %v5101 = vpop.f32.mrb[0].mxu0
        %v5102 = vadd.f32 0.0, %v5101
        %v5103 = vpop.f32.mrb[0].mxu0
        %5104 = vmatprep.mubr.bf16.mxu0 0
        %5105 = vmatmul.mubr.bf16.gmra.mrb[0].mxu0 %v4972
        %v5106 = vpop.f32.mrb[0].mxu0
        %v5107 = vadd.f32 0.0, %v5106
        %v5108 = vpop.f32.mrb[0].mxu0
        %v5109 = vpop.f32.mrb[0].mxu0
        %v5110 = vadd.f32 0.0, %v5109
        %v5111 = vpop.f32.mrb[0].mxu0
        %5112 = vmatprep.mubr.bf16.mxu0 0
        %5113 = vmatmul.mubr.bf16.gmra.mrb[0].mxu0 %v4975
        %v5114 = vpop.f32.mrb[0].mxu0
        %v5115 = vadd.f32 0.0, %v5114
        %v5116 = vpop.f32.mrb[0].mxu0
        %v5117 = vpop.f32.mrb[0].mxu0
        %v5118 = vadd.f32 0.0, %v5117
        %v5119 = vpop.f32.mrb[0].mxu0
        %5120 = vmatprep.mubr.bf16.mxu0 0
        %5121 = vmatmul.mubr.bf16.gmra.mrb[0].mxu0 %v4978
        %v5122 = vpop.f32.mrb[0].mxu0
        %v5123 = vadd.f32 0.0, %v5122
        %v5124 = vpop.f32.mrb[0].mxu0
        %v5125 = vpop.f32.mrb[0].mxu0
        %v5126 = vadd.f32 0.0, %v5125
        %v5127 = vpop.f32.mrb[0].mxu0
        %5128 = vmatprep.mubr.bf16.mxu0 0
        %5129 = vmatmul.mubr.bf16.gmra.mrb[0].mxu0 %v4981
        %v5130 = vpop.f32.mrb[0].mxu0
        %v5131 = vadd.f32 0.0, %v5130
        %v5132 = vpop.f32.mrb[0].mxu0
        %v5133 = vpop.f32.mrb[0].mxu0
        %v5134 = vadd.f32 0.0, %v5133
        %v5135 = vpop.f32.mrb[0].mxu0
        %5136 = vmatprep.mubr.bf16.mxu0 0
        %5137 = vmatmul.mubr.bf16.gmra.mrb[0].mxu0 %v4984
        %v5138 = vpop.f32.mrb[0].mxu0
        %v5139 = vadd.f32 0.0, %v5138
        %v5140 = vpop.f32.mrb[0].mxu0
        %v5141 = vpop.f32.mrb[0].mxu0
        %v5142 = vadd.f32 0.0, %v5141
        %v5143 = vpop.f32.mrb[0].mxu0
        %5144 = vmatprep.mubr.bf16.mxu0 0
        %5145 = vmatmul.mubr.bf16.gmra.mrb[0].mxu0 %v4987
        %v5146 = vpop.f32.mrb[0].mxu0
        %v5147 = vadd.f32 0.0, %v5146
        %v5148 = vpop.f32.mrb[0].mxu0
        %v5149 = vpop.f32.mrb[0].mxu0
        %v5150 = vadd.f32 0.0, %v5149
        %v5151 = vpop.f32.mrb[0].mxu0
        %5152 = vdwg.mxu0
        %v5153 = vadd.f32 %v4427, %v5027
        %v5154 = vadd.f32 %v4428, %v5030
        %v5155 = vadd.f32 %v4429, %v5035
        %v5156 = vadd.f32 %v4430, %v5038
        %v5157 = vadd.f32 %v4431, %v5043
        %v5158 = vadd.f32 %v4432, %v5046
        %v5159 = vadd.f32 %v4433, %v5051
        %v5160 = vadd.f32 %v4434, %v5054
        %v5161 = vadd.f32 %v4435, %v5059
        %v5162 = vadd.f32 %v4436, %v5062
        %v5163 = vadd.f32 %v4437, %v5067
        %v5164 = vadd.f32 %v4438, %v5070
        %v5165 = vadd.f32 %v4439, %v5075
        %v5166 = vadd.f32 %v4440, %v5078
        %v5167 = vadd.f32 %v4441, %v5083
        %v5168 = vadd.f32 %v4442, %v5086
        %v5169 = vadd.f32 %v4443, %v5091
        %v5170 = vadd.f32 %v4444, %v5094
        %v5171 = vadd.f32 %v4445, %v5099
        %v5172 = vadd.f32 %v4446, %v5102
        %v5173 = vadd.f32 %v4447, %v5107
        %v5174 = vadd.f32 %v4448, %v5110
        %v5175 = vadd.f32 %v4449, %v5115
        %v5176 = vadd.f32 %v4450, %v5118
        %v5177 = vadd.f32 %v4451, %v5123
        %v5178 = vadd.f32 %v4452, %v5126
        %v5179 = vadd.f32 %v4453, %v5131
        %v5180 = vadd.f32 %v4454, %v5134
        %v5181 = vadd.f32 %v4455, %v5139
        %v5182 = vadd.f32 %v4456, %v5142
        %v5183 = vadd.f32 %v4457, %v5147
        %v5184 = vadd.f32 %v4458, %v5150
        %v5185 = vld [vmem:[%s4100] sm:$0xe]
        %v5186 = vld [vmem:[%s4100 + $0xc] sm:$0xe]
        %v5187 = vld [vmem:[%s4100 + $0x18] sm:$0xe]
        %v5188 = vld [vmem:[%s4100 + $0x24] sm:$0xe]
        %v5189 = vld [vmem:[%s4100 + $0x30] sm:$0xe]
        %v5190 = vld [vmem:[%s4100 + $0x3c] sm:$0xe]
        %v5191 = vld [vmem:[%s4100 + $0x48] sm:$0xe]
        %v5192 = vld [vmem:[%s4100 + $0x54] sm:$0xe]
        %v5193 = vld [vmem:[%s4100 + $0x60] sm:$0xe]
        %v5194 = vld [vmem:[%s4100 + $0x6c] sm:$0xe]
        %v5195 = vld [vmem:[%s4100 + $0x78] sm:$0xe]
        %v5196 = vld [vmem:[%s4100 + $0x84] sm:$0xe]
        %v5197 = vld [vmem:[%s4100 + $0x90] sm:$0xe]
        %v5198 = vld [vmem:[%s4100 + $0x9c] sm:$0xe]
        %v5199 = vld [vmem:[%s4100 + $0xa8] sm:$0xe]
        %v5200 = vld [vmem:[%s4100 + $0xb4] sm:$0xe]
        %v5249 = vrot.slane %v5185, 5
        %v5250 = vrot.slane %v5249, 4
        %v5251 = vrot.slane %v4460, 5
        %v5252 = vsel %vm2139, %v5250, %v5251
        %v5253 = vrot.slane %v5251, 4
        %v5254 = vrot.slane %v4461, 5
        %v5255 = vsel %vm2139, %v5253, %v5254
        %v5256 = vrot.slane %v5186, 5
        %v5257 = vrot.slane %v5256, 4
        %v5258 = vrot.slane %v4463, 5
        %v5259 = vsel %vm2139, %v5257, %v5258
        %v5260 = vrot.slane %v5258, 4
        %v5261 = vrot.slane %v4464, 5
        %v5262 = vsel %vm2139, %v5260, %v5261
        %v5263 = vrot.slane %v5187, 5
        %v5264 = vrot.slane %v5263, 4
        %v5265 = vrot.slane %v4466, 5
        %v5266 = vsel %vm2139, %v5264, %v5265
        %v5267 = vrot.slane %v5265, 4
        %v5268 = vrot.slane %v4467, 5
        %v5269 = vsel %vm2139, %v5267, %v5268
        %v5270 = vrot.slane %v5188, 5
        %v5271 = vrot.slane %v5270, 4
        %v5272 = vrot.slane %v4469, 5
        %v5273 = vsel %vm2139, %v5271, %v5272
        %v5274 = vrot.slane %v5272, 4
        %v5275 = vrot.slane %v4470, 5
        %v5276 = vsel %vm2139, %v5274, %v5275
        %v5277 = vrot.slane %v5189, 5
        %v5278 = vrot.slane %v5277, 4
        %v5279 = vrot.slane %v4472, 5
        %v5280 = vsel %vm2139, %v5278, %v5279
        %v5281 = vrot.slane %v5279, 4
        %v5282 = vrot.slane %v4473, 5
        %v5283 = vsel %vm2139, %v5281, %v5282
        %v5284 = vrot.slane %v5190, 5
        %v5285 = vrot.slane %v5284, 4
        %v5286 = vrot.slane %v4475, 5
        %v5287 = vsel %vm2139, %v5285, %v5286
        %v5288 = vrot.slane %v5286, 4
        %v5289 = vrot.slane %v4476, 5
        %v5290 = vsel %vm2139, %v5288, %v5289
        %v5291 = vrot.slane %v5191, 5
        %v5292 = vrot.slane %v5291, 4
        %v5293 = vrot.slane %v4478, 5
        %v5294 = vsel %vm2139, %v5292, %v5293
        %v5295 = vrot.slane %v5293, 4
        %v5296 = vrot.slane %v4479, 5
        %v5297 = vsel %vm2139, %v5295, %v5296
        %v5298 = vrot.slane %v5192, 5
        %v5299 = vrot.slane %v5298, 4
        %v5300 = vrot.slane %v4481, 5
        %v5301 = vsel %vm2139, %v5299, %v5300
        %v5302 = vrot.slane %v5300, 4
        %v5303 = vrot.slane %v4482, 5
        %v5304 = vsel %vm2139, %v5302, %v5303
        %v5305 = vrot.slane %v5193, 5
        %v5306 = vrot.slane %v5305, 4
        %v5307 = vrot.slane %v4484, 5
        %v5308 = vsel %vm2139, %v5306, %v5307
        %v5309 = vrot.slane %v5307, 4
        %v5310 = vrot.slane %v4485, 5
        %v5311 = vsel %vm2139, %v5309, %v5310
        %v5312 = vrot.slane %v5194, 5
        %v5313 = vrot.slane %v5312, 4
        %v5314 = vrot.slane %v4487, 5
        %v5315 = vsel %vm2139, %v5313, %v5314
        %v5316 = vrot.slane %v5314, 4
        %v5317 = vrot.slane %v4488, 5
        %v5318 = vsel %vm2139, %v5316, %v5317
        %v5319 = vrot.slane %v5195, 5
        %v5320 = vrot.slane %v5319, 4
        %v5321 = vrot.slane %v4490, 5
        %v5322 = vsel %vm2139, %v5320, %v5321
        %v5323 = vrot.slane %v5321, 4
        %v5324 = vrot.slane %v4491, 5
        %v5325 = vsel %vm2139, %v5323, %v5324
        %v5326 = vrot.slane %v5196, 5
        %v5327 = vrot.slane %v5326, 4
        %v5328 = vrot.slane %v4493, 5
        %v5329 = vsel %vm2139, %v5327, %v5328
        %v5330 = vrot.slane %v5328, 4
        %v5331 = vrot.slane %v4494, 5
        %v5332 = vsel %vm2139, %v5330, %v5331
        %v5333 = vrot.slane %v5197, 5
        %v5334 = vrot.slane %v5333, 4
        %v5335 = vrot.slane %v4496, 5
        %v5336 = vsel %vm2139, %v5334, %v5335
        %v5337 = vrot.slane %v5335, 4
        %v5338 = vrot.slane %v4497, 5
        %v5339 = vsel %vm2139, %v5337, %v5338
        %v5340 = vrot.slane %v5198, 5
        %v5341 = vrot.slane %v5340, 4
        %v5342 = vrot.slane %v4499, 5
        %v5343 = vsel %vm2139, %v5341, %v5342
        %v5344 = vrot.slane %v5342, 4
        %v5345 = vrot.slane %v4500, 5
        %v5346 = vsel %vm2139, %v5344, %v5345
        %v5347 = vrot.slane %v5199, 5
        %v5348 = vrot.slane %v5347, 4
        %v5349 = vrot.slane %v4502, 5
        %v5350 = vsel %vm2139, %v5348, %v5349
        %v5351 = vrot.slane %v5349, 4
        %v5352 = vrot.slane %v4503, 5
        %v5353 = vsel %vm2139, %v5351, %v5352
        %v5354 = vrot.slane %v5200, 5
        %v5355 = vrot.slane %v5354, 4
        %v5356 = vrot.slane %v4505, 5
        %v5357 = vsel %vm2139, %v5355, %v5356
        %v5358 = vrot.slane %v5356, 4
        %v5359 = vrot.slane %v4506, 5
        %v5360 = vsel %vm2139, %v5358, %v5359
        %s5361 = scalar_lea.vmem %s3, 32
        %v5362 = vld [vmem:[%s5361] sm:$0xf]
        %v5363 = vunpack.c.l.b16 %v5252
        %v5364 = vunpack.c.l.b16 %v5255
        %v5365 = vunpack.c.l.b16 %v5259
        %v5366 = vunpack.c.l.b16 %v5262
        %v5367 = vunpack.c.l.b16 %v5266
        %v5368 = vunpack.c.l.b16 %v5269
        %v5369 = vunpack.c.l.b16 %v5273
        %v5370 = vunpack.c.l.b16 %v5276
        %v5371 = vunpack.c.l.b16 %v5280
        %v5372 = vunpack.c.l.b16 %v5283
        %v5373 = vunpack.c.l.b16 %v5287
        %v5374 = vunpack.c.l.b16 %v5290
        %v5375 = vunpack.c.l.b16 %v5294
        %v5376 = vunpack.c.l.b16 %v5297
        %v5377 = vunpack.c.l.b16 %v5301
        %v5378 = vunpack.c.l.b16 %v5304
        %v5379 = vunpack.c.l.b16 %v5308
        %v5380 = vunpack.c.l.b16 %v5311
        %v5381 = vunpack.c.l.b16 %v5315
        %v5382 = vunpack.c.l.b16 %v5318
        %v5383 = vunpack.c.l.b16 %v5322
        %v5384 = vunpack.c.l.b16 %v5325
        %v5385 = vunpack.c.l.b16 %v5329
        %v5386 = vunpack.c.l.b16 %v5332
        %v5387 = vunpack.c.l.b16 %v5336
        %v5388 = vunpack.c.l.b16 %v5339
        %v5389 = vunpack.c.l.b16 %v5343
        %v5390 = vunpack.c.l.b16 %v5346
        %v5391 = vunpack.c.l.b16 %v5350
        %v5392 = vunpack.c.l.b16 %v5353
        %v5393 = vunpack.c.l.b16 %v5357
        %v5394 = vunpack.c.l.b16 %v5360
        %v5395 = vpack.c.b16 %v5364, %v5363
        %v5396 = vpack.c.b16 %v5366, %v5365
        %v5397 = vpack.c.b16 %v5368, %v5367
        %v5398 = vpack.c.b16 %v5370, %v5369
        %v5399 = vpack.c.b16 %v5372, %v5371
        %v5400 = vpack.c.b16 %v5374, %v5373
        %v5401 = vpack.c.b16 %v5376, %v5375
        %v5402 = vpack.c.b16 %v5378, %v5377
        %v5403 = vpack.c.b16 %v5380, %v5379
        %v5404 = vpack.c.b16 %v5382, %v5381
        %v5405 = vpack.c.b16 %v5384, %v5383
        %v5406 = vpack.c.b16 %v5386, %v5385
        %v5407 = vpack.c.b16 %v5388, %v5387
        %v5408 = vpack.c.b16 %v5390, %v5389
        %v5409 = vpack.c.b16 %v5392, %v5391
        %v5410 = vpack.c.b16 %v5394, %v5393
        %v5412 = vsel %vm1583, %v5395, 0
        %v5415 = vsel %vm1583, %v5396, 0
        %v5418 = vsel %vm1583, %v5397, 0
        %v5421 = vsel %vm1583, %v5398, 0
        %v5424 = vsel %vm1583, %v5399, 0
        %v5427 = vsel %vm1583, %v5400, 0
        %v5430 = vsel %vm1583, %v5401, 0
        %v5433 = vsel %vm1583, %v5402, 0
        %v5436 = vsel %vm1583, %v5403, 0
        %v5439 = vsel %vm1583, %v5404, 0
        %v5442 = vsel %vm1583, %v5405, 0
        %v5445 = vsel %vm1583, %v5406, 0
        %v5448 = vsel %vm1583, %v5407, 0
        %v5451 = vsel %vm1583, %v5408, 0
        %v5454 = vsel %vm1583, %v5409, 0
        %v5457 = vsel %vm1583, %v5410, 0
        %v5460 = vsel %vm1632, %v5362, 0
        %5462 = vmatprep.subr.bf16.mxu0 0
        %5463 = vmatpush1.bf16.msra.mxu0 %v5460
        %5464 = vmatprep.subr.bf16.mxu0 0
        %5465 = vmatpush1.bf16.msra.mxu0 0
        %5466 = vmatprep.subr.bf16.mxu0 0
        %5467 = vmatpush1.bf16.msra.mxu0 0
        %5468 = vmatprep.subr.bf16.mxu0 0
        %5469 = vmatpush1.bf16.msra.mxu0 0
        %5470 = vmatprep.subr.bf16.mxu0 0
        %5471 = vmatpush1.bf16.msra.mxu0 0
        %5472 = vmatprep.subr.bf16.mxu0 0
        %5473 = vmatpush1.bf16.msra.mxu0 0
        %5474 = vmatprep.subr.bf16.mxu0 0
        %5475 = vmatpush1.bf16.msra.mxu0 0
        %5476 = vmatprep.subr.bf16.mxu0 0
        %5477 = vmatpush1.bf16.msra.mxu0 0
        %5478 = vmatprep.subr.bf16.mxu0 0
        %5479 = vmatpush1.bf16.msra.mxu0 0
        %5480 = vmatprep.subr.bf16.mxu0 0
        %5481 = vmatpush1.bf16.msra.mxu0 0
        %5482 = vmatprep.subr.bf16.mxu0 0
        %5483 = vmatpush1.bf16.msra.mxu0 0
        %5484 = vmatprep.subr.bf16.mxu0 0
        %5485 = vmatpush1.bf16.msra.mxu0 0
        %5486 = vmatprep.subr.bf16.mxu0 0
        %5487 = vmatpush1.bf16.msra.mxu0 0
        %5488 = vmatprep.subr.bf16.mxu0 0
        %5489 = vmatpush1.bf16.msra.mxu0 0
        %5490 = vmatprep.subr.bf16.mxu0 0
        %5491 = vmatpush1.bf16.msra.mxu0 0
        %5492 = vmatprep.subr.bf16.mxu0 0
        %5493 = vmatpush1.bf16.msra.mxu0 0
        %5494 = vmatprep.mubr.bf16.mxu0 0
        %5495 = vmatmul.mubr.bf16.gmra.mrb[0].mxu0 %v5412
        %v5496 = vpop.f32.mrb[0].mxu0
        %v5497 = vadd.f32 0.0, %v5496
        %v5498 = vpop.f32.mrb[0].mxu0
        %v5499 = vpop.f32.mrb[0].mxu0
        %v5500 = vadd.f32 0.0, %v5499
        %v5501 = vpop.f32.mrb[0].mxu0
        %5502 = vmatprep.mubr.bf16.mxu0 0
        %5503 = vmatmul.mubr.bf16.gmra.mrb[0].mxu0 %v5415
        %v5504 = vpop.f32.mrb[0].mxu0
        %v5505 = vadd.f32 0.0, %v5504
        %v5506 = vpop.f32.mrb[0].mxu0
        %v5507 = vpop.f32.mrb[0].mxu0
        %v5508 = vadd.f32 0.0, %v5507
        %v5509 = vpop.f32.mrb[0].mxu0
        %5510 = vmatprep.mubr.bf16.mxu0 0
        %5511 = vmatmul.mubr.bf16.gmra.mrb[0].mxu0 %v5418
        %v5512 = vpop.f32.mrb[0].mxu0
        %v5513 = vadd.f32 0.0, %v5512
        %v5514 = vpop.f32.mrb[0].mxu0
        %v5515 = vpop.f32.mrb[0].mxu0
        %v5516 = vadd.f32 0.0, %v5515
        %v5517 = vpop.f32.mrb[0].mxu0
        %5518 = vmatprep.mubr.bf16.mxu0 0
        %5519 = vmatmul.mubr.bf16.gmra.mrb[0].mxu0 %v5421
        %v5520 = vpop.f32.mrb[0].mxu0
        %v5521 = vadd.f32 0.0, %v5520
        %v5522 = vpop.f32.mrb[0].mxu0
        %v5523 = vpop.f32.mrb[0].mxu0
        %v5524 = vadd.f32 0.0, %v5523
        %v5525 = vpop.f32.mrb[0].mxu0
        %5526 = vmatprep.mubr.bf16.mxu0 0
        %5527 = vmatmul.mubr.bf16.gmra.mrb[0].mxu0 %v5424
        %v5528 = vpop.f32.mrb[0].mxu0
        %v5529 = vadd.f32 0.0, %v5528
        %v5530 = vpop.f32.mrb[0].mxu0
        %v5531 = vpop.f32.mrb[0].mxu0
        %v5532 = vadd.f32 0.0, %v5531
        %v5533 = vpop.f32.mrb[0].mxu0
        %5534 = vmatprep.mubr.bf16.mxu0 0
        %5535 = vmatmul.mubr.bf16.gmra.mrb[0].mxu0 %v5427
        %v5536 = vpop.f32.mrb[0].mxu0
        %v5537 = vadd.f32 0.0, %v5536
        %v5538 = vpop.f32.mrb[0].mxu0
        %v5539 = vpop.f32.mrb[0].mxu0
        %v5540 = vadd.f32 0.0, %v5539
        %v5541 = vpop.f32.mrb[0].mxu0
        %5542 = vmatprep.mubr.bf16.mxu0 0
        %5543 = vmatmul.mubr.bf16.gmra.mrb[0].mxu0 %v5430
        %v5544 = vpop.f32.mrb[0].mxu0
        %v5545 = vadd.f32 0.0, %v5544
        %v5546 = vpop.f32.mrb[0].mxu0
        %v5547 = vpop.f32.mrb[0].mxu0
        %v5548 = vadd.f32 0.0, %v5547
        %v5549 = vpop.f32.mrb[0].mxu0
        %5550 = vmatprep.mubr.bf16.mxu0 0
        %5551 = vmatmul.mubr.bf16.gmra.mrb[0].mxu0 %v5433
        %v5552 = vpop.f32.mrb[0].mxu0
        %v5553 = vadd.f32 0.0, %v5552
        %v5554 = vpop.f32.mrb[0].mxu0
        %v5555 = vpop.f32.mrb[0].mxu0
        %v5556 = vadd.f32 0.0, %v5555
        %v5557 = vpop.f32.mrb[0].mxu0
        %5558 = vmatprep.mubr.bf16.mxu0 0
        %5559 = vmatmul.mubr.bf16.gmra.mrb[0].mxu0 %v5436
        %v5560 = vpop.f32.mrb[0].mxu0
        %v5561 = vadd.f32 0.0, %v5560
        %v5562 = vpop.f32.mrb[0].mxu0
        %v5563 = vpop.f32.mrb[0].mxu0
        %v5564 = vadd.f32 0.0, %v5563
        %v5565 = vpop.f32.mrb[0].mxu0
        %5566 = vmatprep.mubr.bf16.mxu0 0
        %5567 = vmatmul.mubr.bf16.gmra.mrb[0].mxu0 %v5439
        %v5568 = vpop.f32.mrb[0].mxu0
        %v5569 = vadd.f32 0.0, %v5568
        %v5570 = vpop.f32.mrb[0].mxu0
        %v5571 = vpop.f32.mrb[0].mxu0
        %v5572 = vadd.f32 0.0, %v5571
        %v5573 = vpop.f32.mrb[0].mxu0
        %5574 = vmatprep.mubr.bf16.mxu0 0
        %5575 = vmatmul.mubr.bf16.gmra.mrb[0].mxu0 %v5442
        %v5576 = vpop.f32.mrb[0].mxu0
        %v5577 = vadd.f32 0.0, %v5576
        %v5578 = vpop.f32.mrb[0].mxu0
        %v5579 = vpop.f32.mrb[0].mxu0
        %v5580 = vadd.f32 0.0, %v5579
        %v5581 = vpop.f32.mrb[0].mxu0
        %5582 = vmatprep.mubr.bf16.mxu0 0
        %5583 = vmatmul.mubr.bf16.gmra.mrb[0].mxu0 %v5445
        %v5584 = vpop.f32.mrb[0].mxu0
        %v5585 = vadd.f32 0.0, %v5584
        %v5586 = vpop.f32.mrb[0].mxu0
        %v5587 = vpop.f32.mrb[0].mxu0
        %v5588 = vadd.f32 0.0, %v5587
        %v5589 = vpop.f32.mrb[0].mxu0
        %5590 = vmatprep.mubr.bf16.mxu0 0
        %5591 = vmatmul.mubr.bf16.gmra.mrb[0].mxu0 %v5448
        %v5592 = vpop.f32.mrb[0].mxu0
        %v5593 = vadd.f32 0.0, %v5592
        %v5594 = vpop.f32.mrb[0].mxu0
        %v5595 = vpop.f32.mrb[0].mxu0
        %v5596 = vadd.f32 0.0, %v5595
        %v5597 = vpop.f32.mrb[0].mxu0
        %5598 = vmatprep.mubr.bf16.mxu0 0
        %5599 = vmatmul.mubr.bf16.gmra.mrb[0].mxu0 %v5451
        %v5600 = vpop.f32.mrb[0].mxu0
        %v5601 = vadd.f32 0.0, %v5600
        %v5602 = vpop.f32.mrb[0].mxu0
        %v5603 = vpop.f32.mrb[0].mxu0
        %v5604 = vadd.f32 0.0, %v5603
        %v5605 = vpop.f32.mrb[0].mxu0
        %5606 = vmatprep.mubr.bf16.mxu0 0
        %5607 = vmatmul.mubr.bf16.gmra.mrb[0].mxu0 %v5454
        %v5608 = vpop.f32.mrb[0].mxu0
        %v5609 = vadd.f32 0.0, %v5608
        %v5610 = vpop.f32.mrb[0].mxu0
        %v5611 = vpop.f32.mrb[0].mxu0
        %v5612 = vadd.f32 0.0, %v5611
        %v5613 = vpop.f32.mrb[0].mxu0
        %5614 = vmatprep.mubr.bf16.mxu0 0
        %5615 = vmatmul.mubr.bf16.gmra.mrb[0].mxu0 %v5457
        %v5616 = vpop.f32.mrb[0].mxu0
        %v5617 = vadd.f32 0.0, %v5616
        %v5618 = vpop.f32.mrb[0].mxu0
        %v5619 = vpop.f32.mrb[0].mxu0
        %v5620 = vadd.f32 0.0, %v5619
        %v5621 = vpop.f32.mrb[0].mxu0
        %5622 = vdwg.mxu0
        %v5623 = vadd.f32 %v5153, %v5497
        %v5624 = vadd.f32 %v5154, %v5500
        %v5625 = vadd.f32 %v5155, %v5505
        %v5626 = vadd.f32 %v5156, %v5508
        %v5627 = vadd.f32 %v5157, %v5513
        %v5628 = vadd.f32 %v5158, %v5516
        %v5629 = vadd.f32 %v5159, %v5521
        %v5630 = vadd.f32 %v5160, %v5524
        %v5631 = vadd.f32 %v5161, %v5529
        %v5632 = vadd.f32 %v5162, %v5532
        %v5633 = vadd.f32 %v5163, %v5537
        %v5634 = vadd.f32 %v5164, %v5540
        %v5635 = vadd.f32 %v5165, %v5545
        %v5636 = vadd.f32 %v5166, %v5548
        %v5637 = vadd.f32 %v5167, %v5553
        %v5638 = vadd.f32 %v5168, %v5556
        %v5639 = vadd.f32 %v5169, %v5561
        %v5640 = vadd.f32 %v5170, %v5564
        %v5641 = vadd.f32 %v5171, %v5569
        %v5642 = vadd.f32 %v5172, %v5572
        %v5643 = vadd.f32 %v5173, %v5577
        %v5644 = vadd.f32 %v5174, %v5580
        %v5645 = vadd.f32 %v5175, %v5585
        %v5646 = vadd.f32 %v5176, %v5588
        %v5647 = vadd.f32 %v5177, %v5593
        %v5648 = vadd.f32 %v5178, %v5596
        %v5649 = vadd.f32 %v5179, %v5601
        %v5650 = vadd.f32 %v5180, %v5604
        %v5651 = vadd.f32 %v5181, %v5609
        %v5652 = vadd.f32 %v5182, %v5612
        %v5653 = vadd.f32 %v5183, %v5617
        %v5654 = vadd.f32 %v5184, %v5620
        %v5655 = vpack.c.bf16 %v5624, %v5623
        %v5656 = vpack.c.bf16 %v5626, %v5625
        %v5657 = vpack.c.bf16 %v5628, %v5627
        %v5658 = vpack.c.bf16 %v5630, %v5629
        %v5659 = vpack.c.bf16 %v5632, %v5631
        %v5660 = vpack.c.bf16 %v5634, %v5633
        %v5661 = vpack.c.bf16 %v5636, %v5635
        %v5662 = vpack.c.bf16 %v5638, %v5637
        %v5663 = vpack.c.bf16 %v5640, %v5639
        %v5664 = vpack.c.bf16 %v5642, %v5641
        %v5665 = vpack.c.bf16 %v5644, %v5643
        %v5666 = vpack.c.bf16 %v5646, %v5645
        %v5667 = vpack.c.bf16 %v5648, %v5647
        %v5668 = vpack.c.bf16 %v5650, %v5649
        %v5669 = vpack.c.bf16 %v5652, %v5651
        %v5670 = vpack.c.bf16 %v5654, %v5653
        %v5687 = vunpack.c.l.b16 %v5655
        %v5688 = vunpack.c.h.b16 %v5655
        %v5689 = vunpack.c.l.b16 %v5656
        %v5690 = vunpack.c.h.b16 %v5656
        %v5691 = vunpack.c.l.b16 %v5657
        %v5692 = vunpack.c.h.b16 %v5657
        %v5693 = vunpack.c.l.b16 %v5658
        %v5694 = vunpack.c.h.b16 %v5658
        %v5695 = vunpack.c.l.b16 %v5659
        %v5696 = vunpack.c.h.b16 %v5659
        %v5697 = vunpack.c.l.b16 %v5660
        %v5698 = vunpack.c.h.b16 %v5660
        %v5699 = vunpack.c.l.b16 %v5661
        %v5700 = vunpack.c.h.b16 %v5661
        %v5701 = vunpack.c.l.b16 %v5662
        %v5702 = vunpack.c.h.b16 %v5662
        %v5703 = vunpack.c.l.b16 %v5663
        %v5704 = vunpack.c.h.b16 %v5663
        %v5705 = vunpack.c.l.b16 %v5664
        %v5706 = vunpack.c.h.b16 %v5664
        %v5707 = vunpack.c.l.b16 %v5665
        %v5708 = vunpack.c.h.b16 %v5665
        %v5709 = vunpack.c.l.b16 %v5666
        %v5710 = vunpack.c.h.b16 %v5666
        %v5711 = vunpack.c.l.b16 %v5667
        %v5712 = vunpack.c.h.b16 %v5667
        %v5713 = vunpack.c.l.b16 %v5668
        %v5714 = vunpack.c.h.b16 %v5668
        %v5715 = vunpack.c.l.b16 %v5669
        %v5716 = vunpack.c.h.b16 %v5669
        %v5717 = vunpack.c.l.b16 %v5670
        %v5718 = vunpack.c.h.b16 %v5670
        %v5719 = vpack.c.b16 %v5687, %v5687
        %v5720 = vpack.c.b16 %v5688, %v5688
        %v5721 = vpack.c.b16 %v5689, %v5689
        %v5722 = vpack.c.b16 %v5690, %v5690
        %v5723 = vpack.c.b16 %v5691, %v5691
        %v5724 = vpack.c.b16 %v5692, %v5692
        %v5725 = vpack.c.b16 %v5693, %v5693
        %v5726 = vpack.c.b16 %v5694, %v5694
        %v5727 = vpack.c.b16 %v5695, %v5695
        %v5728 = vpack.c.b16 %v5696, %v5696
        %v5729 = vpack.c.b16 %v5697, %v5697
        %v5730 = vpack.c.b16 %v5698, %v5698
        %v5731 = vpack.c.b16 %v5699, %v5699
        %v5732 = vpack.c.b16 %v5700, %v5700
        %v5733 = vpack.c.b16 %v5701, %v5701
        %v5734 = vpack.c.b16 %v5702, %v5702
        %v5735 = vpack.c.b16 %v5703, %v5703
        %v5736 = vpack.c.b16 %v5704, %v5704
        %v5737 = vpack.c.b16 %v5705, %v5705
        %v5738 = vpack.c.b16 %v5706, %v5706
        %v5739 = vpack.c.b16 %v5707, %v5707
        %v5740 = vpack.c.b16 %v5708, %v5708
        %v5741 = vpack.c.b16 %v5709, %v5709
        %v5742 = vpack.c.b16 %v5710, %v5710
        %v5743 = vpack.c.b16 %v5711, %v5711
        %v5744 = vpack.c.b16 %v5712, %v5712
        %v5745 = vpack.c.b16 %v5713, %v5713
        %v5746 = vpack.c.b16 %v5714, %v5714
        %v5747 = vpack.c.b16 %v5715, %v5715
        %v5748 = vpack.c.b16 %v5716, %v5716
        %v5749 = vpack.c.b16 %v5717, %v5717
        %v5750 = vpack.c.b16 %v5718, %v5718
        %5783 = vst [vmem:[%s338] sm:$0xf] %v5719
        %5784 = vst [vmem:[%s338 + $0x4] sm:$0xf] %v5720
        %5785 = vst [vmem:[%s338 + $0x8] sm:$0xf] %v5721
        %5786 = vst [vmem:[%s338 + $0xc] sm:$0xf] %v5722
        %5787 = vst [vmem:[%s338 + $0x10] sm:$0xf] %v5723
        %5788 = vst [vmem:[%s338 + $0x14] sm:$0xf] %v5724
        %5789 = vst [vmem:[%s338 + $0x18] sm:$0xf] %v5725
        %5790 = vst [vmem:[%s338 + $0x1c] sm:$0xf] %v5726
        %5791 = vst [vmem:[%s338 + $0x20] sm:$0xf] %v5727
        %5792 = vst [vmem:[%s338 + $0x24] sm:$0xf] %v5728
        %5793 = vst [vmem:[%s338 + $0x28] sm:$0xf] %v5729
        %5794 = vst [vmem:[%s338 + $0x2c] sm:$0xf] %v5730
        %5795 = vst [vmem:[%s338 + $0x30] sm:$0xf] %v5731
        %5796 = vst [vmem:[%s338 + $0x34] sm:$0xf] %v5732
        %5797 = vst [vmem:[%s338 + $0x38] sm:$0xf] %v5733
        %5798 = vst [vmem:[%s338 + $0x3c] sm:$0xf] %v5734
        %5799 = vst [vmem:[%s338 + $0x40] sm:$0xf] %v5735
        %5800 = vst [vmem:[%s338 + $0x44] sm:$0xf] %v5736
        %5801 = vst [vmem:[%s338 + $0x48] sm:$0xf] %v5737
        %5802 = vst [vmem:[%s338 + $0x4c] sm:$0xf] %v5738
        %5803 = vst [vmem:[%s338 + $0x50] sm:$0xf] %v5739
        %5804 = vst [vmem:[%s338 + $0x54] sm:$0xf] %v5740
        %5805 = vst [vmem:[%s338 + $0x58] sm:$0xf] %v5741
        %5806 = vst [vmem:[%s338 + $0x5c] sm:$0xf] %v5742
        %5807 = vst [vmem:[%s338 + $0x60] sm:$0xf] %v5743
        %5808 = vst [vmem:[%s338 + $0x64] sm:$0xf] %v5744
        %5809 = vst [vmem:[%s338 + $0x68] sm:$0xf] %v5745
        %5810 = vst [vmem:[%s338 + $0x6c] sm:$0xf] %v5746
        %5811 = vst [vmem:[%s338 + $0x70] sm:$0xf] %v5747
        %5812 = vst [vmem:[%s338 + $0x74] sm:$0xf] %v5748
        %5813 = vst [vmem:[%s338 + $0x78] sm:$0xf] %v5749
        %5814 = vst [vmem:[%s338 + $0x7c] sm:$0xf] %v5750
        %v5815 = vunpack.c.l.bf16 %v5655
        %v5816 = vunpack.c.h.bf16 %v5655
        %v5817 = vunpack.c.l.bf16 %v5656
        %v5818 = vunpack.c.h.bf16 %v5656
        %v5819 = vunpack.c.l.bf16 %v5657
        %v5820 = vunpack.c.h.bf16 %v5657
        %v5821 = vunpack.c.l.bf16 %v5658
        %v5822 = vunpack.c.h.bf16 %v5658
        %v5823 = vunpack.c.l.bf16 %v5659
        %v5824 = vunpack.c.h.bf16 %v5659
        %v5825 = vunpack.c.l.bf16 %v5660
        %v5826 = vunpack.c.h.bf16 %v5660
        %v5827 = vunpack.c.l.bf16 %v5661
        %v5828 = vunpack.c.h.bf16 %v5661
        %v5829 = vunpack.c.l.bf16 %v5662
        %v5830 = vunpack.c.h.bf16 %v5662
        %v5831 = vunpack.c.l.bf16 %v5663
        %v5832 = vunpack.c.h.bf16 %v5663
        %v5833 = vunpack.c.l.bf16 %v5664
        %v5834 = vunpack.c.h.bf16 %v5664
        %v5835 = vunpack.c.l.bf16 %v5665
        %v5836 = vunpack.c.h.bf16 %v5665
        %v5837 = vunpack.c.l.bf16 %v5666
        %v5838 = vunpack.c.h.bf16 %v5666
        %v5839 = vunpack.c.l.bf16 %v5667
        %v5840 = vunpack.c.h.bf16 %v5667
        %v5841 = vunpack.c.l.bf16 %v5668
        %v5842 = vunpack.c.h.bf16 %v5668
        %v5843 = vunpack.c.l.bf16 %v5669
        %v5844 = vunpack.c.h.bf16 %v5669
        %v5845 = vunpack.c.l.bf16 %v5670
        %v5846 = vunpack.c.h.bf16 %v5670
        %v5847 = vadd.f32 %v5815, %v5816
        %v5848 = vadd.f32 %v5847, %v5817
        %v5849 = vadd.f32 %v5848, %v5818
        %v5850 = vadd.f32 %v5849, %v5819
        %v5851 = vadd.f32 %v5850, %v5820
        %v5852 = vadd.f32 %v5851, %v5821
        %v5853 = vadd.f32 %v5852, %v5822
        %v5854 = vadd.f32 %v5853, %v5823
        %v5855 = vadd.f32 %v5854, %v5824
        %v5856 = vadd.f32 %v5855, %v5825
        %v5857 = vadd.f32 %v5856, %v5826
        %v5858 = vadd.f32 %v5857, %v5827
        %v5859 = vadd.f32 %v5858, %v5828
        %v5860 = vadd.f32 %v5859, %v5829
        %v5861 = vadd.f32 %v5860, %v5830
        %v5862 = vadd.f32 %v5861, %v5831
        %v5863 = vadd.f32 %v5862, %v5832
        %v5864 = vadd.f32 %v5863, %v5833
        %v5865 = vadd.f32 %v5864, %v5834
        %v5866 = vadd.f32 %v5865, %v5835
        %v5867 = vadd.f32 %v5866, %v5836
        %v5868 = vadd.f32 %v5867, %v5837
        %v5869 = vadd.f32 %v5868, %v5838
        %v5870 = vadd.f32 %v5869, %v5839
        %v5871 = vadd.f32 %v5870, %v5840
        %v5872 = vadd.f32 %v5871, %v5841
        %v5873 = vadd.f32 %v5872, %v5842
        %v5874 = vadd.f32 %v5873, %v5843
        %v5875 = vadd.f32 %v5874, %v5844
        %v5876 = vadd.f32 %v5875, %v5845
        %v5877 = vadd.f32 %v5876, %v5846
        %v5878 = vrot.slane %v5877, 4
        %v5879 = vadd.f32 %v5877, %v5878
        %v5880 = vrot.slane %v5879, 2
        %v5881 = vadd.f32 %v5879, %v5880
        %v5882 = vrot.slane %v5881, 1
        %v5883 = vadd.f32 %v5881, %v5882
        %v5884 = vmul.f32 %v5815, %v5815
        %v5885 = vmul.f32 %v5816, %v5816
        %v5886 = vmul.f32 %v5817, %v5817
        %v5887 = vmul.f32 %v5818, %v5818
        %v5888 = vmul.f32 %v5819, %v5819
        %v5889 = vmul.f32 %v5820, %v5820
        %v5890 = vmul.f32 %v5821, %v5821
        %v5891 = vmul.f32 %v5822, %v5822
        %v5892 = vmul.f32 %v5823, %v5823
        %v5893 = vmul.f32 %v5824, %v5824
        %v5894 = vmul.f32 %v5825, %v5825
        %v5895 = vmul.f32 %v5826, %v5826
        %v5896 = vmul.f32 %v5827, %v5827
        %v5897 = vmul.f32 %v5828, %v5828
        %v5898 = vmul.f32 %v5829, %v5829
        %v5899 = vmul.f32 %v5830, %v5830
        %v5900 = vmul.f32 %v5831, %v5831
        %v5901 = vmul.f32 %v5832, %v5832
        %v5902 = vmul.f32 %v5833, %v5833
        %v5903 = vmul.f32 %v5834, %v5834
        %v5904 = vmul.f32 %v5835, %v5835
        %v5905 = vmul.f32 %v5836, %v5836
        %v5906 = vmul.f32 %v5837, %v5837
        %v5907 = vmul.f32 %v5838, %v5838
        %v5908 = vmul.f32 %v5839, %v5839
        %v5909 = vmul.f32 %v5840, %v5840
        %v5910 = vmul.f32 %v5841, %v5841
        %v5911 = vmul.f32 %v5842, %v5842
        %v5912 = vmul.f32 %v5843, %v5843
        %v5913 = vmul.f32 %v5844, %v5844
        %v5914 = vmul.f32 %v5845, %v5845
        %v5915 = vmul.f32 %v5846, %v5846
        %v5916 = vadd.f32 %v5884, %v5885
        %v5917 = vadd.f32 %v5916, %v5886
        %v5918 = vadd.f32 %v5917, %v5887
        %v5919 = vadd.f32 %v5918, %v5888
        %v5920 = vadd.f32 %v5919, %v5889
        %v5921 = vadd.f32 %v5920, %v5890
        %v5922 = vadd.f32 %v5921, %v5891
        %v5923 = vadd.f32 %v5922, %v5892
        %v5924 = vadd.f32 %v5923, %v5893
        %v5925 = vadd.f32 %v5924, %v5894
        %v5926 = vadd.f32 %v5925, %v5895
        %v5927 = vadd.f32 %v5926, %v5896
        %v5928 = vadd.f32 %v5927, %v5897
        %v5929 = vadd.f32 %v5928, %v5898
        %v5930 = vadd.f32 %v5929, %v5899
        %v5931 = vadd.f32 %v5930, %v5900
        %v5932 = vadd.f32 %v5931, %v5901
        %v5933 = vadd.f32 %v5932, %v5902
        %v5934 = vadd.f32 %v5933, %v5903
        %v5935 = vadd.f32 %v5934, %v5904
        %v5936 = vadd.f32 %v5935, %v5905
        %v5937 = vadd.f32 %v5936, %v5906
        %v5938 = vadd.f32 %v5937, %v5907
        %v5939 = vadd.f32 %v5938, %v5908
        %v5940 = vadd.f32 %v5939, %v5909
        %v5941 = vadd.f32 %v5940, %v5910
        %v5942 = vadd.f32 %v5941, %v5911
        %v5943 = vadd.f32 %v5942, %v5912
        %v5944 = vadd.f32 %v5943, %v5913
        %v5945 = vadd.f32 %v5944, %v5914
        %v5946 = vadd.f32 %v5945, %v5915
        %v5947 = vrot.slane %v5946, 4
        %v5948 = vadd.f32 %v5946, %v5947
        %v5949 = vrot.slane %v5948, 2
        %v5950 = vadd.f32 %v5948, %v5949
        %v5951 = vrot.slane %v5950, 1
        %v5952 = vadd.f32 %v5950, %v5951
        %vm5953 = vcmask 1040384
        %v5954 = vsel %vm5953, %v5883, %v5952
        // Predicated region
        $region53: #{tpu_custom_call.1} parent=35 // pred_check
          %p5955 = pneg %p393
        $region54: #{tpu_custom_call.1} parent=35 // pred_check_branch
          %5957 = sbr.rel (%p5955) target = $region56
        $region55: #{tpu_custom_call.1} parent=35 // pred_region
          %5958 = vst [vmem:[%s345] sm:$0x3] %v5954
        $region56: #{tpu_custom_call.1} parent=35 // pred_fallthru
          _
        // Predicated region
        $region57: #{tpu_custom_call.1} parent=35 // pred_check
          %p5959 = pneg %p520
        $region58: #{tpu_custom_call.1} parent=35 // pred_check_branch
          %5961 = sbr.rel (%p5959) target = $region60
        $region59: #{tpu_custom_call.1} parent=35 // pred_region
          %v5962 = vld [vmem:[%s345] sm:$0x3]
          %v5963 = vadd.f32 %v5962, %v5954
          %5964 = vst [vmem:[%s345] sm:$0x3] %v5963
        $region60: #{tpu_custom_call.1} parent=35 // pred_fallthru
          _
        %s5965 = sand.u32 %s166, 1
        %s5966 = scalar_lea.sflag [#allocation4], %s5965
        %s5967 = sand.u32 %s166, 1
        %s5968 = smul.addr %s5967, 128
        %s5969 = scalar_lea.vmem [#allocation3], %s5968
        %s5970 = sand.u32 %s192, 1
        %s5971 = scalar_lea.sflag [#allocation6], %s5970
        %s5972 = sand.u32 %s192, 1
        %s5973 = smul.addr %s5972, 2
        %s5974 = scalar_lea.vmem [#allocation5], %s5973
        // Predicated region
        $region61: #{tpu_custom_call.1} parent=35 // pred_check
          %p5975 = pneg %p176
        $region62: #{tpu_custom_call.1} parent=35 // pred_check_branch
          %5977 = sbr.rel (%p5975) target = $region64
        $region63: #{tpu_custom_call.1} parent=35 // pred_region
          %s5978 = smul.u32 16, %s28
          %s5980 = ssub.s32 2048, 2048
          %5981 = vsyncadd %s5966, %s5980
          %s5982 = smul.addr %s5978, 2
          %s5983 = smul.addr %s27, 32
          %s5984 = sadd.s32 %s5982, %s5983
          %s5985 = smul.addr %s5984, 64
          %s5986 = scalar_lea.hbm %s4, %s5985
          %s5987 = sshll.u32 %s5969, 4
          %s5988 = int_to_ptr.vmem [resolvable:$true] %s5987
          %5993 = dma.vmem_to_hbm [thread:$0]  %s5988, 2048, %s5986, %s5966, 64, 64, 4
        $region64: #{tpu_custom_call.1} parent=35 // pred_fallthru
          _
        // Predicated region
        $region65: #{tpu_custom_call.1} parent=35 // pred_check
          %p5994 = pneg %p202
        $region66: #{tpu_custom_call.1} parent=35 // pred_check_branch
          %5996 = sbr.rel (%p5994) target = $region68
        $region67: #{tpu_custom_call.1} parent=35 // pred_region
          %s5998 = ssub.s32 32, 32
          %5999 = vsyncadd %s5971, %s5998
          %s6000 = smul.addr %s27, 32
          %s6001 = scalar_lea.hbm %s5, %s6000
          %s6003 = sshll.u32 %s5974, 4
          %s6004 = int_to_ptr.vmem [resolvable:$true] %s6003
          %6006 = dma.vmem_to_hbm [thread:$0]  %s6004, 32, %s6001, %s5971
        $region68: #{tpu_custom_call.1} parent=35 // pred_fallthru
          _
      $region36: #{tpu_custom_call.1} parent=5 // pred_fallthru
        _
      %p6007 = scmp.le.s32.totalorder 2, %s18
      // Predicated region
      $region69: #{tpu_custom_call.1} parent=5 // pred_check
        %p6008 = pneg %p6007
      $region70: #{tpu_custom_call.1} parent=5 // pred_check_branch
        %6010 = sbr.rel (%p6008) target = $region72
      $region71: #{tpu_custom_call.1} parent=5 // pred_region
        %s6011 = ssub.s32 %s18, 2
        // Predicated region
        $region73: #{tpu_custom_call.1} parent=71 // pred_check
          %p6012 = pneg %p182
        $region74: #{tpu_custom_call.1} parent=71 // pred_check_branch
          %6014 = sbr.rel (%p6012) target = $region76
        $region75: #{tpu_custom_call.1} parent=71 // pred_region
          %s6015 = sand.u32 %s167, 1
          %s6016 = scalar_lea.sflag [#allocation4], %s6015
          %s6017 = sand.u32 %s167, 1
          %s6018 = smul.addr %s6017, 128
          %s6019 = scalar_lea.vmem [#allocation3], %s6018
          %6020 = dma.done %s6016, 2048
        $region76: #{tpu_custom_call.1} parent=71 // pred_fallthru
          _
        // Predicated region
        $region77: #{tpu_custom_call.1} parent=71 // pred_check
          %p6021 = pneg %p208
        $region78: #{tpu_custom_call.1} parent=71 // pred_check_branch
          %6023 = sbr.rel (%p6021) target = $region80
        $region79: #{tpu_custom_call.1} parent=71 // pred_region
          %s6024 = sand.u32 %s193, 1
          %s6025 = scalar_lea.sflag [#allocation6], %s6024
          %s6026 = sand.u32 %s193, 1
          %s6027 = smul.addr %s6026, 2
          %s6028 = scalar_lea.vmem [#allocation5], %s6027
          %6029 = dma.done %s6025, 32
        $region80: #{tpu_custom_call.1} parent=71 // pred_fallthru
          _
      $region72: #{tpu_custom_call.1} parent=5 // pred_fallthru
        _
    $region6: #{tpu_custom_call.1} parent=1 // loop_footer
      %s22 = sadd.s32 1, %s18
    $region7: #{tpu_custom_call.1} parent=1 // loop_footer_branch
      %17 = sbr.rel target = $region3
    $region8: #{tpu_custom_call.1} parent=1 // loop_exit
      _
    %6030 = vsyncpa [#allocation4], 1
    %s6031 = scalar_lea.sflag [#allocation4], 1
    %6032 = vsyncpa %s6031, 1
    %6033 = vsyncpa [#allocation6], 1
    %s6034 = scalar_lea.sflag [#allocation6], 1
    %6035 = vsyncpa %s6034, 1

</llo_original>
